<compile_context>
chip_gen: v6e
topology: v6e:2x2x1
jax: 0.10.0
libtpu: 0.0.40
codegen_flags: <defaults>
</compile_context>

<pallas_src>
import functools

import jax
import jax.numpy as jnp
from jax.experimental import pallas as pl
from jax.experimental.pallas import tpu as pltpu

_HIDDEN = (256, 512, 1024)
_LEAKY_SLOPE = 0.2


def _round_up(x, m):
    return (x + m - 1) // m * m


def _leaky_relu(x, slope=_LEAKY_SLOPE):
    return jnp.where(x > 0, x, slope * x)


def generator_kernel(z_ref,
                     w1_ref, b1_ref,
                     w2_ref, b2_ref,
                     w3_ref, b3_ref,
                     w4_ref, b4_ref,
                     out_ref):
    # Layer 1: Linear(input_dim, 256) + LeakyReLU(0.2)  (bf16 MXU, f32 acc)
    h = jnp.dot(z_ref[...], w1_ref[...], preferred_element_type=jnp.float32)
    h = _leaky_relu(h + b1_ref[...]).astype(jnp.bfloat16)
    # Layer 2: Linear(256, 512) + LeakyReLU(0.2)
    h = jnp.dot(h, w2_ref[...], preferred_element_type=jnp.float32)
    h = _leaky_relu(h + b2_ref[...]).astype(jnp.bfloat16)
    # Layer 3: Linear(512, 1024) + LeakyReLU(0.2)
    h = jnp.dot(h, w3_ref[...], preferred_element_type=jnp.float32)
    h = _leaky_relu(h + b3_ref[...]).astype(jnp.bfloat16)
    # Layer 4: Linear(1024, output_dim) + Tanh (f32 epilogue, EUP tanh)
    h = jnp.dot(h, w4_ref[...], preferred_element_type=jnp.float32)
    out_ref[...] = jnp.tanh(h + b4_ref[...]).astype(out_ref.dtype)


def prepare_generator_params(params, input_dim, output_dim):
    """One-time param prep: bf16 cast + lane-align (pad to multiples of 128).

    Do this ONCE per model, not per forward call -- the pad/cast traffic would
    otherwise dominate this sub-GFLOP workload.
    """
    (w1, b1), (w2, b2), (w3, b3), (w4, b4) = params
    in_pad = _round_up(input_dim, 128)
    out_pad = _round_up(output_dim, 128)

    # Zero padding is exact: padded rows of w1 multiply padded zero columns of z,
    # padded cols of w4/b4 produce tanh(0)=0 columns that are sliced away.
    w1_p = jnp.zeros((in_pad, _HIDDEN[0]), jnp.bfloat16)
    w1_p = w1_p.at[:input_dim, :].set(w1.astype(jnp.bfloat16))
    w4_p = jnp.zeros((_HIDDEN[2], out_pad), jnp.bfloat16)
    w4_p = w4_p.at[:, :output_dim].set(w4.astype(jnp.bfloat16))
    b4_p = jnp.zeros((1, out_pad), jnp.float32)
    b4_p = b4_p.at[:, :output_dim].set(b4.astype(jnp.float32))

    return (w1_p, b1.astype(jnp.float32),
            w2.astype(jnp.bfloat16), b2.astype(jnp.float32),
            w3.astype(jnp.bfloat16), b3.astype(jnp.float32),
            w4_p, b4_p)


def _choose_bm(batch, block_m):
    """Batch tile: large to amortize per-step overhead (v5e/v6e), but split in
    two when the whole batch fits one tile so both v7x TensorCores get a step."""
    b_rounded = _round_up(batch, 8)
    if b_rounded <= block_m:
        if b_rounded >= 16:
            return _round_up((b_rounded + 1) // 2, 8)   # >= 2 grid steps
        return b_rounded
    return block_m


@functools.partial(jax.jit, static_argnames=("output_dim", "block_m", "out_dtype"))
def generator_forward(z, prepared, output_dim, block_m=256, out_dtype=jnp.float32):
    """Fused Generator forward.  z: (B, input_dim) float32 (or bf16)."""
    w1_p, b1, w2, b2, w3, b3, w4_p, b4_p = prepared
    B, input_dim = z.shape
    in_pad = w1_p.shape[0]
    out_pad = w4_p.shape[1]
    assert input_dim <= in_pad and output_dim <= out_pad

    bm = _choose_bm(B, block_m)
    B_pad = _round_up(B, bm)
    grid = (B_pad // bm,)

    # bf16 z, lane-aligned zero padding (exact); halves the per-step z DMA and
    # removes the in-kernel cast on the first matmul operand.
    z_p = jnp.zeros((B_pad, in_pad), jnp.bfloat16)
    z_p = z_p.at[:B, :input_dim].set(z.astype(jnp.bfloat16))

    def batch_spec(feat):
        return pl.BlockSpec((bm, feat), lambda i: (i, 0))

    def const_spec(shape):
        return pl.BlockSpec(shape, lambda i: (0,) * len(shape))

    flops = 2 * B_pad * (in_pad * _HIDDEN[0] + _HIDDEN[0] * _HIDDEN[1]
                         + _HIDDEN[1] * _HIDDEN[2] + _HIDDEN[2] * out_pad)
    weight_bytes = 2 * (w1_p.size + w2.size + w3.size + w4_p.size)
    bias_bytes = 4 * (b1.size + b2.size + b3.size + b4_p.size)
    out_bytes = B_pad * out_pad * jnp.dtype(out_dtype).itemsize
    cost = pl.CostEstimate(flops=flops,
                           transcendentals=B_pad * out_pad,
                           bytes_accessed=2 * z_p.size + weight_bytes
                           + bias_bytes + out_bytes)

    out_p = pl.pallas_call(
        generator_kernel,
        out_shape=jax.ShapeDtypeStruct((B_pad, out_pad), out_dtype),
        grid_spec=pltpu.PrefetchScalarGridSpec(
            num_scalar_prefetch=0,
            grid=grid,
            in_specs=[
                batch_spec(in_pad),
                const_spec(w1_p.shape), const_spec(b1.shape),
                const_spec(w2.shape), const_spec(b2.shape),
                const_spec(w3.shape), const_spec(b3.shape),
                const_spec(w4_p.shape), const_spec(b4_p.shape),
            ],
            out_specs=batch_spec(out_pad),
        ),
        compiler_params=pltpu.CompilerParams(
            dimension_semantics=("parallel",),
            vmem_limit_bytes=32 << 20,
        ),
        cost_estimate=cost,
    )(z_p, w1_p, b1, w2, b2, w3, b3, w4_p, b4_p)

    return out_p[:B, :output_dim]


def init_generator_params(key, input_dim, output_dim):
    """Deterministic init matching the PyTorch module's layer shapes.

    Weights stored as (in_features, out_features); biases as (1, out_features).
    """
    dims = [input_dim, *_HIDDEN, output_dim]
    params = []
    for i in range(4):
        key, wk, bk = jax.random.split(key, 3)
        fan_in, fan_out = dims[i], dims[i + 1]
        bound = 1.0 / (fan_in ** 0.5)  # PyTorch nn.Linear default uniform bound
        w = jax.random.uniform(wk, (fan_in, fan_out), jnp.float32, -bound, bound)
        b = jax.random.uniform(bk, (1, fan_out), jnp.float32, -bound, bound)
        params.append((w, b))
    return params


def generator_reference(z, params):
    """Plain-JAX reference mirroring the kernel arithmetic (bf16 matmul
    operands, f32 accumulation, f32 epilogue)."""
    def lin(x, w, b):
        return jnp.dot(x.astype(jnp.bfloat16), w.astype(jnp.bfloat16),
                       preferred_element_type=jnp.float32) + b

    (w1, b1), (w2, b2), (w3, b3), (w4, b4) = params
    h = _leaky_relu(lin(z, w1, b1))
    h = _leaky_relu(lin(h, w2, b2))
    h = _leaky_relu(lin(h, w3, b3))
    return jnp.tanh(lin(h, w4, b4))


if __name__ == "__main__":
    key = jax.random.PRNGKey(0)
    # Small, deterministic example: latent dim 64, MNIST-like 784 output.
    # batch=64 exercises input/output lane padding and a 2-step grid (bm=32).
    batch, input_dim, output_dim = 64, 64, 784

    pkey, zkey = jax.random.split(key)
    params = init_generator_params(pkey, input_dim, output_dim)
    prepared = prepare_generator_params(params, input_dim, output_dim)  # one-time
    z = jax.random.normal(zkey, (batch, input_dim), jnp.float32)

    out = generator_forward(z, prepared, output_dim=output_dim)
    out = jax.block_until_ready(out)

    ref = generator_reference(z, params)
    assert out.shape == (batch, output_dim)
    max_err = float(jnp.max(jnp.abs(out - ref)))
    assert jnp.allclose(out, ref, atol=2e-3, rtol=2e-3), max_err

    print("KERNEL_OK")
</pallas_src>

<mosaic_0001>
module attributes {stable_mosaic.version = 11 : i64} {
  func.func @generator_kernel(%arg0: i32, %arg1: memref<32x128xbf16, #tpu.memory_space<vmem>>, %arg2: memref<128x256xbf16, #tpu.memory_space<vmem>>, %arg3: memref<1x256xf32, #tpu.memory_space<vmem>>, %arg4: memref<256x512xbf16, #tpu.memory_space<vmem>>, %arg5: memref<1x512xf32, #tpu.memory_space<vmem>>, %arg6: memref<512x1024xbf16, #tpu.memory_space<vmem>>, %arg7: memref<1x1024xf32, #tpu.memory_space<vmem>>, %arg8: memref<1024x896xbf16, #tpu.memory_space<vmem>>, %arg9: memref<1x896xf32, #tpu.memory_space<vmem>>, %arg10: memref<32x896xf32, #tpu.memory_space<vmem>>) attributes {dimension_semantics = [#tpu.dimension_semantics<parallel>], iteration_bounds = array<i64: 2>, scalar_prefetch = 0 : i64, scratch_operands = 0 : i64, tpu.core_type = #tpu.core_type<tc>, window_params = [{transform_indices = @transform_0, window_bounds = array<i64: 32, 128>}, {pipeline_mode = #tpu.pipeline_mode<synchronous>, transform_indices = @transform_1, window_bounds = array<i64: 128, 256>}, {pipeline_mode = #tpu.pipeline_mode<synchronous>, transform_indices = @transform_2, window_bounds = array<i64: 1, 256>}, {pipeline_mode = #tpu.pipeline_mode<synchronous>, transform_indices = @transform_3, window_bounds = array<i64: 256, 512>}, {pipeline_mode = #tpu.pipeline_mode<synchronous>, transform_indices = @transform_4, window_bounds = array<i64: 1, 512>}, {pipeline_mode = #tpu.pipeline_mode<synchronous>, transform_indices = @transform_5, window_bounds = array<i64: 512, 1024>}, {pipeline_mode = #tpu.pipeline_mode<synchronous>, transform_indices = @transform_6, window_bounds = array<i64: 1, 1024>}, {pipeline_mode = #tpu.pipeline_mode<synchronous>, transform_indices = @transform_7, window_bounds = array<i64: 1024, 896>}, {pipeline_mode = #tpu.pipeline_mode<synchronous>, transform_indices = @transform_8, window_bounds = array<i64: 1, 896>}, {transform_indices = @transform_9, window_bounds = array<i64: 32, 896>}]} {
    %c0 = arith.constant 0 : index
    %c0_0 = arith.constant 0 : index
    %0 = vector.load %arg1[%c0, %c0_0] : memref<32x128xbf16, #tpu.memory_space<vmem>>, vector<32x128xbf16>
    %c0_1 = arith.constant 0 : index
    %c0_2 = arith.constant 0 : index
    %1 = vector.load %arg2[%c0_1, %c0_2] : memref<128x256xbf16, #tpu.memory_space<vmem>>, vector<128x256xbf16>
    %cst = arith.constant dense<0.000000e+00> : vector<32x256xf32>
    %2 = tpu.matmul %0, %1, %cst {dimension_numbers = #tpu.dot_dimension_numbers<[1], [0], [0], [1], [0, 0, 1, 1], [], []>} : vector<32x128xbf16>, vector<128x256xbf16>, vector<32x256xf32> -> vector<32x256xf32>
    %c0_3 = arith.constant 0 : index
    %c0_4 = arith.constant 0 : index
    %3 = vector.load %arg3[%c0_3, %c0_4] : memref<1x256xf32, #tpu.memory_space<vmem>>, vector<1x256xf32>
    %4 = vector.broadcast %3 : vector<1x256xf32> to vector<32x256xf32>
    %5 = arith.addf %2, %4 : vector<32x256xf32>
    %cst_5 = arith.constant 0.000000e+00 : f32
    %6 = vector.broadcast %cst_5 : f32 to vector<32x256xf32>
    %7 = arith.cmpf ogt, %5, %6 : vector<32x256xf32>
    %cst_6 = arith.constant 2.000000e-01 : f32
    %8 = vector.broadcast %cst_6 : f32 to vector<32x256xf32>
    %9 = arith.mulf %8, %5 : vector<32x256xf32>
    %10 = arith.select %7, %5, %9 : vector<32x256xi1>, vector<32x256xf32>
    %11 = arith.truncf %10 : vector<32x256xf32> to vector<32x256xbf16>
    %c0_7 = arith.constant 0 : index
    %c0_8 = arith.constant 0 : index
    %12 = vector.load %arg4[%c0_7, %c0_8] : memref<256x512xbf16, #tpu.memory_space<vmem>>, vector<256x512xbf16>
    %cst_9 = arith.constant dense<0.000000e+00> : vector<32x512xf32>
    %13 = tpu.matmul %11, %12, %cst_9 {dimension_numbers = #tpu.dot_dimension_numbers<[1], [0], [0], [1], [0, 0, 1, 1], [], []>} : vector<32x256xbf16>, vector<256x512xbf16>, vector<32x512xf32> -> vector<32x512xf32>
    %c0_10 = arith.constant 0 : index
    %c0_11 = arith.constant 0 : index
    %14 = vector.load %arg5[%c0_10, %c0_11] : memref<1x512xf32, #tpu.memory_space<vmem>>, vector<1x512xf32>
    %15 = vector.broadcast %14 : vector<1x512xf32> to vector<32x512xf32>
    %16 = arith.addf %13, %15 : vector<32x512xf32>
    %cst_12 = arith.constant 0.000000e+00 : f32
    %17 = vector.broadcast %cst_12 : f32 to vector<32x512xf32>
    %18 = arith.cmpf ogt, %16, %17 : vector<32x512xf32>
    %cst_13 = arith.constant 2.000000e-01 : f32
    %19 = vector.broadcast %cst_13 : f32 to vector<32x512xf32>
    %20 = arith.mulf %19, %16 : vector<32x512xf32>
    %21 = arith.select %18, %16, %20 : vector<32x512xi1>, vector<32x512xf32>
    %22 = arith.truncf %21 : vector<32x512xf32> to vector<32x512xbf16>
    %c0_14 = arith.constant 0 : index
    %c0_15 = arith.constant 0 : index
    %23 = vector.load %arg6[%c0_14, %c0_15] : memref<512x1024xbf16, #tpu.memory_space<vmem>>, vector<512x1024xbf16>
    %cst_16 = arith.constant dense<0.000000e+00> : vector<32x1024xf32>
    %24 = tpu.matmul %22, %23, %cst_16 {dimension_numbers = #tpu.dot_dimension_numbers<[1], [0], [0], [1], [0, 0, 1, 1], [], []>} : vector<32x512xbf16>, vector<512x1024xbf16>, vector<32x1024xf32> -> vector<32x1024xf32>
    %c0_17 = arith.constant 0 : index
    %c0_18 = arith.constant 0 : index
    %25 = vector.load %arg7[%c0_17, %c0_18] : memref<1x1024xf32, #tpu.memory_space<vmem>>, vector<1x1024xf32>
    %26 = vector.broadcast %25 : vector<1x1024xf32> to vector<32x1024xf32>
    %27 = arith.addf %24, %26 : vector<32x1024xf32>
    %cst_19 = arith.constant 0.000000e+00 : f32
    %28 = vector.broadcast %cst_19 : f32 to vector<32x1024xf32>
    %29 = arith.cmpf ogt, %27, %28 : vector<32x1024xf32>
    %cst_20 = arith.constant 2.000000e-01 : f32
    %30 = vector.broadcast %cst_20 : f32 to vector<32x1024xf32>
    %31 = arith.mulf %30, %27 : vector<32x1024xf32>
    %32 = arith.select %29, %27, %31 : vector<32x1024xi1>, vector<32x1024xf32>
    %33 = arith.truncf %32 : vector<32x1024xf32> to vector<32x1024xbf16>
    %c0_21 = arith.constant 0 : index
    %c0_22 = arith.constant 0 : index
    %34 = vector.load %arg8[%c0_21, %c0_22] : memref<1024x896xbf16, #tpu.memory_space<vmem>>, vector<1024x896xbf16>
    %cst_23 = arith.constant dense<0.000000e+00> : vector<32x896xf32>
    %35 = tpu.matmul %33, %34, %cst_23 {dimension_numbers = #tpu.dot_dimension_numbers<[1], [0], [0], [1], [0, 0, 1, 1], [], []>} : vector<32x1024xbf16>, vector<1024x896xbf16>, vector<32x896xf32> -> vector<32x896xf32>
    %c0_24 = arith.constant 0 : index
    %c0_25 = arith.constant 0 : index
    %36 = vector.load %arg9[%c0_24, %c0_25] : memref<1x896xf32, #tpu.memory_space<vmem>>, vector<1x896xf32>
    %37 = vector.broadcast %36 : vector<1x896xf32> to vector<32x896xf32>
    %38 = arith.addf %35, %37 : vector<32x896xf32>
    %39 = math.tanh %38 : vector<32x896xf32>
    %c0_26 = arith.constant 0 : index
    %c0_27 = arith.constant 0 : index
    %40 = vector.load %arg10[%c0_26, %c0_27] : memref<32x896xf32, #tpu.memory_space<vmem>>, vector<32x896xf32>
    tpu.vector_store %arg10[%c0_26, %c0_27], %39 {strides = array<i32>} : memref<32x896xf32, #tpu.memory_space<vmem>>, vector<32x896xf32>,
    return
  }
  func.func @transform_0(%arg0: i32) -> (i32, i32) {
    %c0_i32 = arith.constant 0 : i32
    %c0_i32_0 = arith.constant 0 : i32
    return %arg0, %c0_i32 : i32, i32
  }
  func.func @transform_1(%arg0: i32) -> (i32, i32) {
    %c0_i32 = arith.constant 0 : i32
    %c0_i32_0 = arith.constant 0 : i32
    %c0_i32_1 = arith.constant 0 : i32
    return %c0_i32, %c0_i32_0 : i32, i32
  }
  func.func @transform_2(%arg0: i32) -> (i32, i32) {
    %c0_i32 = arith.constant 0 : i32
    %c0_i32_0 = arith.constant 0 : i32
    %c0_i32_1 = arith.constant 0 : i32
    return %c0_i32, %c0_i32_0 : i32, i32
  }
  func.func @transform_3(%arg0: i32) -> (i32, i32) {
    %c0_i32 = arith.constant 0 : i32
    %c0_i32_0 = arith.constant 0 : i32
    %c0_i32_1 = arith.constant 0 : i32
    return %c0_i32, %c0_i32_0 : i32, i32
  }
  func.func @transform_4(%arg0: i32) -> (i32, i32) {
    %c0_i32 = arith.constant 0 : i32
    %c0_i32_0 = arith.constant 0 : i32
    %c0_i32_1 = arith.constant 0 : i32
    return %c0_i32, %c0_i32_0 : i32, i32
  }
  func.func @transform_5(%arg0: i32) -> (i32, i32) {
    %c0_i32 = arith.constant 0 : i32
    %c0_i32_0 = arith.constant 0 : i32
    %c0_i32_1 = arith.constant 0 : i32
    return %c0_i32, %c0_i32_0 : i32, i32
  }
  func.func @transform_6(%arg0: i32) -> (i32, i32) {
    %c0_i32 = arith.constant 0 : i32
    %c0_i32_0 = arith.constant 0 : i32
    %c0_i32_1 = arith.constant 0 : i32
    return %c0_i32, %c0_i32_0 : i32, i32
  }
  func.func @transform_7(%arg0: i32) -> (i32, i32) {
    %c0_i32 = arith.constant 0 : i32
    %c0_i32_0 = arith.constant 0 : i32
    %c0_i32_1 = arith.constant 0 : i32
    return %c0_i32, %c0_i32_0 : i32, i32
  }
  func.func @transform_8(%arg0: i32) -> (i32, i32) {
    %c0_i32 = arith.constant 0 : i32
    %c0_i32_0 = arith.constant 0 : i32
    %c0_i32_1 = arith.constant 0 : i32
    return %c0_i32, %c0_i32_0 : i32, i32
  }
  func.func @transform_9(%arg0: i32) -> (i32, i32) {
    %c0_i32 = arith.constant 0 : i32
    %c0_i32_0 = arith.constant 0 : i32
    return %arg0, %c0_i32 : i32, i32
  }
}

</mosaic_0001>

<llo_original>
// kernel: generator_forward.1
$region0: #{generator_forward.1}
  #allocation0 [shape = 'u32[]', space=smem, size = 0x4, offset = 0x4, fixed_abs, tag = 'smem constant byte address 0x4 - core index']
  #allocation1 [shape = 'u32[144,128]{1,0:T(1,128)}', space=vmem, size = 0x12000, scoped, tag = 'internal scratch']
  %s0 = inlined_call_operand.vmem [shape: bf16[64,128], index: 0, kind: input, shape index: {}]
  %s1 = inlined_call_operand.hbm [shape: bf16[128,256], index: 1, kind: input, shape index: {}]
  %s2 = inlined_call_operand.hbm [shape: f32[1,256], index: 2, kind: input, shape index: {}]
  %s3 = inlined_call_operand.hbm [shape: bf16[256,512], index: 3, kind: input, shape index: {}]
  %s4 = inlined_call_operand.hbm [shape: f32[1,512], index: 4, kind: input, shape index: {}]
  %s5 = inlined_call_operand.hbm [shape: bf16[512,1024], index: 5, kind: input, shape index: {}]
  %s6 = inlined_call_operand.hbm [shape: f32[1,1024], index: 6, kind: input, shape index: {}]
  %s7 = inlined_call_operand.hbm [shape: bf16[1024,896], index: 7, kind: input, shape index: {}]
  %s8 = inlined_call_operand.hbm [shape: f32[1,896], index: 8, kind: input, shape index: {}]
  %s9 = inlined_call_operand.hbm [shape: f32[64,896], index: 9, kind: output, shape index: {}]
  %s10 = sld [smem:[#allocation0]]
  $region101: #{generator_forward.1} parent=0
    _
  %s12 = ssub.s32 1, %s10
  %s13 = scalar_select 0, %s12, %s10
  $region1: #{generator_forward.1} parent=0
    #allocation2 [shape = 'u8[65536]{0}', space=vmem, size = 0x10000, scoped, tag = 'input window, operand 1, single buffered']
    #allocation3 [shape = 's32[2]{0}', space=sflag, size = 0x8, scoped, tag = 'scoped memory for generator_forward.1']
    #allocation4 [shape = 's32[2]{0}', space=sflag, size = 0x8, scoped, tag = 'scoped memory for generator_forward.1']
    #allocation5 [shape = 'u8[1024]{0}', space=vmem, size = 0x400, scoped, tag = 'input window, operand 2, single buffered']
    #allocation6 [shape = 's32[1]{0}', space=sflag, size = 0x4, scoped, tag = 'scoped memory for generator_forward.1']
    #allocation7 [shape = 'u8[262144]{0}', space=vmem, size = 0x40000, scoped, tag = 'input window, operand 3, single buffered']
    #allocation8 [shape = 'u8[2048]{0}', space=vmem, size = 0x800, scoped, tag = 'input window, operand 4, single buffered']
    #allocation9 [shape = 's32[1]{0}', space=sflag, size = 0x4, scoped, tag = 'scoped memory for generator_forward.1']
    #allocation10 [shape = 'u8[1048576]{0}', space=vmem, size = 0x100000, scoped, tag = 'input window, operand 5, single buffered']
    #allocation11 [shape = 'u8[4096]{0}', space=vmem, size = 0x1000, scoped, tag = 'input window, operand 6, single buffered']
    #allocation12 [shape = 's32[1]{0}', space=sflag, size = 0x4, scoped, tag = 'scoped memory for generator_forward.1']
    #allocation13 [shape = 'u8[1835008]{0}', space=vmem, size = 0x1c0000, scoped, tag = 'input window, operand 7, single buffered']
    #allocation14 [shape = 'u8[3584]{0}', space=vmem, size = 0x1000, scoped, tag = 'input window, operand 8, single buffered']
    #allocation15 [shape = 's32[1]{0}', space=sflag, size = 0x4, scoped, tag = 'scoped memory for generator_forward.1']
    #allocation16 [shape = 'u8[229376]{0}', space=vmem, size = 0x38000, scoped, tag = 'output window, operand 0']
    %14 = vsyncpa [#allocation3], 0
    %15 = vsyncpa [#allocation6], 0
    %16 = vsyncpa [#allocation9], 0
    %17 = vsyncpa [#allocation12], 0
    %18 = vsyncpa [#allocation15], 0
    %19 = vsyncpa [#allocation4], 0
    %s20 = scalar_lea.sflag [#allocation4], 1
    %21 = vsyncpa %s20, 0
    loop: start=0, step=1, limit=4
    $region2: #{generator_forward.1} parent=1 // loop_pre_header
      _
    $region3: #{generator_forward.1} parent=1 // loop_header
      %s23 = sphi 0, %s27
      %p24 = scmp.ge.s32.totalorder %s23, 4
      %s33 = sphi 0, %s35
      %s36 = sphi 0, %s33
      %s37 = sphi 0, %s36
      %s53 = sphi 0, %s37
      %s57 = sphi 0, %s57
      %s59 = sphi 0, %s57
      %s60 = sphi 0, %s59
      %s74 = sphi 0, %s60
      %s78 = sphi 0, %s78
      %s80 = sphi 0, %s78
      %s81 = sphi 0, %s80
      %s95 = sphi 0, %s81
      %s99 = sphi 0, %s99
      %s101 = sphi 0, %s99
      %s102 = sphi 0, %s101
      %s116 = sphi 0, %s102
      %s120 = sphi 0, %s120
      %s122 = sphi 0, %s120
      %s123 = sphi 0, %s122
      %s137 = sphi 0, %s123
      %s141 = sphi 0, %s141
      %s143 = sphi 0, %s141
      %s144 = sphi 0, %s143
      %s158 = sphi 0, %s144
      %s162 = sphi 0, %s162
      %s164 = sphi 0, %s162
      %s165 = sphi 0, %s164
      %s179 = sphi 0, %s165
      %s183 = sphi 0, %s183
      %s185 = sphi 0, %s183
      %s186 = sphi 0, %s185
      %s200 = sphi 0, %s186
      %s204 = sphi 0, %s204
      %s206 = sphi 0, %s204
      %s207 = sphi 0, %s206
      %s221 = sphi 0, %s207
      %s227 = sphi 0, %s229
      %s230 = sphi 0, %s227
      %s231 = sphi 0, %s230
      %s247 = sphi 0, %s231
    $region4: #{generator_forward.1} parent=1 // loop_header_branch
      %26 = sbr.rel (%p24) target = $region8
    $region5: #{generator_forward.1} parent=1 // loop_body
      %s28 = ssub.s32 %s23, 1
      %s29 = ssub.s32 %s23, 2
      %s30 = sadd.s32 %s23, 1
      %s31 = ssub.s32 %s23, %s30
      %p32 = scmp.eq.s32.totalorder %s31, 0
      %s34 = sadd.s32 %s33, 1
      %s35 = scalar_select %p32, %s33, %s34
      %p38 = pneg %p32
      %p39 = scmp.eq.s32.totalorder %s23, 1
      %p40 = por %p38, %p39
      %p41 = scmp.ne.s32.totalorder %s33, %s36
      %p42 = scmp.eq.s32.totalorder %s23, 0
      %p43 = por %p41, %p42
      %p44 = scmp.ne.s32.totalorder %s33, %s36
      %p45 = scmp.eq.s32.totalorder %s28, 1
      %p46 = por %p44, %p45
      %p47 = scmp.ne.s32.totalorder %s36, %s37
      %p48 = scmp.eq.s32.totalorder %s28, 0
      %p49 = por %p47, %p48
      %p50 = scmp.ne.s32.totalorder %s36, %s37
      %p51 = scmp.eq.s32.totalorder %s29, 1
      %p52 = por %p50, %p51
      %p54 = scmp.ne.s32.totalorder %s37, %s53
      %p55 = scmp.eq.s32.totalorder %s29, 0
      %p56 = por %p54, %p55
      %s58 = sadd.s32 %s57, 1
      %p61 = scmp.eq.s32.totalorder %s23, 1
      %p62 = scmp.ne.s32.totalorder %s57, %s59
      %p63 = scmp.eq.s32.totalorder %s23, 0
      %p64 = por %p62, %p63
      %p65 = scmp.ne.s32.totalorder %s57, %s59
      %p66 = scmp.eq.s32.totalorder %s28, 1
      %p67 = por %p65, %p66
      %p68 = scmp.ne.s32.totalorder %s59, %s60
      %p69 = scmp.eq.s32.totalorder %s28, 0
      %p70 = por %p68, %p69
      %p71 = scmp.ne.s32.totalorder %s59, %s60
      %p72 = scmp.eq.s32.totalorder %s29, 1
      %p73 = por %p71, %p72
      %p75 = scmp.ne.s32.totalorder %s60, %s74
      %p76 = scmp.eq.s32.totalorder %s29, 0
      %p77 = por %p75, %p76
      %s79 = sadd.s32 %s78, 1
      %p82 = scmp.eq.s32.totalorder %s23, 1
      %p83 = scmp.ne.s32.totalorder %s78, %s80
      %p84 = scmp.eq.s32.totalorder %s23, 0
      %p85 = por %p83, %p84
      %p86 = scmp.ne.s32.totalorder %s78, %s80
      %p87 = scmp.eq.s32.totalorder %s28, 1
      %p88 = por %p86, %p87
      %p89 = scmp.ne.s32.totalorder %s80, %s81
      %p90 = scmp.eq.s32.totalorder %s28, 0
      %p91 = por %p89, %p90
      %p92 = scmp.ne.s32.totalorder %s80, %s81
      %p93 = scmp.eq.s32.totalorder %s29, 1
      %p94 = por %p92, %p93
      %p96 = scmp.ne.s32.totalorder %s81, %s95
      %p97 = scmp.eq.s32.totalorder %s29, 0
      %p98 = por %p96, %p97
      %s100 = sadd.s32 %s99, 1
      %p103 = scmp.eq.s32.totalorder %s23, 1
      %p104 = scmp.ne.s32.totalorder %s99, %s101
      %p105 = scmp.eq.s32.totalorder %s23, 0
      %p106 = por %p104, %p105
      %p107 = scmp.ne.s32.totalorder %s99, %s101
      %p108 = scmp.eq.s32.totalorder %s28, 1
      %p109 = por %p107, %p108
      %p110 = scmp.ne.s32.totalorder %s101, %s102
      %p111 = scmp.eq.s32.totalorder %s28, 0
      %p112 = por %p110, %p111
      %p113 = scmp.ne.s32.totalorder %s101, %s102
      %p114 = scmp.eq.s32.totalorder %s29, 1
      %p115 = por %p113, %p114
      %p117 = scmp.ne.s32.totalorder %s102, %s116
      %p118 = scmp.eq.s32.totalorder %s29, 0
      %p119 = por %p117, %p118
      %s121 = sadd.s32 %s120, 1
      %p124 = scmp.eq.s32.totalorder %s23, 1
      %p125 = scmp.ne.s32.totalorder %s120, %s122
      %p126 = scmp.eq.s32.totalorder %s23, 0
      %p127 = por %p125, %p126
      %p128 = scmp.ne.s32.totalorder %s120, %s122
      %p129 = scmp.eq.s32.totalorder %s28, 1
      %p130 = por %p128, %p129
      %p131 = scmp.ne.s32.totalorder %s122, %s123
      %p132 = scmp.eq.s32.totalorder %s28, 0
      %p133 = por %p131, %p132
      %p134 = scmp.ne.s32.totalorder %s122, %s123
      %p135 = scmp.eq.s32.totalorder %s29, 1
      %p136 = por %p134, %p135
      %p138 = scmp.ne.s32.totalorder %s123, %s137
      %p139 = scmp.eq.s32.totalorder %s29, 0
      %p140 = por %p138, %p139
      %s142 = sadd.s32 %s141, 1
      %p145 = scmp.eq.s32.totalorder %s23, 1
      %p146 = scmp.ne.s32.totalorder %s141, %s143
      %p147 = scmp.eq.s32.totalorder %s23, 0
      %p148 = por %p146, %p147
      %p149 = scmp.ne.s32.totalorder %s141, %s143
      %p150 = scmp.eq.s32.totalorder %s28, 1
      %p151 = por %p149, %p150
      %p152 = scmp.ne.s32.totalorder %s143, %s144
      %p153 = scmp.eq.s32.totalorder %s28, 0
      %p154 = por %p152, %p153
      %p155 = scmp.ne.s32.totalorder %s143, %s144
      %p156 = scmp.eq.s32.totalorder %s29, 1
      %p157 = por %p155, %p156
      %p159 = scmp.ne.s32.totalorder %s144, %s158
      %p160 = scmp.eq.s32.totalorder %s29, 0
      %p161 = por %p159, %p160
      %s163 = sadd.s32 %s162, 1
      %p166 = scmp.eq.s32.totalorder %s23, 1
      %p167 = scmp.ne.s32.totalorder %s162, %s164
      %p168 = scmp.eq.s32.totalorder %s23, 0
      %p169 = por %p167, %p168
      %p170 = scmp.ne.s32.totalorder %s162, %s164
      %p171 = scmp.eq.s32.totalorder %s28, 1
      %p172 = por %p170, %p171
      %p173 = scmp.ne.s32.totalorder %s164, %s165
      %p174 = scmp.eq.s32.totalorder %s28, 0
      %p175 = por %p173, %p174
      %p176 = scmp.ne.s32.totalorder %s164, %s165
      %p177 = scmp.eq.s32.totalorder %s29, 1
      %p178 = por %p176, %p177
      %p180 = scmp.ne.s32.totalorder %s165, %s179
      %p181 = scmp.eq.s32.totalorder %s29, 0
      %p182 = por %p180, %p181
      %s184 = sadd.s32 %s183, 1
      %p187 = scmp.eq.s32.totalorder %s23, 1
      %p188 = scmp.ne.s32.totalorder %s183, %s185
      %p189 = scmp.eq.s32.totalorder %s23, 0
      %p190 = por %p188, %p189
      %p191 = scmp.ne.s32.totalorder %s183, %s185
      %p192 = scmp.eq.s32.totalorder %s28, 1
      %p193 = por %p191, %p192
      %p194 = scmp.ne.s32.totalorder %s185, %s186
      %p195 = scmp.eq.s32.totalorder %s28, 0
      %p196 = por %p194, %p195
      %p197 = scmp.ne.s32.totalorder %s185, %s186
      %p198 = scmp.eq.s32.totalorder %s29, 1
      %p199 = por %p197, %p198
      %p201 = scmp.ne.s32.totalorder %s186, %s200
      %p202 = scmp.eq.s32.totalorder %s29, 0
      %p203 = por %p201, %p202
      %s205 = sadd.s32 %s204, 1
      %p208 = scmp.eq.s32.totalorder %s23, 1
      %p209 = scmp.ne.s32.totalorder %s204, %s206
      %p210 = scmp.eq.s32.totalorder %s23, 0
      %p211 = por %p209, %p210
      %p212 = scmp.ne.s32.totalorder %s204, %s206
      %p213 = scmp.eq.s32.totalorder %s28, 1
      %p214 = por %p212, %p213
      %p215 = scmp.ne.s32.totalorder %s206, %s207
      %p216 = scmp.eq.s32.totalorder %s28, 0
      %p217 = por %p215, %p216
      %p218 = scmp.ne.s32.totalorder %s206, %s207
      %p219 = scmp.eq.s32.totalorder %s29, 1
      %p220 = por %p218, %p219
      %p222 = scmp.ne.s32.totalorder %s207, %s221
      %p223 = scmp.eq.s32.totalorder %s29, 0
      %p224 = por %p222, %p223
      %s225 = ssub.s32 %s23, %s30
      %p226 = scmp.eq.s32.totalorder %s225, 0
      %s228 = sadd.s32 %s227, 1
      %s229 = scalar_select %p226, %s227, %s228
      %p232 = pneg %p226
      %p233 = scmp.eq.s32.totalorder %s23, 1
      %p234 = por %p232, %p233
      %p235 = scmp.ne.s32.totalorder %s227, %s230
      %p236 = scmp.eq.s32.totalorder %s23, 0
      %p237 = por %p235, %p236
      %p238 = scmp.ne.s32.totalorder %s227, %s230
      %p239 = scmp.eq.s32.totalorder %s28, 1
      %p240 = por %p238, %p239
      %p241 = scmp.ne.s32.totalorder %s230, %s231
      %p242 = scmp.eq.s32.totalorder %s28, 0
      %p243 = por %p241, %p242
      %p244 = scmp.ne.s32.totalorder %s230, %s231
      %p245 = scmp.eq.s32.totalorder %s29, 1
      %p246 = por %p244, %p245
      %p248 = scmp.ne.s32.totalorder %s231, %s247
      %p249 = scmp.eq.s32.totalorder %s29, 0
      %p250 = por %p248, %p249
      %p251 = scmp.le.s32.totalorder 1, %s23
      %p252 = scmp.lt.s32.totalorder %s23, 3
      %p253 = pnand %p251, %p252
      %p254 = pneg %p253
      // Predicated region
      $region9: #{generator_forward.1} parent=5 // pred_check
        _
      $region10: #{generator_forward.1} parent=5 // pred_check_branch
        %256 = sbr.rel (%p253) target = $region12
      $region11: #{generator_forward.1} parent=5 // pred_region
        %s257 = ssub.s32 %s23, 1
        // Predicated region
        $region13: #{generator_forward.1} parent=11 // pred_check
          %p258 = pneg %p70
        $region14: #{generator_forward.1} parent=11 // pred_check_branch
          %260 = sbr.rel (%p258) target = $region16
        $region15: #{generator_forward.1} parent=11 // pred_region
          %s262 = ssub.s32 2048, 2048
          %263 = vsyncadd [#allocation3], %s262
          %s264 = sshll.u32 [#allocation2], 4
          %s265 = int_to_ptr.vmem [resolvable:$true] %s264
          %270 = dma.hbm_to_vmem [thread:$0]  %s1, 2048, %s265, [#allocation3], 128, 128, 8
        $region16: #{generator_forward.1} parent=11 // pred_fallthru
          _
        // Predicated region
        $region17: #{generator_forward.1} parent=11 // pred_check
          %p271 = pneg %p91
        $region18: #{generator_forward.1} parent=11 // pred_check_branch
          %273 = sbr.rel (%p271) target = $region20
        $region19: #{generator_forward.1} parent=11 // pred_region
          %s275 = ssub.s32 32, 32
          %276 = vsyncadd [#allocation6], %s275
          %s278 = sshll.u32 [#allocation5], 4
          %s279 = int_to_ptr.vmem [resolvable:$true] %s278
          %281 = dma.hbm_to_vmem [thread:$0]  %s2, 32, %s279, [#allocation6]
        $region20: #{generator_forward.1} parent=11 // pred_fallthru
          _
        // Predicated region
        $region21: #{generator_forward.1} parent=11 // pred_check
          %p282 = pneg %p112
        $region22: #{generator_forward.1} parent=11 // pred_check_branch
          %284 = sbr.rel (%p282) target = $region24
        $region23: #{generator_forward.1} parent=11 // pred_region
          %s286 = ssub.s32 8192, 8192
          %287 = vsyncadd [#allocation6], %s286
          %s288 = sshll.u32 [#allocation7], 4
          %s289 = int_to_ptr.vmem [resolvable:$true] %s288
          %294 = dma.hbm_to_vmem [thread:$0]  %s3, 8192, %s289, [#allocation6], 256, 256, 16
        $region24: #{generator_forward.1} parent=11 // pred_fallthru
          _
        // Predicated region
        $region25: #{generator_forward.1} parent=11 // pred_check
          %p295 = pneg %p133
        $region26: #{generator_forward.1} parent=11 // pred_check_branch
          %297 = sbr.rel (%p295) target = $region28
        $region27: #{generator_forward.1} parent=11 // pred_region
          %s299 = ssub.s32 64, 64
          %300 = vsyncadd [#allocation9], %s299
          %s302 = sshll.u32 [#allocation8], 4
          %s303 = int_to_ptr.vmem [resolvable:$true] %s302
          %305 = dma.hbm_to_vmem [thread:$0]  %s4, 64, %s303, [#allocation9]
        $region28: #{generator_forward.1} parent=11 // pred_fallthru
          _
        // Predicated region
        $region29: #{generator_forward.1} parent=11 // pred_check
          %p306 = pneg %p154
        $region30: #{generator_forward.1} parent=11 // pred_check_branch
          %308 = sbr.rel (%p306) target = $region32
        $region31: #{generator_forward.1} parent=11 // pred_region
          %s310 = ssub.s32 32768, 32768
          %311 = vsyncadd [#allocation9], %s310
          %s312 = sshll.u32 [#allocation10], 4
          %s313 = int_to_ptr.vmem [resolvable:$true] %s312
          %318 = dma.hbm_to_vmem [thread:$0]  %s5, 32768, %s313, [#allocation9], 512, 512, 32
        $region32: #{generator_forward.1} parent=11 // pred_fallthru
          _
        // Predicated region
        $region33: #{generator_forward.1} parent=11 // pred_check
          %p319 = pneg %p175
        $region34: #{generator_forward.1} parent=11 // pred_check_branch
          %321 = sbr.rel (%p319) target = $region36
        $region35: #{generator_forward.1} parent=11 // pred_region
          %s323 = ssub.s32 128, 128
          %324 = vsyncadd [#allocation12], %s323
          %s326 = sshll.u32 [#allocation11], 4
          %s327 = int_to_ptr.vmem [resolvable:$true] %s326
          %329 = dma.hbm_to_vmem [thread:$0]  %s6, 128, %s327, [#allocation12]
        $region36: #{generator_forward.1} parent=11 // pred_fallthru
          _
        // Predicated region
        $region37: #{generator_forward.1} parent=11 // pred_check
          %p330 = pneg %p196
        $region38: #{generator_forward.1} parent=11 // pred_check_branch
          %332 = sbr.rel (%p330) target = $region40
        $region39: #{generator_forward.1} parent=11 // pred_region
          %s334 = ssub.s32 57344, 57344
          %335 = vsyncadd [#allocation12], %s334
          %s336 = sshll.u32 [#allocation13], 4
          %s337 = int_to_ptr.vmem [resolvable:$true] %s336
          %342 = dma.hbm_to_vmem [thread:$0]  %s7, 57344, %s337, [#allocation12], 448, 448, 28
        $region40: #{generator_forward.1} parent=11 // pred_fallthru
          _
        // Predicated region
        $region41: #{generator_forward.1} parent=11 // pred_check
          %p343 = pneg %p217
        $region42: #{generator_forward.1} parent=11 // pred_check_branch
          %345 = sbr.rel (%p343) target = $region44
        $region43: #{generator_forward.1} parent=11 // pred_region
          %s347 = ssub.s32 112, 112
          %348 = vsyncadd [#allocation15], %s347
          %s350 = sshll.u32 [#allocation14], 4
          %s351 = int_to_ptr.vmem [resolvable:$true] %s350
          %353 = dma.hbm_to_vmem [thread:$0]  %s8, 112, %s351, [#allocation15]
        $region44: #{generator_forward.1} parent=11 // pred_fallthru
          _
      $region12: #{generator_forward.1} parent=5 // pred_fallthru
        _
      %p354 = scmp.lt.s32.totalorder %s23, 2
      // Predicated region
      $region45: #{generator_forward.1} parent=5 // pred_check
        %p355 = pneg %p354
      $region46: #{generator_forward.1} parent=5 // pred_check_branch
        %357 = sbr.rel (%p355) target = $region48
      $region47: #{generator_forward.1} parent=5 // pred_region
        // Predicated region
        $region49: #{generator_forward.1} parent=47 // pred_check
          %p358 = pneg %p43
        $region50: #{generator_forward.1} parent=47 // pred_check_branch
          %360 = sbr.rel (%p358) target = $region52
        $region51: #{generator_forward.1} parent=47 // pred_region
          %s361 = smul.u32 4, %s23
          %p362 = scmp.lt.s32.totalorder %s361, 7
          %s363 = scalar_select %p362, %s361, 7
          %s364 = smul.addr %s363, 4
          %s365 = scalar_lea.vmem %s0, %s364
          %s366 = smul.u32 4, %s23
        $region52: #{generator_forward.1} parent=47 // pred_fallthru
          _
      $region48: #{generator_forward.1} parent=5 // pred_fallthru
        _
      %p367 = scmp.le.s32.totalorder 1, %s23
      %p368 = scmp.lt.s32.totalorder %s23, 3
      %p369 = pnand %p367, %p368
      %p370 = pneg %p369
      // Predicated region
      $region53: #{generator_forward.1} parent=5 // pred_check
        _
      $region54: #{generator_forward.1} parent=5 // pred_check_branch
        %372 = sbr.rel (%p369) target = $region56
      $region55: #{generator_forward.1} parent=5 // pred_region
        %s373 = ssub.s32 %s23, 1
        // Predicated region
        $region57: #{generator_forward.1} parent=55 // pred_check
          %p374 = pneg %p70
        $region58: #{generator_forward.1} parent=55 // pred_check_branch
          %376 = sbr.rel (%p374) target = $region60
        $region59: #{generator_forward.1} parent=55 // pred_region
          %377 = dma.done [#allocation3], 2048
        $region60: #{generator_forward.1} parent=55 // pred_fallthru
          _
        // Predicated region
        $region61: #{generator_forward.1} parent=55 // pred_check
          %p378 = pneg %p91
        $region62: #{generator_forward.1} parent=55 // pred_check_branch
          %380 = sbr.rel (%p378) target = $region64
        $region63: #{generator_forward.1} parent=55 // pred_region
          %381 = dma.done [#allocation6], 32
        $region64: #{generator_forward.1} parent=55 // pred_fallthru
          _
        // Predicated region
        $region65: #{generator_forward.1} parent=55 // pred_check
          %p382 = pneg %p112
        $region66: #{generator_forward.1} parent=55 // pred_check_branch
          %384 = sbr.rel (%p382) target = $region68
        $region67: #{generator_forward.1} parent=55 // pred_region
          %385 = dma.done [#allocation6], 8192
        $region68: #{generator_forward.1} parent=55 // pred_fallthru
          _
        // Predicated region
        $region69: #{generator_forward.1} parent=55 // pred_check
          %p386 = pneg %p133
        $region70: #{generator_forward.1} parent=55 // pred_check_branch
          %388 = sbr.rel (%p386) target = $region72
        $region71: #{generator_forward.1} parent=55 // pred_region
          %389 = dma.done [#allocation9], 64
        $region72: #{generator_forward.1} parent=55 // pred_fallthru
          _
        // Predicated region
        $region73: #{generator_forward.1} parent=55 // pred_check
          %p390 = pneg %p154
        $region74: #{generator_forward.1} parent=55 // pred_check_branch
          %392 = sbr.rel (%p390) target = $region76
        $region75: #{generator_forward.1} parent=55 // pred_region
          %393 = dma.done [#allocation9], 32768
        $region76: #{generator_forward.1} parent=55 // pred_fallthru
          _
        // Predicated region
        $region77: #{generator_forward.1} parent=55 // pred_check
          %p394 = pneg %p175
        $region78: #{generator_forward.1} parent=55 // pred_check_branch
          %396 = sbr.rel (%p394) target = $region80
        $region79: #{generator_forward.1} parent=55 // pred_region
          %397 = dma.done [#allocation12], 128
        $region80: #{generator_forward.1} parent=55 // pred_fallthru
          _
        // Predicated region
        $region81: #{generator_forward.1} parent=55 // pred_check
          %p398 = pneg %p196
        $region82: #{generator_forward.1} parent=55 // pred_check_branch
          %400 = sbr.rel (%p398) target = $region84
        $region83: #{generator_forward.1} parent=55 // pred_region
          %401 = dma.done [#allocation12], 57344
        $region84: #{generator_forward.1} parent=55 // pred_fallthru
          _
        // Predicated region
        $region85: #{generator_forward.1} parent=55 // pred_check
          %p402 = pneg %p217
        $region86: #{generator_forward.1} parent=55 // pred_check_branch
          %404 = sbr.rel (%p402) target = $region88
        $region87: #{generator_forward.1} parent=55 // pred_region
          %405 = dma.done [#allocation15], 112
        $region88: #{generator_forward.1} parent=55 // pred_fallthru
          _
        %s406 = smul.u32 4, %s28
        %p407 = scmp.lt.s32.totalorder %s406, 7
        %s408 = scalar_select %p407, %s406, 7
        %s409 = smul.addr %s408, 4
        %s410 = scalar_lea.vmem %s0, %s409
        %p411 = pneg %p49
        %p412 = pneg %p46
        %p413 = pneg %p70
        %p414 = pneg %p67
        %p415 = pneg %p91
        %p416 = pneg %p88
        %p417 = pneg %p112
        %p418 = pneg %p109
        %p419 = pneg %p133
        %p420 = pneg %p130
        %p421 = pneg %p154
        %p422 = pneg %p151
        %p423 = pneg %p175
        %p424 = pneg %p172
        %p425 = pneg %p196
        %p426 = pneg %p193
        %p427 = pneg %p217
        %p428 = pneg %p214
        %p429 = pneg %p243
        %p430 = pneg %p240
        %s431 = sand.u32 %s230, 1
        %s432 = scalar_lea.sflag [#allocation4], %s431
        %s433 = sand.u32 %s230, 1
        %s434 = smul.addr %s433, 224
        %s435 = scalar_lea.vmem [#allocation16], %s434
        %s436 = smul.u32 4, %s28
        %p437 = scmp.lt.s32.totalorder %s436, 7
        %s438 = scalar_select %p437, %s436, 7
        %s439 = smul.addr %s438, 4
        %s440 = scalar_lea.vmem %s0, %s439
        %s441 = smul.u32 4, %s28
        %s442 = smul.u32 4, %s28
        %v444 = vld [vmem:[%s440] sm:$0xf]
        %v445 = vld [vmem:[%s440 + $0x4] sm:$0xf]
        %v446 = vld [vmem:[%s440 + $0x8] sm:$0xf]
        %v447 = vld [vmem:[%s440 + $0xc] sm:$0xf]
        %v448 = vld [vmem:[#allocation2] sm:$0xff]
        %v449 = vld [vmem:[#allocation2 + $0x8] sm:$0xff]
        %v450 = vld [vmem:[#allocation2 + $0x10] sm:$0xff]
        %v451 = vld [vmem:[#allocation2 + $0x18] sm:$0xff]
        %v452 = vld [vmem:[#allocation2 + $0x20] sm:$0xff]
        %v453 = vld [vmem:[#allocation2 + $0x28] sm:$0xff]
        %v454 = vld [vmem:[#allocation2 + $0x30] sm:$0xff]
        %v455 = vld [vmem:[#allocation2 + $0x38] sm:$0xff]
        %v456 = vld [vmem:[#allocation2 + $0x40] sm:$0xff]
        %v457 = vld [vmem:[#allocation2 + $0x48] sm:$0xff]
        %v458 = vld [vmem:[#allocation2 + $0x50] sm:$0xff]
        %v459 = vld [vmem:[#allocation2 + $0x58] sm:$0xff]
        %v460 = vld [vmem:[#allocation2 + $0x60] sm:$0xff]
        %v461 = vld [vmem:[#allocation2 + $0x68] sm:$0xff]
        %v462 = vld [vmem:[#allocation2 + $0x70] sm:$0xff]
        %v463 = vld [vmem:[#allocation2 + $0x78] sm:$0xff]
        %v464 = vld [vmem:[#allocation5] sm:$0x3]
        %v466 = vlaneseq
        %v467 = vshrl.u32 %v466, 7
        %v468 = vsub.s32 0, %v467
        %v469 = vrot.slane %v464, %v468
        %v470 = vlaneseq
        %v471 = vshrl.u32 %v470, 7
        %v472 = vsub.s32 1, %v471
        %v473 = vrot.slane %v464, %v472
        %v480 = vunpack.c.l.b16 %v444
        %v481 = vunpack.c.l.b16 %v445
        %v482 = vunpack.c.l.b16 %v446
        %v483 = vunpack.c.l.b16 %v447
        %v484 = vpack.c.b16 %v481, %v480
        %v485 = vpack.c.b16 %v483, %v482
        %v504 = vunpack.c.l.b16 %v448
        %v505 = vunpack.c.h.b16 %v448
        %v506 = vunpack.c.l.b16 %v449
        %v507 = vunpack.c.h.b16 %v449
        %v508 = vunpack.c.l.b16 %v450
        %v509 = vunpack.c.h.b16 %v450
        %v510 = vunpack.c.l.b16 %v451
        %v511 = vunpack.c.h.b16 %v451
        %v512 = vunpack.c.l.b16 %v452
        %v513 = vunpack.c.h.b16 %v452
        %v514 = vunpack.c.l.b16 %v453
        %v515 = vunpack.c.h.b16 %v453
        %v516 = vunpack.c.l.b16 %v454
        %v517 = vunpack.c.h.b16 %v454
        %v518 = vunpack.c.l.b16 %v455
        %v519 = vunpack.c.h.b16 %v455
        %v520 = vunpack.c.l.b16 %v456
        %v521 = vunpack.c.h.b16 %v456
        %v522 = vunpack.c.l.b16 %v457
        %v523 = vunpack.c.h.b16 %v457
        %v524 = vunpack.c.l.b16 %v458
        %v525 = vunpack.c.h.b16 %v458
        %v526 = vunpack.c.l.b16 %v459
        %v527 = vunpack.c.h.b16 %v459
        %v528 = vunpack.c.l.b16 %v460
        %v529 = vunpack.c.h.b16 %v460
        %v530 = vunpack.c.l.b16 %v461
        %v531 = vunpack.c.h.b16 %v461
        %v532 = vunpack.c.l.b16 %v462
        %v533 = vunpack.c.h.b16 %v462
        %v534 = vunpack.c.l.b16 %v463
        %v535 = vunpack.c.h.b16 %v463
        %v536 = vpack.c.b16 %v506, %v504
        %v537 = vpack.c.b16 %v507, %v505
        %v538 = vpack.c.b16 %v510, %v508
        %v539 = vpack.c.b16 %v511, %v509
        %v540 = vpack.c.b16 %v514, %v512
        %v541 = vpack.c.b16 %v515, %v513
        %v542 = vpack.c.b16 %v518, %v516
        %v543 = vpack.c.b16 %v519, %v517
        %v544 = vpack.c.b16 %v522, %v520
        %v545 = vpack.c.b16 %v523, %v521
        %v546 = vpack.c.b16 %v526, %v524
        %v547 = vpack.c.b16 %v527, %v525
        %v548 = vpack.c.b16 %v530, %v528
        %v549 = vpack.c.b16 %v531, %v529
        %v550 = vpack.c.b16 %v534, %v532
        %v551 = vpack.c.b16 %v535, %v533
        %568 = vmatprep.subr.bf16.mxu0 %v551
        %569 = vmatpush1.bf16.msra.mxu0 %v550
        %570 = vmatprep.subr.bf16.mxu0 %v549
        %571 = vmatpush1.bf16.msra.mxu0 %v548
        %572 = vmatprep.subr.bf16.mxu0 %v547
        %573 = vmatpush1.bf16.msra.mxu0 %v546
        %574 = vmatprep.subr.bf16.mxu0 %v545
        %575 = vmatpush1.bf16.msra.mxu0 %v544
        %576 = vmatprep.subr.bf16.mxu0 %v543
        %577 = vmatpush1.bf16.msra.mxu0 %v542
        %578 = vmatprep.subr.bf16.mxu0 %v541
        %579 = vmatpush1.bf16.msra.mxu0 %v540
        %580 = vmatprep.subr.bf16.mxu0 %v539
        %581 = vmatpush1.bf16.msra.mxu0 %v538
        %582 = vmatprep.subr.bf16.mxu0 %v537
        %583 = vmatpush1.bf16.msra.mxu0 %v536
        %584 = vmatprep.subr.bf16.mxu0 0
        %585 = vmatpush2.bf16.msra.mxu0 0
        %586 = vmatprep.subr.bf16.mxu0 0
        %587 = vmatpush2.bf16.msra.mxu0 0
        %588 = vmatprep.subr.bf16.mxu0 0
        %589 = vmatpush2.bf16.msra.mxu0 0
        %590 = vmatprep.subr.bf16.mxu0 0
        %591 = vmatpush2.bf16.msra.mxu0 0
        %592 = vmatprep.subr.bf16.mxu0 0
        %593 = vmatpush2.bf16.msra.mxu0 0
        %594 = vmatprep.subr.bf16.mxu0 0
        %595 = vmatpush2.bf16.msra.mxu0 0
        %596 = vmatprep.subr.bf16.mxu0 0
        %597 = vmatpush2.bf16.msra.mxu0 0
        %598 = vmatprep.subr.bf16.mxu0 0
        %599 = vmatpush2.bf16.msra.mxu0 0
        %600 = vmatprep.mubr.bf16.mxu0 0
        %601 = vmatmul.mubr.bf16.gmra.mxu0 %v484
        %v602 = vpop.f32.mrf.mxu0
        %v603 = vadd.f32 %v469, %v602
        %v604 = vpop.f32.mrf.mxu0
        %v605 = vadd.f32 %v473, %v604
        %v606 = vpop.f32.mrf.mxu0
        %v607 = vadd.f32 %v469, %v606
        %v608 = vpop.f32.mrf.mxu0
        %v609 = vadd.f32 %v473, %v608
        %610 = vmatprep.mubr.bf16.mxu0 0
        %611 = vmatmul.mubr.bf16.gmra.mxu0 %v485
        %v612 = vpop.f32.mrf.mxu0
        %v613 = vadd.f32 %v469, %v612
        %v614 = vpop.f32.mrf.mxu0
        %v615 = vadd.f32 %v473, %v614
        %v616 = vpop.f32.mrf.mxu0
        %v617 = vadd.f32 %v469, %v616
        %v618 = vpop.f32.mrf.mxu0
        %v619 = vadd.f32 %v473, %v618
        %620 = vdwg.mxu0
        %vm621 = vcmp.gt.f32.partialorder %v603, 0.0
        %vm622 = vcmp.gt.f32.partialorder %v605, 0.0
        %vm623 = vcmp.gt.f32.partialorder %v607, 0.0
        %vm624 = vcmp.gt.f32.partialorder %v609, 0.0
        %vm625 = vcmp.gt.f32.partialorder %v613, 0.0
        %vm626 = vcmp.gt.f32.partialorder %v615, 0.0
        %vm627 = vcmp.gt.f32.partialorder %v617, 0.0
        %vm628 = vcmp.gt.f32.partialorder %v619, 0.0
        %v629 = vmul.f32 %v603, 0.2
        %v630 = vmul.f32 %v605, 0.2
        %v631 = vmul.f32 %v607, 0.2
        %v632 = vmul.f32 %v609, 0.2
        %v633 = vmul.f32 %v613, 0.2
        %v634 = vmul.f32 %v615, 0.2
        %v635 = vmul.f32 %v617, 0.2
        %v636 = vmul.f32 %v619, 0.2
        %v637 = vsel %vm621, %v603, %v629
        %v638 = vsel %vm622, %v605, %v630
        %v639 = vsel %vm623, %v607, %v631
        %v640 = vsel %vm624, %v609, %v632
        %v641 = vsel %vm625, %v613, %v633
        %v642 = vsel %vm626, %v615, %v634
        %v643 = vsel %vm627, %v617, %v635
        %v644 = vsel %vm628, %v619, %v636
        %v645 = vpack.c.bf16 %v639, %v637
        %v646 = vpack.c.bf16 %v640, %v638
        %v647 = vpack.c.bf16 %v643, %v641
        %v648 = vpack.c.bf16 %v644, %v642
        %v649 = vld [vmem:[#allocation7] sm:$0xff]
        %v650 = vld [vmem:[#allocation7 + $0x8] sm:$0xff]
        %v651 = vld [vmem:[#allocation7 + $0x10] sm:$0xff]
        %v652 = vld [vmem:[#allocation7 + $0x18] sm:$0xff]
        %v653 = vld [vmem:[#allocation7 + $0x20] sm:$0xff]
        %v654 = vld [vmem:[#allocation7 + $0x28] sm:$0xff]
        %v655 = vld [vmem:[#allocation7 + $0x30] sm:$0xff]
        %v656 = vld [vmem:[#allocation7 + $0x38] sm:$0xff]
        %v657 = vld [vmem:[#allocation7 + $0x40] sm:$0xff]
        %v658 = vld [vmem:[#allocation7 + $0x48] sm:$0xff]
        %v659 = vld [vmem:[#allocation7 + $0x50] sm:$0xff]
        %v660 = vld [vmem:[#allocation7 + $0x58] sm:$0xff]
        %v661 = vld [vmem:[#allocation7 + $0x60] sm:$0xff]
        %v662 = vld [vmem:[#allocation7 + $0x68] sm:$0xff]
        %v663 = vld [vmem:[#allocation7 + $0x70] sm:$0xff]
        %v664 = vld [vmem:[#allocation7 + $0x78] sm:$0xff]
        %v665 = vld [vmem:[#allocation7 + $0x80] sm:$0xff]
        %v666 = vld [vmem:[#allocation7 + $0x88] sm:$0xff]
        %v667 = vld [vmem:[#allocation7 + $0x90] sm:$0xff]
        %v668 = vld [vmem:[#allocation7 + $0x98] sm:$0xff]
        %v669 = vld [vmem:[#allocation7 + $0xa0] sm:$0xff]
        %v670 = vld [vmem:[#allocation7 + $0xa8] sm:$0xff]
        %v671 = vld [vmem:[#allocation7 + $0xb0] sm:$0xff]
        %v672 = vld [vmem:[#allocation7 + $0xb8] sm:$0xff]
        %v673 = vld [vmem:[#allocation7 + $0xc0] sm:$0xff]
        %v674 = vld [vmem:[#allocation7 + $0xc8] sm:$0xff]
        %v675 = vld [vmem:[#allocation7 + $0xd0] sm:$0xff]
        %v676 = vld [vmem:[#allocation7 + $0xd8] sm:$0xff]
        %v677 = vld [vmem:[#allocation7 + $0xe0] sm:$0xff]
        %v678 = vld [vmem:[#allocation7 + $0xe8] sm:$0xff]
        %v679 = vld [vmem:[#allocation7 + $0xf0] sm:$0xff]
        %v680 = vld [vmem:[#allocation7 + $0xf8] sm:$0xff]
        %v681 = vld [vmem:[#allocation7 + $0x100] sm:$0xff]
        %v682 = vld [vmem:[#allocation7 + $0x108] sm:$0xff]
        %v683 = vld [vmem:[#allocation7 + $0x110] sm:$0xff]
        %v684 = vld [vmem:[#allocation7 + $0x118] sm:$0xff]
        %v685 = vld [vmem:[#allocation7 + $0x120] sm:$0xff]
        %v686 = vld [vmem:[#allocation7 + $0x128] sm:$0xff]
        %v687 = vld [vmem:[#allocation7 + $0x130] sm:$0xff]
        %v688 = vld [vmem:[#allocation7 + $0x138] sm:$0xff]
        %v689 = vld [vmem:[#allocation7 + $0x140] sm:$0xff]
        %v690 = vld [vmem:[#allocation7 + $0x148] sm:$0xff]
        %v691 = vld [vmem:[#allocation7 + $0x150] sm:$0xff]
        %v692 = vld [vmem:[#allocation7 + $0x158] sm:$0xff]
        %v693 = vld [vmem:[#allocation7 + $0x160] sm:$0xff]
        %v694 = vld [vmem:[#allocation7 + $0x168] sm:$0xff]
        %v695 = vld [vmem:[#allocation7 + $0x170] sm:$0xff]
        %v696 = vld [vmem:[#allocation7 + $0x178] sm:$0xff]
        %v697 = vld [vmem:[#allocation7 + $0x180] sm:$0xff]
        %v698 = vld [vmem:[#allocation7 + $0x188] sm:$0xff]
        %v699 = vld [vmem:[#allocation7 + $0x190] sm:$0xff]
        %v700 = vld [vmem:[#allocation7 + $0x198] sm:$0xff]
        %v701 = vld [vmem:[#allocation7 + $0x1a0] sm:$0xff]
        %v702 = vld [vmem:[#allocation7 + $0x1a8] sm:$0xff]
        %v703 = vld [vmem:[#allocation7 + $0x1b0] sm:$0xff]
        %v704 = vld [vmem:[#allocation7 + $0x1b8] sm:$0xff]
        %v705 = vld [vmem:[#allocation7 + $0x1c0] sm:$0xff]
        %v706 = vld [vmem:[#allocation7 + $0x1c8] sm:$0xff]
        %v707 = vld [vmem:[#allocation7 + $0x1d0] sm:$0xff]
        %v708 = vld [vmem:[#allocation7 + $0x1d8] sm:$0xff]
        %v709 = vld [vmem:[#allocation7 + $0x1e0] sm:$0xff]
        %v710 = vld [vmem:[#allocation7 + $0x1e8] sm:$0xff]
        %v711 = vld [vmem:[#allocation7 + $0x1f0] sm:$0xff]
        %v712 = vld [vmem:[#allocation7 + $0x1f8] sm:$0xff]
        %v713 = vld [vmem:[#allocation8] sm:$0xf]
        %v715 = vlaneseq
        %v716 = vshrl.u32 %v715, 7
        %v717 = vsub.s32 0, %v716
        %v718 = vrot.slane %v713, %v717
        %v719 = vlaneseq
        %v720 = vshrl.u32 %v719, 7
        %v721 = vsub.s32 1, %v720
        %v722 = vrot.slane %v713, %v721
        %v723 = vlaneseq
        %v724 = vshrl.u32 %v723, 7
        %v725 = vsub.s32 2, %v724
        %v726 = vrot.slane %v713, %v725
        %v727 = vlaneseq
        %v728 = vshrl.u32 %v727, 7
        %v729 = vsub.s32 3, %v728
        %v730 = vrot.slane %v713, %v729
        %v799 = vunpack.c.l.b16 %v649
        %v800 = vunpack.c.h.b16 %v649
        %v801 = vunpack.c.l.b16 %v650
        %v802 = vunpack.c.h.b16 %v650
        %v803 = vunpack.c.l.b16 %v651
        %v804 = vunpack.c.h.b16 %v651
        %v805 = vunpack.c.l.b16 %v652
        %v806 = vunpack.c.h.b16 %v652
        %v807 = vunpack.c.l.b16 %v653
        %v808 = vunpack.c.h.b16 %v653
        %v809 = vunpack.c.l.b16 %v654
        %v810 = vunpack.c.h.b16 %v654
        %v811 = vunpack.c.l.b16 %v655
        %v812 = vunpack.c.h.b16 %v655
        %v813 = vunpack.c.l.b16 %v656
        %v814 = vunpack.c.h.b16 %v656
        %v815 = vunpack.c.l.b16 %v657
        %v816 = vunpack.c.h.b16 %v657
        %v817 = vunpack.c.l.b16 %v658
        %v818 = vunpack.c.h.b16 %v658
        %v819 = vunpack.c.l.b16 %v659
        %v820 = vunpack.c.h.b16 %v659
        %v821 = vunpack.c.l.b16 %v660
        %v822 = vunpack.c.h.b16 %v660
        %v823 = vunpack.c.l.b16 %v661
        %v824 = vunpack.c.h.b16 %v661
        %v825 = vunpack.c.l.b16 %v662
        %v826 = vunpack.c.h.b16 %v662
        %v827 = vunpack.c.l.b16 %v663
        %v828 = vunpack.c.h.b16 %v663
        %v829 = vunpack.c.l.b16 %v664
        %v830 = vunpack.c.h.b16 %v664
        %v831 = vunpack.c.l.b16 %v665
        %v832 = vunpack.c.h.b16 %v665
        %v833 = vunpack.c.l.b16 %v666
        %v834 = vunpack.c.h.b16 %v666
        %v835 = vunpack.c.l.b16 %v667
        %v836 = vunpack.c.h.b16 %v667
        %v837 = vunpack.c.l.b16 %v668
        %v838 = vunpack.c.h.b16 %v668
        %v839 = vunpack.c.l.b16 %v669
        %v840 = vunpack.c.h.b16 %v669
        %v841 = vunpack.c.l.b16 %v670
        %v842 = vunpack.c.h.b16 %v670
        %v843 = vunpack.c.l.b16 %v671
        %v844 = vunpack.c.h.b16 %v671
        %v845 = vunpack.c.l.b16 %v672
        %v846 = vunpack.c.h.b16 %v672
        %v847 = vunpack.c.l.b16 %v673
        %v848 = vunpack.c.h.b16 %v673
        %v849 = vunpack.c.l.b16 %v674
        %v850 = vunpack.c.h.b16 %v674
        %v851 = vunpack.c.l.b16 %v675
        %v852 = vunpack.c.h.b16 %v675
        %v853 = vunpack.c.l.b16 %v676
        %v854 = vunpack.c.h.b16 %v676
        %v855 = vunpack.c.l.b16 %v677
        %v856 = vunpack.c.h.b16 %v677
        %v857 = vunpack.c.l.b16 %v678
        %v858 = vunpack.c.h.b16 %v678
        %v859 = vunpack.c.l.b16 %v679
        %v860 = vunpack.c.h.b16 %v679
        %v861 = vunpack.c.l.b16 %v680
        %v862 = vunpack.c.h.b16 %v680
        %v863 = vunpack.c.l.b16 %v681
        %v864 = vunpack.c.h.b16 %v681
        %v865 = vunpack.c.l.b16 %v682
        %v866 = vunpack.c.h.b16 %v682
        %v867 = vunpack.c.l.b16 %v683
        %v868 = vunpack.c.h.b16 %v683
        %v869 = vunpack.c.l.b16 %v684
        %v870 = vunpack.c.h.b16 %v684
        %v871 = vunpack.c.l.b16 %v685
        %v872 = vunpack.c.h.b16 %v685
        %v873 = vunpack.c.l.b16 %v686
        %v874 = vunpack.c.h.b16 %v686
        %v875 = vunpack.c.l.b16 %v687
        %v876 = vunpack.c.h.b16 %v687
        %v877 = vunpack.c.l.b16 %v688
        %v878 = vunpack.c.h.b16 %v688
        %v879 = vunpack.c.l.b16 %v689
        %v880 = vunpack.c.h.b16 %v689
        %v881 = vunpack.c.l.b16 %v690
        %v882 = vunpack.c.h.b16 %v690
        %v883 = vunpack.c.l.b16 %v691
        %v884 = vunpack.c.h.b16 %v691
        %v885 = vunpack.c.l.b16 %v692
        %v886 = vunpack.c.h.b16 %v692
        %v887 = vunpack.c.l.b16 %v693
        %v888 = vunpack.c.h.b16 %v693
        %v889 = vunpack.c.l.b16 %v694
        %v890 = vunpack.c.h.b16 %v694
        %v891 = vunpack.c.l.b16 %v695
        %v892 = vunpack.c.h.b16 %v695
        %v893 = vunpack.c.l.b16 %v696
        %v894 = vunpack.c.h.b16 %v696
        %v895 = vunpack.c.l.b16 %v697
        %v896 = vunpack.c.h.b16 %v697
        %v897 = vunpack.c.l.b16 %v698
        %v898 = vunpack.c.h.b16 %v698
        %v899 = vunpack.c.l.b16 %v699
        %v900 = vunpack.c.h.b16 %v699
        %v901 = vunpack.c.l.b16 %v700
        %v902 = vunpack.c.h.b16 %v700
        %v903 = vunpack.c.l.b16 %v701
        %v904 = vunpack.c.h.b16 %v701
        %v905 = vunpack.c.l.b16 %v702
        %v906 = vunpack.c.h.b16 %v702
        %v907 = vunpack.c.l.b16 %v703
        %v908 = vunpack.c.h.b16 %v703
        %v909 = vunpack.c.l.b16 %v704
        %v910 = vunpack.c.h.b16 %v704
        %v911 = vunpack.c.l.b16 %v705
        %v912 = vunpack.c.h.b16 %v705
        %v913 = vunpack.c.l.b16 %v706
        %v914 = vunpack.c.h.b16 %v706
        %v915 = vunpack.c.l.b16 %v707
        %v916 = vunpack.c.h.b16 %v707
        %v917 = vunpack.c.l.b16 %v708
        %v918 = vunpack.c.h.b16 %v708
        %v919 = vunpack.c.l.b16 %v709
        %v920 = vunpack.c.h.b16 %v709
        %v921 = vunpack.c.l.b16 %v710
        %v922 = vunpack.c.h.b16 %v710
        %v923 = vunpack.c.l.b16 %v711
        %v924 = vunpack.c.h.b16 %v711
        %v925 = vunpack.c.l.b16 %v712
        %v926 = vunpack.c.h.b16 %v712
        %v927 = vpack.c.b16 %v803, %v799
        %v928 = vpack.c.b16 %v804, %v800
        %v929 = vpack.c.b16 %v805, %v801
        %v930 = vpack.c.b16 %v806, %v802
        %v931 = vpack.c.b16 %v811, %v807
        %v932 = vpack.c.b16 %v812, %v808
        %v933 = vpack.c.b16 %v813, %v809
        %v934 = vpack.c.b16 %v814, %v810
        %v935 = vpack.c.b16 %v819, %v815
        %v936 = vpack.c.b16 %v820, %v816
        %v937 = vpack.c.b16 %v821, %v817
        %v938 = vpack.c.b16 %v822, %v818
        %v939 = vpack.c.b16 %v827, %v823
        %v940 = vpack.c.b16 %v828, %v824
        %v941 = vpack.c.b16 %v829, %v825
        %v942 = vpack.c.b16 %v830, %v826
        %v943 = vpack.c.b16 %v835, %v831
        %v944 = vpack.c.b16 %v836, %v832
        %v945 = vpack.c.b16 %v837, %v833
        %v946 = vpack.c.b16 %v838, %v834
        %v947 = vpack.c.b16 %v843, %v839
        %v948 = vpack.c.b16 %v844, %v840
        %v949 = vpack.c.b16 %v845, %v841
        %v950 = vpack.c.b16 %v846, %v842
        %v951 = vpack.c.b16 %v851, %v847
        %v952 = vpack.c.b16 %v852, %v848
        %v953 = vpack.c.b16 %v853, %v849
        %v954 = vpack.c.b16 %v854, %v850
        %v955 = vpack.c.b16 %v859, %v855
        %v956 = vpack.c.b16 %v860, %v856
        %v957 = vpack.c.b16 %v861, %v857
        %v958 = vpack.c.b16 %v862, %v858
        %v959 = vpack.c.b16 %v867, %v863
        %v960 = vpack.c.b16 %v868, %v864
        %v961 = vpack.c.b16 %v869, %v865
        %v962 = vpack.c.b16 %v870, %v866
        %v963 = vpack.c.b16 %v875, %v871
        %v964 = vpack.c.b16 %v876, %v872
        %v965 = vpack.c.b16 %v877, %v873
        %v966 = vpack.c.b16 %v878, %v874
        %v967 = vpack.c.b16 %v883, %v879
        %v968 = vpack.c.b16 %v884, %v880
        %v969 = vpack.c.b16 %v885, %v881
        %v970 = vpack.c.b16 %v886, %v882
        %v971 = vpack.c.b16 %v891, %v887
        %v972 = vpack.c.b16 %v892, %v888
        %v973 = vpack.c.b16 %v893, %v889
        %v974 = vpack.c.b16 %v894, %v890
        %v975 = vpack.c.b16 %v899, %v895
        %v976 = vpack.c.b16 %v900, %v896
        %v977 = vpack.c.b16 %v901, %v897
        %v978 = vpack.c.b16 %v902, %v898
        %v979 = vpack.c.b16 %v907, %v903
        %v980 = vpack.c.b16 %v908, %v904
        %v981 = vpack.c.b16 %v909, %v905
        %v982 = vpack.c.b16 %v910, %v906
        %v983 = vpack.c.b16 %v915, %v911
        %v984 = vpack.c.b16 %v916, %v912
        %v985 = vpack.c.b16 %v917, %v913
        %v986 = vpack.c.b16 %v918, %v914
        %v987 = vpack.c.b16 %v923, %v919
        %v988 = vpack.c.b16 %v924, %v920
        %v989 = vpack.c.b16 %v925, %v921
        %v990 = vpack.c.b16 %v926, %v922
        %1055 = vmatprep.subr.bf16.mxu0 %v956
        %1056 = vmatpush1.bf16.msra.mxu0 %v955
        %1057 = vmatprep.subr.bf16.mxu0 %v952
        %1058 = vmatpush1.bf16.msra.mxu0 %v951
        %1059 = vmatprep.subr.bf16.mxu0 %v948
        %1060 = vmatpush1.bf16.msra.mxu0 %v947
        %1061 = vmatprep.subr.bf16.mxu0 %v944
        %1062 = vmatpush1.bf16.msra.mxu0 %v943
        %1063 = vmatprep.subr.bf16.mxu0 %v940
        %1064 = vmatpush1.bf16.msra.mxu0 %v939
        %1065 = vmatprep.subr.bf16.mxu0 %v936
        %1066 = vmatpush1.bf16.msra.mxu0 %v935
        %1067 = vmatprep.subr.bf16.mxu0 %v932
        %1068 = vmatpush1.bf16.msra.mxu0 %v931
        %1069 = vmatprep.subr.bf16.mxu0 %v928
        %1070 = vmatpush1.bf16.msra.mxu0 %v927
        %1071 = vmatprep.subr.bf16.mxu0 %v988
        %1072 = vmatpush2.bf16.msra.mxu0 %v987
        %1073 = vmatprep.subr.bf16.mxu0 %v984
        %1074 = vmatpush2.bf16.msra.mxu0 %v983
        %1075 = vmatprep.subr.bf16.mxu0 %v980
        %1076 = vmatpush2.bf16.msra.mxu0 %v979
        %1077 = vmatprep.subr.bf16.mxu0 %v976
        %1078 = vmatpush2.bf16.msra.mxu0 %v975
        %1079 = vmatprep.subr.bf16.mxu0 %v972
        %1080 = vmatpush2.bf16.msra.mxu0 %v971
        %1081 = vmatprep.subr.bf16.mxu0 %v968
        %1082 = vmatpush2.bf16.msra.mxu0 %v967
        %1083 = vmatprep.subr.bf16.mxu0 %v964
        %1084 = vmatpush2.bf16.msra.mxu0 %v963
        %1085 = vmatprep.subr.bf16.mxu0 %v960
        %1086 = vmatpush2.bf16.msra.mxu0 %v959
        %1087 = vmatprep.mubr.bf16.mxu0 %v646
        %1088 = vmatmul.mubr.bf16.gmra.mxu0 %v645
        %v1089 = vpop.f32.mrf.mxu0
        %v1090 = vadd.f32 %v718, %v1089
        %v1091 = vpop.f32.mrf.mxu0
        %v1092 = vadd.f32 %v722, %v1091
        %v1093 = vpop.f32.mrf.mxu0
        %v1094 = vadd.f32 %v718, %v1093
        %v1095 = vpop.f32.mrf.mxu0
        %v1096 = vadd.f32 %v722, %v1095
        %1097 = vmatprep.mubr.bf16.mxu0 %v648
        %1098 = vmatmul.mubr.bf16.gmra.mxu0 %v647
        %v1099 = vpop.f32.mrf.mxu0
        %v1100 = vadd.f32 %v718, %v1099
        %v1101 = vpop.f32.mrf.mxu0
        %v1102 = vadd.f32 %v722, %v1101
        %v1103 = vpop.f32.mrf.mxu0
        %v1104 = vadd.f32 %v718, %v1103
        %v1105 = vpop.f32.mrf.mxu0
        %v1106 = vadd.f32 %v722, %v1105
        %1107 = vdwg.mxu0
        %1108 = vmatprep.subr.bf16.mxu0 %v958
        %1109 = vmatpush1.bf16.msra.mxu0 %v957
        %1110 = vmatprep.subr.bf16.mxu0 %v954
        %1111 = vmatpush1.bf16.msra.mxu0 %v953
        %1112 = vmatprep.subr.bf16.mxu0 %v950
        %1113 = vmatpush1.bf16.msra.mxu0 %v949
        %1114 = vmatprep.subr.bf16.mxu0 %v946
        %1115 = vmatpush1.bf16.msra.mxu0 %v945
        %1116 = vmatprep.subr.bf16.mxu0 %v942
        %1117 = vmatpush1.bf16.msra.mxu0 %v941
        %1118 = vmatprep.subr.bf16.mxu0 %v938
        %1119 = vmatpush1.bf16.msra.mxu0 %v937
        %1120 = vmatprep.subr.bf16.mxu0 %v934
        %1121 = vmatpush1.bf16.msra.mxu0 %v933
        %1122 = vmatprep.subr.bf16.mxu0 %v930
        %1123 = vmatpush1.bf16.msra.mxu0 %v929
        %1124 = vmatprep.subr.bf16.mxu0 %v990
        %1125 = vmatpush2.bf16.msra.mxu0 %v989
        %1126 = vmatprep.subr.bf16.mxu0 %v986
        %1127 = vmatpush2.bf16.msra.mxu0 %v985
        %1128 = vmatprep.subr.bf16.mxu0 %v982
        %1129 = vmatpush2.bf16.msra.mxu0 %v981
        %1130 = vmatprep.subr.bf16.mxu0 %v978
        %1131 = vmatpush2.bf16.msra.mxu0 %v977
        %1132 = vmatprep.subr.bf16.mxu0 %v974
        %1133 = vmatpush2.bf16.msra.mxu0 %v973
        %1134 = vmatprep.subr.bf16.mxu0 %v970
        %1135 = vmatpush2.bf16.msra.mxu0 %v969
        %1136 = vmatprep.subr.bf16.mxu0 %v966
        %1137 = vmatpush2.bf16.msra.mxu0 %v965
        %1138 = vmatprep.subr.bf16.mxu0 %v962
        %1139 = vmatpush2.bf16.msra.mxu0 %v961
        %1140 = vmatprep.mubr.bf16.mxu0 %v646
        %1141 = vmatmul.mubr.bf16.gmra.mxu0 %v645
        %v1142 = vpop.f32.mrf.mxu0
        %v1143 = vadd.f32 %v726, %v1142
        %v1144 = vpop.f32.mrf.mxu0
        %v1145 = vadd.f32 %v730, %v1144
        %v1146 = vpop.f32.mrf.mxu0
        %v1147 = vadd.f32 %v726, %v1146
        %v1148 = vpop.f32.mrf.mxu0
        %v1149 = vadd.f32 %v730, %v1148
        %1150 = vmatprep.mubr.bf16.mxu0 %v648
        %1151 = vmatmul.mubr.bf16.gmra.mxu0 %v647
        %v1152 = vpop.f32.mrf.mxu0
        %v1153 = vadd.f32 %v726, %v1152
        %v1154 = vpop.f32.mrf.mxu0
        %v1155 = vadd.f32 %v730, %v1154
        %v1156 = vpop.f32.mrf.mxu0
        %v1157 = vadd.f32 %v726, %v1156
        %v1158 = vpop.f32.mrf.mxu0
        %v1159 = vadd.f32 %v730, %v1158
        %1160 = vdwg.mxu0
        %vm1161 = vcmp.gt.f32.partialorder %v1090, 0.0
        %vm1162 = vcmp.gt.f32.partialorder %v1092, 0.0
        %vm1163 = vcmp.gt.f32.partialorder %v1143, 0.0
        %vm1164 = vcmp.gt.f32.partialorder %v1145, 0.0
        %vm1165 = vcmp.gt.f32.partialorder %v1094, 0.0
        %vm1166 = vcmp.gt.f32.partialorder %v1096, 0.0
        %vm1167 = vcmp.gt.f32.partialorder %v1147, 0.0
        %vm1168 = vcmp.gt.f32.partialorder %v1149, 0.0
        %vm1169 = vcmp.gt.f32.partialorder %v1100, 0.0
        %vm1170 = vcmp.gt.f32.partialorder %v1102, 0.0
        %vm1171 = vcmp.gt.f32.partialorder %v1153, 0.0
        %vm1172 = vcmp.gt.f32.partialorder %v1155, 0.0
        %vm1173 = vcmp.gt.f32.partialorder %v1104, 0.0
        %vm1174 = vcmp.gt.f32.partialorder %v1106, 0.0
        %vm1175 = vcmp.gt.f32.partialorder %v1157, 0.0
        %vm1176 = vcmp.gt.f32.partialorder %v1159, 0.0
        %v1177 = vmul.f32 %v1090, 0.2
        %v1178 = vmul.f32 %v1092, 0.2
        %v1179 = vmul.f32 %v1143, 0.2
        %v1180 = vmul.f32 %v1145, 0.2
        %v1181 = vmul.f32 %v1094, 0.2
        %v1182 = vmul.f32 %v1096, 0.2
        %v1183 = vmul.f32 %v1147, 0.2
        %v1184 = vmul.f32 %v1149, 0.2
        %v1185 = vmul.f32 %v1100, 0.2
        %v1186 = vmul.f32 %v1102, 0.2
        %v1187 = vmul.f32 %v1153, 0.2
        %v1188 = vmul.f32 %v1155, 0.2
        %v1189 = vmul.f32 %v1104, 0.2
        %v1190 = vmul.f32 %v1106, 0.2
        %v1191 = vmul.f32 %v1157, 0.2
        %v1192 = vmul.f32 %v1159, 0.2
        %v1193 = vsel %vm1161, %v1090, %v1177
        %v1194 = vsel %vm1162, %v1092, %v1178
        %v1195 = vsel %vm1163, %v1143, %v1179
        %v1196 = vsel %vm1164, %v1145, %v1180
        %v1197 = vsel %vm1165, %v1094, %v1181
        %v1198 = vsel %vm1166, %v1096, %v1182
        %v1199 = vsel %vm1167, %v1147, %v1183
        %v1200 = vsel %vm1168, %v1149, %v1184
        %v1201 = vsel %vm1169, %v1100, %v1185
        %v1202 = vsel %vm1170, %v1102, %v1186
        %v1203 = vsel %vm1171, %v1153, %v1187
        %v1204 = vsel %vm1172, %v1155, %v1188
        %v1205 = vsel %vm1173, %v1104, %v1189
        %v1206 = vsel %vm1174, %v1106, %v1190
        %v1207 = vsel %vm1175, %v1157, %v1191
        %v1208 = vsel %vm1176, %v1159, %v1192
        %v1209 = vpack.c.bf16 %v1197, %v1193
        %v1210 = vpack.c.bf16 %v1198, %v1194
        %v1211 = vpack.c.bf16 %v1199, %v1195
        %v1212 = vpack.c.bf16 %v1200, %v1196
        %v1213 = vpack.c.bf16 %v1205, %v1201
        %v1214 = vpack.c.bf16 %v1206, %v1202
        %v1215 = vpack.c.bf16 %v1207, %v1203
        %v1216 = vpack.c.bf16 %v1208, %v1204
        %v1217 = vld [vmem:[#allocation10] sm:$0xff]
        %v1218 = vld [vmem:[#allocation10 + $0x8] sm:$0xff]
        %v1219 = vld [vmem:[#allocation10 + $0x10] sm:$0xff]
        %v1220 = vld [vmem:[#allocation10 + $0x18] sm:$0xff]
        %v1221 = vld [vmem:[#allocation10 + $0x20] sm:$0xff]
        %v1222 = vld [vmem:[#allocation10 + $0x28] sm:$0xff]
        %v1223 = vld [vmem:[#allocation10 + $0x30] sm:$0xff]
        %v1224 = vld [vmem:[#allocation10 + $0x38] sm:$0xff]
        %v1225 = vld [vmem:[#allocation10 + $0x40] sm:$0xff]
        %v1226 = vld [vmem:[#allocation10 + $0x48] sm:$0xff]
        %v1227 = vld [vmem:[#allocation10 + $0x50] sm:$0xff]
        %v1228 = vld [vmem:[#allocation10 + $0x58] sm:$0xff]
        %v1229 = vld [vmem:[#allocation10 + $0x60] sm:$0xff]
        %v1230 = vld [vmem:[#allocation10 + $0x68] sm:$0xff]
        %v1231 = vld [vmem:[#allocation10 + $0x70] sm:$0xff]
        %v1232 = vld [vmem:[#allocation10 + $0x78] sm:$0xff]
        %v1233 = vld [vmem:[#allocation10 + $0x80] sm:$0xff]
        %v1234 = vld [vmem:[#allocation10 + $0x88] sm:$0xff]
        %v1235 = vld [vmem:[#allocation10 + $0x90] sm:$0xff]
        %v1236 = vld [vmem:[#allocation10 + $0x98] sm:$0xff]
        %v1237 = vld [vmem:[#allocation10 + $0xa0] sm:$0xff]
        %v1238 = vld [vmem:[#allocation10 + $0xa8] sm:$0xff]
        %v1239 = vld [vmem:[#allocation10 + $0xb0] sm:$0xff]
        %v1240 = vld [vmem:[#allocation10 + $0xb8] sm:$0xff]
        %v1241 = vld [vmem:[#allocation10 + $0xc0] sm:$0xff]
        %v1242 = vld [vmem:[#allocation10 + $0xc8] sm:$0xff]
        %v1243 = vld [vmem:[#allocation10 + $0xd0] sm:$0xff]
        %v1244 = vld [vmem:[#allocation10 + $0xd8] sm:$0xff]
        %v1245 = vld [vmem:[#allocation10 + $0xe0] sm:$0xff]
        %v1246 = vld [vmem:[#allocation10 + $0xe8] sm:$0xff]
        %v1247 = vld [vmem:[#allocation10 + $0xf0] sm:$0xff]
        %v1248 = vld [vmem:[#allocation10 + $0xf8] sm:$0xff]
        %v1249 = vld [vmem:[#allocation10 + $0x100] sm:$0xff]
        %v1250 = vld [vmem:[#allocation10 + $0x108] sm:$0xff]
        %v1251 = vld [vmem:[#allocation10 + $0x110] sm:$0xff]
        %v1252 = vld [vmem:[#allocation10 + $0x118] sm:$0xff]
        %v1253 = vld [vmem:[#allocation10 + $0x120] sm:$0xff]
        %v1254 = vld [vmem:[#allocation10 + $0x128] sm:$0xff]
        %v1255 = vld [vmem:[#allocation10 + $0x130] sm:$0xff]
        %v1256 = vld [vmem:[#allocation10 + $0x138] sm:$0xff]
        %v1257 = vld [vmem:[#allocation10 + $0x140] sm:$0xff]
        %v1258 = vld [vmem:[#allocation10 + $0x148] sm:$0xff]
        %v1259 = vld [vmem:[#allocation10 + $0x150] sm:$0xff]
        %v1260 = vld [vmem:[#allocation10 + $0x158] sm:$0xff]
        %v1261 = vld [vmem:[#allocation10 + $0x160] sm:$0xff]
        %v1262 = vld [vmem:[#allocation10 + $0x168] sm:$0xff]
        %v1263 = vld [vmem:[#allocation10 + $0x170] sm:$0xff]
        %v1264 = vld [vmem:[#allocation10 + $0x178] sm:$0xff]
        %v1265 = vld [vmem:[#allocation10 + $0x180] sm:$0xff]
        %v1266 = vld [vmem:[#allocation10 + $0x188] sm:$0xff]
        %v1267 = vld [vmem:[#allocation10 + $0x190] sm:$0xff]
        %v1268 = vld [vmem:[#allocation10 + $0x198] sm:$0xff]
        %v1269 = vld [vmem:[#allocation10 + $0x1a0] sm:$0xff]
        %v1270 = vld [vmem:[#allocation10 + $0x1a8] sm:$0xff]
        %v1271 = vld [vmem:[#allocation10 + $0x1b0] sm:$0xff]
        %v1272 = vld [vmem:[#allocation10 + $0x1b8] sm:$0xff]
        %v1273 = vld [vmem:[#allocation10 + $0x1c0] sm:$0xff]
        %v1274 = vld [vmem:[#allocation10 + $0x1c8] sm:$0xff]
        %v1275 = vld [vmem:[#allocation10 + $0x1d0] sm:$0xff]
        %v1276 = vld [vmem:[#allocation10 + $0x1d8] sm:$0xff]
        %v1277 = vld [vmem:[#allocation10 + $0x1e0] sm:$0xff]
        %v1278 = vld [vmem:[#allocation10 + $0x1e8] sm:$0xff]
        %v1279 = vld [vmem:[#allocation10 + $0x1f0] sm:$0xff]
        %v1280 = vld [vmem:[#allocation10 + $0x1f8] sm:$0xff]
        %v1281 = vld [vmem:[#allocation10 + $0x200] sm:$0xff]
        %v1282 = vld [vmem:[#allocation10 + $0x208] sm:$0xff]
        %v1283 = vld [vmem:[#allocation10 + $0x210] sm:$0xff]
        %v1284 = vld [vmem:[#allocation10 + $0x218] sm:$0xff]
        %v1285 = vld [vmem:[#allocation10 + $0x220] sm:$0xff]
        %v1286 = vld [vmem:[#allocation10 + $0x228] sm:$0xff]
        %v1287 = vld [vmem:[#allocation10 + $0x230] sm:$0xff]
        %v1288 = vld [vmem:[#allocation10 + $0x238] sm:$0xff]
        %v1289 = vld [vmem:[#allocation10 + $0x240] sm:$0xff]
        %v1290 = vld [vmem:[#allocation10 + $0x248] sm:$0xff]
        %v1291 = vld [vmem:[#allocation10 + $0x250] sm:$0xff]
        %v1292 = vld [vmem:[#allocation10 + $0x258] sm:$0xff]
        %v1293 = vld [vmem:[#allocation10 + $0x260] sm:$0xff]
        %v1294 = vld [vmem:[#allocation10 + $0x268] sm:$0xff]
        %v1295 = vld [vmem:[#allocation10 + $0x270] sm:$0xff]
        %v1296 = vld [vmem:[#allocation10 + $0x278] sm:$0xff]
        %v1297 = vld [vmem:[#allocation10 + $0x280] sm:$0xff]
        %v1298 = vld [vmem:[#allocation10 + $0x288] sm:$0xff]
        %v1299 = vld [vmem:[#allocation10 + $0x290] sm:$0xff]
        %v1300 = vld [vmem:[#allocation10 + $0x298] sm:$0xff]
        %v1301 = vld [vmem:[#allocation10 + $0x2a0] sm:$0xff]
        %v1302 = vld [vmem:[#allocation10 + $0x2a8] sm:$0xff]
        %v1303 = vld [vmem:[#allocation10 + $0x2b0] sm:$0xff]
        %v1304 = vld [vmem:[#allocation10 + $0x2b8] sm:$0xff]
        %v1305 = vld [vmem:[#allocation10 + $0x2c0] sm:$0xff]
        %v1306 = vld [vmem:[#allocation10 + $0x2c8] sm:$0xff]
        %v1307 = vld [vmem:[#allocation10 + $0x2d0] sm:$0xff]
        %v1308 = vld [vmem:[#allocation10 + $0x2d8] sm:$0xff]
        %v1309 = vld [vmem:[#allocation10 + $0x2e0] sm:$0xff]
        %v1310 = vld [vmem:[#allocation10 + $0x2e8] sm:$0xff]
        %v1311 = vld [vmem:[#allocation10 + $0x2f0] sm:$0xff]
        %v1312 = vld [vmem:[#allocation10 + $0x2f8] sm:$0xff]
        %v1313 = vld [vmem:[#allocation10 + $0x300] sm:$0xff]
        %v1314 = vld [vmem:[#allocation10 + $0x308] sm:$0xff]
        %v1315 = vld [vmem:[#allocation10 + $0x310] sm:$0xff]
        %v1316 = vld [vmem:[#allocation10 + $0x318] sm:$0xff]
        %v1317 = vld [vmem:[#allocation10 + $0x320] sm:$0xff]
        %v1318 = vld [vmem:[#allocation10 + $0x328] sm:$0xff]
        %v1319 = vld [vmem:[#allocation10 + $0x330] sm:$0xff]
        %v1320 = vld [vmem:[#allocation10 + $0x338] sm:$0xff]
        %v1321 = vld [vmem:[#allocation10 + $0x340] sm:$0xff]
        %v1322 = vld [vmem:[#allocation10 + $0x348] sm:$0xff]
        %v1323 = vld [vmem:[#allocation10 + $0x350] sm:$0xff]
        %v1324 = vld [vmem:[#allocation10 + $0x358] sm:$0xff]
        %v1325 = vld [vmem:[#allocation10 + $0x360] sm:$0xff]
        %v1326 = vld [vmem:[#allocation10 + $0x368] sm:$0xff]
        %v1327 = vld [vmem:[#allocation10 + $0x370] sm:$0xff]
        %v1328 = vld [vmem:[#allocation10 + $0x378] sm:$0xff]
        %v1329 = vld [vmem:[#allocation10 + $0x380] sm:$0xff]
        %v1330 = vld [vmem:[#allocation10 + $0x388] sm:$0xff]
        %v1331 = vld [vmem:[#allocation10 + $0x390] sm:$0xff]
        %v1332 = vld [vmem:[#allocation10 + $0x398] sm:$0xff]
        %v1333 = vld [vmem:[#allocation10 + $0x3a0] sm:$0xff]
        %v1334 = vld [vmem:[#allocation10 + $0x3a8] sm:$0xff]
        %v1335 = vld [vmem:[#allocation10 + $0x3b0] sm:$0xff]
        %v1336 = vld [vmem:[#allocation10 + $0x3b8] sm:$0xff]
        %v1337 = vld [vmem:[#allocation10 + $0x3c0] sm:$0xff]
        %v1338 = vld [vmem:[#allocation10 + $0x3c8] sm:$0xff]
        %v1339 = vld [vmem:[#allocation10 + $0x3d0] sm:$0xff]
        %v1340 = vld [vmem:[#allocation10 + $0x3d8] sm:$0xff]
        %v1341 = vld [vmem:[#allocation10 + $0x3e0] sm:$0xff]
        %v1342 = vld [vmem:[#allocation10 + $0x3e8] sm:$0xff]
        %v1343 = vld [vmem:[#allocation10 + $0x3f0] sm:$0xff]
        %v1344 = vld [vmem:[#allocation10 + $0x3f8] sm:$0xff]
        %v1345 = vld [vmem:[#allocation10 + $0x400] sm:$0xff]
        %v1346 = vld [vmem:[#allocation10 + $0x408] sm:$0xff]
        %v1347 = vld [vmem:[#allocation10 + $0x410] sm:$0xff]
        %v1348 = vld [vmem:[#allocation10 + $0x418] sm:$0xff]
        %v1349 = vld [vmem:[#allocation10 + $0x420] sm:$0xff]
        %v1350 = vld [vmem:[#allocation10 + $0x428] sm:$0xff]
        %v1351 = vld [vmem:[#allocation10 + $0x430] sm:$0xff]
        %v1352 = vld [vmem:[#allocation10 + $0x438] sm:$0xff]
        %v1353 = vld [vmem:[#allocation10 + $0x440] sm:$0xff]
        %v1354 = vld [vmem:[#allocation10 + $0x448] sm:$0xff]
        %v1355 = vld [vmem:[#allocation10 + $0x450] sm:$0xff]
        %v1356 = vld [vmem:[#allocation10 + $0x458] sm:$0xff]
        %v1357 = vld [vmem:[#allocation10 + $0x460] sm:$0xff]
        %v1358 = vld [vmem:[#allocation10 + $0x468] sm:$0xff]
        %v1359 = vld [vmem:[#allocation10 + $0x470] sm:$0xff]
        %v1360 = vld [vmem:[#allocation10 + $0x478] sm:$0xff]
        %v1361 = vld [vmem:[#allocation10 + $0x480] sm:$0xff]
        %v1362 = vld [vmem:[#allocation10 + $0x488] sm:$0xff]
        %v1363 = vld [vmem:[#allocation10 + $0x490] sm:$0xff]
        %v1364 = vld [vmem:[#allocation10 + $0x498] sm:$0xff]
        %v1365 = vld [vmem:[#allocation10 + $0x4a0] sm:$0xff]
        %v1366 = vld [vmem:[#allocation10 + $0x4a8] sm:$0xff]
        %v1367 = vld [vmem:[#allocation10 + $0x4b0] sm:$0xff]
        %v1368 = vld [vmem:[#allocation10 + $0x4b8] sm:$0xff]
        %v1369 = vld [vmem:[#allocation10 + $0x4c0] sm:$0xff]
        %v1370 = vld [vmem:[#allocation10 + $0x4c8] sm:$0xff]
        %v1371 = vld [vmem:[#allocation10 + $0x4d0] sm:$0xff]
        %v1372 = vld [vmem:[#allocation10 + $0x4d8] sm:$0xff]
        %v1373 = vld [vmem:[#allocation10 + $0x4e0] sm:$0xff]
        %v1374 = vld [vmem:[#allocation10 + $0x4e8] sm:$0xff]
        %v1375 = vld [vmem:[#allocation10 + $0x4f0] sm:$0xff]
        %v1376 = vld [vmem:[#allocation10 + $0x4f8] sm:$0xff]
        %v1377 = vld [vmem:[#allocation10 + $0x500] sm:$0xff]
        %v1378 = vld [vmem:[#allocation10 + $0x508] sm:$0xff]
        %v1379 = vld [vmem:[#allocation10 + $0x510] sm:$0xff]
        %v1380 = vld [vmem:[#allocation10 + $0x518] sm:$0xff]
        %v1381 = vld [vmem:[#allocation10 + $0x520] sm:$0xff]
        %v1382 = vld [vmem:[#allocation10 + $0x528] sm:$0xff]
        %v1383 = vld [vmem:[#allocation10 + $0x530] sm:$0xff]
        %v1384 = vld [vmem:[#allocation10 + $0x538] sm:$0xff]
        %v1385 = vld [vmem:[#allocation10 + $0x540] sm:$0xff]
        %v1386 = vld [vmem:[#allocation10 + $0x548] sm:$0xff]
        %v1387 = vld [vmem:[#allocation10 + $0x550] sm:$0xff]
        %v1388 = vld [vmem:[#allocation10 + $0x558] sm:$0xff]
        %v1389 = vld [vmem:[#allocation10 + $0x560] sm:$0xff]
        %v1390 = vld [vmem:[#allocation10 + $0x568] sm:$0xff]
        %v1391 = vld [vmem:[#allocation10 + $0x570] sm:$0xff]
        %v1392 = vld [vmem:[#allocation10 + $0x578] sm:$0xff]
        %v1393 = vld [vmem:[#allocation10 + $0x580] sm:$0xff]
        %v1394 = vld [vmem:[#allocation10 + $0x588] sm:$0xff]
        %v1395 = vld [vmem:[#allocation10 + $0x590] sm:$0xff]
        %v1396 = vld [vmem:[#allocation10 + $0x598] sm:$0xff]
        %v1397 = vld [vmem:[#allocation10 + $0x5a0] sm:$0xff]
        %v1398 = vld [vmem:[#allocation10 + $0x5a8] sm:$0xff]
        %v1399 = vld [vmem:[#allocation10 + $0x5b0] sm:$0xff]
        %v1400 = vld [vmem:[#allocation10 + $0x5b8] sm:$0xff]
        %v1401 = vld [vmem:[#allocation10 + $0x5c0] sm:$0xff]
        %v1402 = vld [vmem:[#allocation10 + $0x5c8] sm:$0xff]
        %v1403 = vld [vmem:[#allocation10 + $0x5d0] sm:$0xff]
        %v1404 = vld [vmem:[#allocation10 + $0x5d8] sm:$0xff]
        %v1405 = vld [vmem:[#allocation10 + $0x5e0] sm:$0xff]
        %v1406 = vld [vmem:[#allocation10 + $0x5e8] sm:$0xff]
        %v1407 = vld [vmem:[#allocation10 + $0x5f0] sm:$0xff]
        %v1408 = vld [vmem:[#allocation10 + $0x5f8] sm:$0xff]
        %v1409 = vld [vmem:[#allocation10 + $0x600] sm:$0xff]
        %v1410 = vld [vmem:[#allocation10 + $0x608] sm:$0xff]
        %v1411 = vld [vmem:[#allocation10 + $0x610] sm:$0xff]
        %v1412 = vld [vmem:[#allocation10 + $0x618] sm:$0xff]
        %v1413 = vld [vmem:[#allocation10 + $0x620] sm:$0xff]
        %v1414 = vld [vmem:[#allocation10 + $0x628] sm:$0xff]
        %v1415 = vld [vmem:[#allocation10 + $0x630] sm:$0xff]
        %v1416 = vld [vmem:[#allocation10 + $0x638] sm:$0xff]
        %v1417 = vld [vmem:[#allocation10 + $0x640] sm:$0xff]
        %v1418 = vld [vmem:[#allocation10 + $0x648] sm:$0xff]
        %v1419 = vld [vmem:[#allocation10 + $0x650] sm:$0xff]
        %v1420 = vld [vmem:[#allocation10 + $0x658] sm:$0xff]
        %v1421 = vld [vmem:[#allocation10 + $0x660] sm:$0xff]
        %v1422 = vld [vmem:[#allocation10 + $0x668] sm:$0xff]
        %v1423 = vld [vmem:[#allocation10 + $0x670] sm:$0xff]
        %v1424 = vld [vmem:[#allocation10 + $0x678] sm:$0xff]
        %v1425 = vld [vmem:[#allocation10 + $0x680] sm:$0xff]
        %v1426 = vld [vmem:[#allocation10 + $0x688] sm:$0xff]
        %v1427 = vld [vmem:[#allocation10 + $0x690] sm:$0xff]
        %v1428 = vld [vmem:[#allocation10 + $0x698] sm:$0xff]
        %v1429 = vld [vmem:[#allocation10 + $0x6a0] sm:$0xff]
        %v1430 = vld [vmem:[#allocation10 + $0x6a8] sm:$0xff]
        %v1431 = vld [vmem:[#allocation10 + $0x6b0] sm:$0xff]
        %v1432 = vld [vmem:[#allocation10 + $0x6b8] sm:$0xff]
        %v1433 = vld [vmem:[#allocation10 + $0x6c0] sm:$0xff]
        %v1434 = vld [vmem:[#allocation10 + $0x6c8] sm:$0xff]
        %v1435 = vld [vmem:[#allocation10 + $0x6d0] sm:$0xff]
        %v1436 = vld [vmem:[#allocation10 + $0x6d8] sm:$0xff]
        %v1437 = vld [vmem:[#allocation10 + $0x6e0] sm:$0xff]
        %v1438 = vld [vmem:[#allocation10 + $0x6e8] sm:$0xff]
        %v1439 = vld [vmem:[#allocation10 + $0x6f0] sm:$0xff]
        %v1440 = vld [vmem:[#allocation10 + $0x6f8] sm:$0xff]
        %v1441 = vld [vmem:[#allocation10 + $0x700] sm:$0xff]
        %v1442 = vld [vmem:[#allocation10 + $0x708] sm:$0xff]
        %v1443 = vld [vmem:[#allocation10 + $0x710] sm:$0xff]
        %v1444 = vld [vmem:[#allocation10 + $0x718] sm:$0xff]
        %v1445 = vld [vmem:[#allocation10 + $0x720] sm:$0xff]
        %v1446 = vld [vmem:[#allocation10 + $0x728] sm:$0xff]
        %v1447 = vld [vmem:[#allocation10 + $0x730] sm:$0xff]
        %v1448 = vld [vmem:[#allocation10 + $0x738] sm:$0xff]
        %v1449 = vld [vmem:[#allocation10 + $0x740] sm:$0xff]
        %v1450 = vld [vmem:[#allocation10 + $0x748] sm:$0xff]
        %v1451 = vld [vmem:[#allocation10 + $0x750] sm:$0xff]
        %v1452 = vld [vmem:[#allocation10 + $0x758] sm:$0xff]
        %v1453 = vld [vmem:[#allocation10 + $0x760] sm:$0xff]
        %v1454 = vld [vmem:[#allocation10 + $0x768] sm:$0xff]
        %v1455 = vld [vmem:[#allocation10 + $0x770] sm:$0xff]
        %v1456 = vld [vmem:[#allocation10 + $0x778] sm:$0xff]
        %v1457 = vld [vmem:[#allocation10 + $0x780] sm:$0xff]
        %v1458 = vld [vmem:[#allocation10 + $0x788] sm:$0xff]
        %v1459 = vld [vmem:[#allocation10 + $0x790] sm:$0xff]
        %v1460 = vld [vmem:[#allocation10 + $0x798] sm:$0xff]
        %v1461 = vld [vmem:[#allocation10 + $0x7a0] sm:$0xff]
        %v1462 = vld [vmem:[#allocation10 + $0x7a8] sm:$0xff]
        %v1463 = vld [vmem:[#allocation10 + $0x7b0] sm:$0xff]
        %v1464 = vld [vmem:[#allocation10 + $0x7b8] sm:$0xff]
        %v1465 = vld [vmem:[#allocation10 + $0x7c0] sm:$0xff]
        %v1466 = vld [vmem:[#allocation10 + $0x7c8] sm:$0xff]
        %v1467 = vld [vmem:[#allocation10 + $0x7d0] sm:$0xff]
        %v1468 = vld [vmem:[#allocation10 + $0x7d8] sm:$0xff]
        %v1469 = vld [vmem:[#allocation10 + $0x7e0] sm:$0xff]
        %v1470 = vld [vmem:[#allocation10 + $0x7e8] sm:$0xff]
        %v1471 = vld [vmem:[#allocation10 + $0x7f0] sm:$0xff]
        %v1472 = vld [vmem:[#allocation10 + $0x7f8] sm:$0xff]
        %v1473 = vld [vmem:[#allocation11] sm:$0xff]
        %v1475 = vlaneseq
        %v1476 = vshrl.u32 %v1475, 7
        %v1477 = vsub.s32 0, %v1476
        %v1478 = vrot.slane %v1473, %v1477
        %v1479 = vlaneseq
        %v1480 = vshrl.u32 %v1479, 7
        %v1481 = vsub.s32 1, %v1480
        %v1482 = vrot.slane %v1473, %v1481
        %v1483 = vlaneseq
        %v1484 = vshrl.u32 %v1483, 7
        %v1485 = vsub.s32 2, %v1484
        %v1486 = vrot.slane %v1473, %v1485
        %v1487 = vlaneseq
        %v1488 = vshrl.u32 %v1487, 7
        %v1489 = vsub.s32 3, %v1488
        %v1490 = vrot.slane %v1473, %v1489
        %v1491 = vlaneseq
        %v1492 = vshrl.u32 %v1491, 7
        %v1493 = vsub.s32 4, %v1492
        %v1494 = vrot.slane %v1473, %v1493
        %v1495 = vlaneseq
        %v1496 = vshrl.u32 %v1495, 7
        %v1497 = vsub.s32 5, %v1496
        %v1498 = vrot.slane %v1473, %v1497
        %v1499 = vlaneseq
        %v1500 = vshrl.u32 %v1499, 7
        %v1501 = vsub.s32 6, %v1500
        %v1502 = vrot.slane %v1473, %v1501
        %v1503 = vlaneseq
        %v1504 = vshrl.u32 %v1503, 7
        %v1505 = vsub.s32 7, %v1504
        %v1506 = vrot.slane %v1473, %v1505
        %v1771 = vunpack.c.l.b16 %v1217
        %v1772 = vunpack.c.h.b16 %v1217
        %v1773 = vunpack.c.l.b16 %v1218
        %v1774 = vunpack.c.h.b16 %v1218
        %v1775 = vunpack.c.l.b16 %v1219
        %v1776 = vunpack.c.h.b16 %v1219
        %v1777 = vunpack.c.l.b16 %v1220
        %v1778 = vunpack.c.h.b16 %v1220
        %v1779 = vunpack.c.l.b16 %v1221
        %v1780 = vunpack.c.h.b16 %v1221
        %v1781 = vunpack.c.l.b16 %v1222
        %v1782 = vunpack.c.h.b16 %v1222
        %v1783 = vunpack.c.l.b16 %v1223
        %v1784 = vunpack.c.h.b16 %v1223
        %v1785 = vunpack.c.l.b16 %v1224
        %v1786 = vunpack.c.h.b16 %v1224
        %v1787 = vunpack.c.l.b16 %v1225
        %v1788 = vunpack.c.h.b16 %v1225
        %v1789 = vunpack.c.l.b16 %v1226
        %v1790 = vunpack.c.h.b16 %v1226
        %v1791 = vunpack.c.l.b16 %v1227
        %v1792 = vunpack.c.h.b16 %v1227
        %v1793 = vunpack.c.l.b16 %v1228
        %v1794 = vunpack.c.h.b16 %v1228
        %v1795 = vunpack.c.l.b16 %v1229
        %v1796 = vunpack.c.h.b16 %v1229
        %v1797 = vunpack.c.l.b16 %v1230
        %v1798 = vunpack.c.h.b16 %v1230
        %v1799 = vunpack.c.l.b16 %v1231
        %v1800 = vunpack.c.h.b16 %v1231
        %v1801 = vunpack.c.l.b16 %v1232
        %v1802 = vunpack.c.h.b16 %v1232
        %v1803 = vunpack.c.l.b16 %v1233
        %v1804 = vunpack.c.h.b16 %v1233
        %v1805 = vunpack.c.l.b16 %v1234
        %v1806 = vunpack.c.h.b16 %v1234
        %v1807 = vunpack.c.l.b16 %v1235
        %v1808 = vunpack.c.h.b16 %v1235
        %v1809 = vunpack.c.l.b16 %v1236
        %v1810 = vunpack.c.h.b16 %v1236
        %v1811 = vunpack.c.l.b16 %v1237
        %v1812 = vunpack.c.h.b16 %v1237
        %v1813 = vunpack.c.l.b16 %v1238
        %v1814 = vunpack.c.h.b16 %v1238
        %v1815 = vunpack.c.l.b16 %v1239
        %v1816 = vunpack.c.h.b16 %v1239
        %v1817 = vunpack.c.l.b16 %v1240
        %v1818 = vunpack.c.h.b16 %v1240
        %v1819 = vunpack.c.l.b16 %v1241
        %v1820 = vunpack.c.h.b16 %v1241
        %v1821 = vunpack.c.l.b16 %v1242
        %v1822 = vunpack.c.h.b16 %v1242
        %v1823 = vunpack.c.l.b16 %v1243
        %v1824 = vunpack.c.h.b16 %v1243
        %v1825 = vunpack.c.l.b16 %v1244
        %v1826 = vunpack.c.h.b16 %v1244
        %v1827 = vunpack.c.l.b16 %v1245
        %v1828 = vunpack.c.h.b16 %v1245
        %v1829 = vunpack.c.l.b16 %v1246
        %v1830 = vunpack.c.h.b16 %v1246
        %v1831 = vunpack.c.l.b16 %v1247
        %v1832 = vunpack.c.h.b16 %v1247
        %v1833 = vunpack.c.l.b16 %v1248
        %v1834 = vunpack.c.h.b16 %v1248
        %v1835 = vunpack.c.l.b16 %v1249
        %v1836 = vunpack.c.h.b16 %v1249
        %v1837 = vunpack.c.l.b16 %v1250
        %v1838 = vunpack.c.h.b16 %v1250
        %v1839 = vunpack.c.l.b16 %v1251
        %v1840 = vunpack.c.h.b16 %v1251
        %v1841 = vunpack.c.l.b16 %v1252
        %v1842 = vunpack.c.h.b16 %v1252
        %v1843 = vunpack.c.l.b16 %v1253
        %v1844 = vunpack.c.h.b16 %v1253
        %v1845 = vunpack.c.l.b16 %v1254
        %v1846 = vunpack.c.h.b16 %v1254
        %v1847 = vunpack.c.l.b16 %v1255
        %v1848 = vunpack.c.h.b16 %v1255
        %v1849 = vunpack.c.l.b16 %v1256
        %v1850 = vunpack.c.h.b16 %v1256
        %v1851 = vunpack.c.l.b16 %v1257
        %v1852 = vunpack.c.h.b16 %v1257
        %v1853 = vunpack.c.l.b16 %v1258
        %v1854 = vunpack.c.h.b16 %v1258
        %v1855 = vunpack.c.l.b16 %v1259
        %v1856 = vunpack.c.h.b16 %v1259
        %v1857 = vunpack.c.l.b16 %v1260
        %v1858 = vunpack.c.h.b16 %v1260
        %v1859 = vunpack.c.l.b16 %v1261
        %v1860 = vunpack.c.h.b16 %v1261
        %v1861 = vunpack.c.l.b16 %v1262
        %v1862 = vunpack.c.h.b16 %v1262
        %v1863 = vunpack.c.l.b16 %v1263
        %v1864 = vunpack.c.h.b16 %v1263
        %v1865 = vunpack.c.l.b16 %v1264
        %v1866 = vunpack.c.h.b16 %v1264
        %v1867 = vunpack.c.l.b16 %v1265
        %v1868 = vunpack.c.h.b16 %v1265
        %v1869 = vunpack.c.l.b16 %v1266
        %v1870 = vunpack.c.h.b16 %v1266
        %v1871 = vunpack.c.l.b16 %v1267
        %v1872 = vunpack.c.h.b16 %v1267
        %v1873 = vunpack.c.l.b16 %v1268
        %v1874 = vunpack.c.h.b16 %v1268
        %v1875 = vunpack.c.l.b16 %v1269
        %v1876 = vunpack.c.h.b16 %v1269
        %v1877 = vunpack.c.l.b16 %v1270
        %v1878 = vunpack.c.h.b16 %v1270
        %v1879 = vunpack.c.l.b16 %v1271
        %v1880 = vunpack.c.h.b16 %v1271
        %v1881 = vunpack.c.l.b16 %v1272
        %v1882 = vunpack.c.h.b16 %v1272
        %v1883 = vunpack.c.l.b16 %v1273
        %v1884 = vunpack.c.h.b16 %v1273
        %v1885 = vunpack.c.l.b16 %v1274
        %v1886 = vunpack.c.h.b16 %v1274
        %v1887 = vunpack.c.l.b16 %v1275
        %v1888 = vunpack.c.h.b16 %v1275
        %v1889 = vunpack.c.l.b16 %v1276
        %v1890 = vunpack.c.h.b16 %v1276
        %v1891 = vunpack.c.l.b16 %v1277
        %v1892 = vunpack.c.h.b16 %v1277
        %v1893 = vunpack.c.l.b16 %v1278
        %v1894 = vunpack.c.h.b16 %v1278
        %v1895 = vunpack.c.l.b16 %v1279
        %v1896 = vunpack.c.h.b16 %v1279
        %v1897 = vunpack.c.l.b16 %v1280
        %v1898 = vunpack.c.h.b16 %v1280
        %v1899 = vunpack.c.l.b16 %v1281
        %v1900 = vunpack.c.h.b16 %v1281
        %v1901 = vunpack.c.l.b16 %v1282
        %v1902 = vunpack.c.h.b16 %v1282
        %v1903 = vunpack.c.l.b16 %v1283
        %v1904 = vunpack.c.h.b16 %v1283
        %v1905 = vunpack.c.l.b16 %v1284
        %v1906 = vunpack.c.h.b16 %v1284
        %v1907 = vunpack.c.l.b16 %v1285
        %v1908 = vunpack.c.h.b16 %v1285
        %v1909 = vunpack.c.l.b16 %v1286
        %v1910 = vunpack.c.h.b16 %v1286
        %v1911 = vunpack.c.l.b16 %v1287
        %v1912 = vunpack.c.h.b16 %v1287
        %v1913 = vunpack.c.l.b16 %v1288
        %v1914 = vunpack.c.h.b16 %v1288
        %v1915 = vunpack.c.l.b16 %v1289
        %v1916 = vunpack.c.h.b16 %v1289
        %v1917 = vunpack.c.l.b16 %v1290
        %v1918 = vunpack.c.h.b16 %v1290
        %v1919 = vunpack.c.l.b16 %v1291
        %v1920 = vunpack.c.h.b16 %v1291
        %v1921 = vunpack.c.l.b16 %v1292
        %v1922 = vunpack.c.h.b16 %v1292
        %v1923 = vunpack.c.l.b16 %v1293
        %v1924 = vunpack.c.h.b16 %v1293
        %v1925 = vunpack.c.l.b16 %v1294
        %v1926 = vunpack.c.h.b16 %v1294
        %v1927 = vunpack.c.l.b16 %v1295
        %v1928 = vunpack.c.h.b16 %v1295
        %v1929 = vunpack.c.l.b16 %v1296
        %v1930 = vunpack.c.h.b16 %v1296
        %v1931 = vunpack.c.l.b16 %v1297
        %v1932 = vunpack.c.h.b16 %v1297
        %v1933 = vunpack.c.l.b16 %v1298
        %v1934 = vunpack.c.h.b16 %v1298
        %v1935 = vunpack.c.l.b16 %v1299
        %v1936 = vunpack.c.h.b16 %v1299
        %v1937 = vunpack.c.l.b16 %v1300
        %v1938 = vunpack.c.h.b16 %v1300
        %v1939 = vunpack.c.l.b16 %v1301
        %v1940 = vunpack.c.h.b16 %v1301
        %v1941 = vunpack.c.l.b16 %v1302
        %v1942 = vunpack.c.h.b16 %v1302
        %v1943 = vunpack.c.l.b16 %v1303
        %v1944 = vunpack.c.h.b16 %v1303
        %v1945 = vunpack.c.l.b16 %v1304
        %v1946 = vunpack.c.h.b16 %v1304
        %v1947 = vunpack.c.l.b16 %v1305
        %v1948 = vunpack.c.h.b16 %v1305
        %v1949 = vunpack.c.l.b16 %v1306
        %v1950 = vunpack.c.h.b16 %v1306
        %v1951 = vunpack.c.l.b16 %v1307
        %v1952 = vunpack.c.h.b16 %v1307
        %v1953 = vunpack.c.l.b16 %v1308
        %v1954 = vunpack.c.h.b16 %v1308
        %v1955 = vunpack.c.l.b16 %v1309
        %v1956 = vunpack.c.h.b16 %v1309
        %v1957 = vunpack.c.l.b16 %v1310
        %v1958 = vunpack.c.h.b16 %v1310
        %v1959 = vunpack.c.l.b16 %v1311
        %v1960 = vunpack.c.h.b16 %v1311
        %v1961 = vunpack.c.l.b16 %v1312
        %v1962 = vunpack.c.h.b16 %v1312
        %v1963 = vunpack.c.l.b16 %v1313
        %v1964 = vunpack.c.h.b16 %v1313
        %v1965 = vunpack.c.l.b16 %v1314
        %v1966 = vunpack.c.h.b16 %v1314
        %v1967 = vunpack.c.l.b16 %v1315
        %v1968 = vunpack.c.h.b16 %v1315
        %v1969 = vunpack.c.l.b16 %v1316
        %v1970 = vunpack.c.h.b16 %v1316
        %v1971 = vunpack.c.l.b16 %v1317
        %v1972 = vunpack.c.h.b16 %v1317
        %v1973 = vunpack.c.l.b16 %v1318
        %v1974 = vunpack.c.h.b16 %v1318
        %v1975 = vunpack.c.l.b16 %v1319
        %v1976 = vunpack.c.h.b16 %v1319
        %v1977 = vunpack.c.l.b16 %v1320
        %v1978 = vunpack.c.h.b16 %v1320
        %v1979 = vunpack.c.l.b16 %v1321
        %v1980 = vunpack.c.h.b16 %v1321
        %v1981 = vunpack.c.l.b16 %v1322
        %v1982 = vunpack.c.h.b16 %v1322
        %v1983 = vunpack.c.l.b16 %v1323
        %v1984 = vunpack.c.h.b16 %v1323
        %v1985 = vunpack.c.l.b16 %v1324
        %v1986 = vunpack.c.h.b16 %v1324
        %v1987 = vunpack.c.l.b16 %v1325
        %v1988 = vunpack.c.h.b16 %v1325
        %v1989 = vunpack.c.l.b16 %v1326
        %v1990 = vunpack.c.h.b16 %v1326
        %v1991 = vunpack.c.l.b16 %v1327
        %v1992 = vunpack.c.h.b16 %v1327
        %v1993 = vunpack.c.l.b16 %v1328
        %v1994 = vunpack.c.h.b16 %v1328
        %v1995 = vunpack.c.l.b16 %v1329
        %v1996 = vunpack.c.h.b16 %v1329
        %v1997 = vunpack.c.l.b16 %v1330
        %v1998 = vunpack.c.h.b16 %v1330
        %v1999 = vunpack.c.l.b16 %v1331
        %v2000 = vunpack.c.h.b16 %v1331
        %v2001 = vunpack.c.l.b16 %v1332
        %v2002 = vunpack.c.h.b16 %v1332
        %v2003 = vunpack.c.l.b16 %v1333
        %v2004 = vunpack.c.h.b16 %v1333
        %v2005 = vunpack.c.l.b16 %v1334
        %v2006 = vunpack.c.h.b16 %v1334
        %v2007 = vunpack.c.l.b16 %v1335
        %v2008 = vunpack.c.h.b16 %v1335
        %v2009 = vunpack.c.l.b16 %v1336
        %v2010 = vunpack.c.h.b16 %v1336
        %v2011 = vunpack.c.l.b16 %v1337
        %v2012 = vunpack.c.h.b16 %v1337
        %v2013 = vunpack.c.l.b16 %v1338
        %v2014 = vunpack.c.h.b16 %v1338
        %v2015 = vunpack.c.l.b16 %v1339
        %v2016 = vunpack.c.h.b16 %v1339
        %v2017 = vunpack.c.l.b16 %v1340
        %v2018 = vunpack.c.h.b16 %v1340
        %v2019 = vunpack.c.l.b16 %v1341
        %v2020 = vunpack.c.h.b16 %v1341
        %v2021 = vunpack.c.l.b16 %v1342
        %v2022 = vunpack.c.h.b16 %v1342
        %v2023 = vunpack.c.l.b16 %v1343
        %v2024 = vunpack.c.h.b16 %v1343
        %v2025 = vunpack.c.l.b16 %v1344
        %v2026 = vunpack.c.h.b16 %v1344
        %v2027 = vunpack.c.l.b16 %v1345
        %v2028 = vunpack.c.h.b16 %v1345
        %v2029 = vunpack.c.l.b16 %v1346
        %v2030 = vunpack.c.h.b16 %v1346
        %v2031 = vunpack.c.l.b16 %v1347
        %v2032 = vunpack.c.h.b16 %v1347
        %v2033 = vunpack.c.l.b16 %v1348
        %v2034 = vunpack.c.h.b16 %v1348
        %v2035 = vunpack.c.l.b16 %v1349
        %v2036 = vunpack.c.h.b16 %v1349
        %v2037 = vunpack.c.l.b16 %v1350
        %v2038 = vunpack.c.h.b16 %v1350
        %v2039 = vunpack.c.l.b16 %v1351
        %v2040 = vunpack.c.h.b16 %v1351
        %v2041 = vunpack.c.l.b16 %v1352
        %v2042 = vunpack.c.h.b16 %v1352
        %v2043 = vunpack.c.l.b16 %v1353
        %v2044 = vunpack.c.h.b16 %v1353
        %v2045 = vunpack.c.l.b16 %v1354
        %v2046 = vunpack.c.h.b16 %v1354
        %v2047 = vunpack.c.l.b16 %v1355
        %v2048 = vunpack.c.h.b16 %v1355
        %v2049 = vunpack.c.l.b16 %v1356
        %v2050 = vunpack.c.h.b16 %v1356
        %v2051 = vunpack.c.l.b16 %v1357
        %v2052 = vunpack.c.h.b16 %v1357
        %v2053 = vunpack.c.l.b16 %v1358
        %v2054 = vunpack.c.h.b16 %v1358
        %v2055 = vunpack.c.l.b16 %v1359
        %v2056 = vunpack.c.h.b16 %v1359
        %v2057 = vunpack.c.l.b16 %v1360
        %v2058 = vunpack.c.h.b16 %v1360
        %v2059 = vunpack.c.l.b16 %v1361
        %v2060 = vunpack.c.h.b16 %v1361
        %v2061 = vunpack.c.l.b16 %v1362
        %v2062 = vunpack.c.h.b16 %v1362
        %v2063 = vunpack.c.l.b16 %v1363
        %v2064 = vunpack.c.h.b16 %v1363
        %v2065 = vunpack.c.l.b16 %v1364
        %v2066 = vunpack.c.h.b16 %v1364
        %v2067 = vunpack.c.l.b16 %v1365
        %v2068 = vunpack.c.h.b16 %v1365
        %v2069 = vunpack.c.l.b16 %v1366
        %v2070 = vunpack.c.h.b16 %v1366
        %v2071 = vunpack.c.l.b16 %v1367
        %v2072 = vunpack.c.h.b16 %v1367
        %v2073 = vunpack.c.l.b16 %v1368
        %v2074 = vunpack.c.h.b16 %v1368
        %v2075 = vunpack.c.l.b16 %v1369
        %v2076 = vunpack.c.h.b16 %v1369
        %v2077 = vunpack.c.l.b16 %v1370
        %v2078 = vunpack.c.h.b16 %v1370
        %v2079 = vunpack.c.l.b16 %v1371
        %v2080 = vunpack.c.h.b16 %v1371
        %v2081 = vunpack.c.l.b16 %v1372
        %v2082 = vunpack.c.h.b16 %v1372
        %v2083 = vunpack.c.l.b16 %v1373
        %v2084 = vunpack.c.h.b16 %v1373
        %v2085 = vunpack.c.l.b16 %v1374
        %v2086 = vunpack.c.h.b16 %v1374
        %v2087 = vunpack.c.l.b16 %v1375
        %v2088 = vunpack.c.h.b16 %v1375
        %v2089 = vunpack.c.l.b16 %v1376
        %v2090 = vunpack.c.h.b16 %v1376
        %v2091 = vunpack.c.l.b16 %v1377
        %v2092 = vunpack.c.h.b16 %v1377
        %v2093 = vunpack.c.l.b16 %v1378
        %v2094 = vunpack.c.h.b16 %v1378
        %v2095 = vunpack.c.l.b16 %v1379
        %v2096 = vunpack.c.h.b16 %v1379
        %v2097 = vunpack.c.l.b16 %v1380
        %v2098 = vunpack.c.h.b16 %v1380
        %v2099 = vunpack.c.l.b16 %v1381
        %v2100 = vunpack.c.h.b16 %v1381
        %v2101 = vunpack.c.l.b16 %v1382
        %v2102 = vunpack.c.h.b16 %v1382
        %v2103 = vunpack.c.l.b16 %v1383
        %v2104 = vunpack.c.h.b16 %v1383
        %v2105 = vunpack.c.l.b16 %v1384
        %v2106 = vunpack.c.h.b16 %v1384
        %v2107 = vunpack.c.l.b16 %v1385
        %v2108 = vunpack.c.h.b16 %v1385
        %v2109 = vunpack.c.l.b16 %v1386
        %v2110 = vunpack.c.h.b16 %v1386
        %v2111 = vunpack.c.l.b16 %v1387
        %v2112 = vunpack.c.h.b16 %v1387
        %v2113 = vunpack.c.l.b16 %v1388
        %v2114 = vunpack.c.h.b16 %v1388
        %v2115 = vunpack.c.l.b16 %v1389
        %v2116 = vunpack.c.h.b16 %v1389
        %v2117 = vunpack.c.l.b16 %v1390
        %v2118 = vunpack.c.h.b16 %v1390
        %v2119 = vunpack.c.l.b16 %v1391
        %v2120 = vunpack.c.h.b16 %v1391
        %v2121 = vunpack.c.l.b16 %v1392
        %v2122 = vunpack.c.h.b16 %v1392
        %v2123 = vunpack.c.l.b16 %v1393
        %v2124 = vunpack.c.h.b16 %v1393
        %v2125 = vunpack.c.l.b16 %v1394
        %v2126 = vunpack.c.h.b16 %v1394
        %v2127 = vunpack.c.l.b16 %v1395
        %v2128 = vunpack.c.h.b16 %v1395
        %v2129 = vunpack.c.l.b16 %v1396
        %v2130 = vunpack.c.h.b16 %v1396
        %v2131 = vunpack.c.l.b16 %v1397
        %v2132 = vunpack.c.h.b16 %v1397
        %v2133 = vunpack.c.l.b16 %v1398
        %v2134 = vunpack.c.h.b16 %v1398
        %v2135 = vunpack.c.l.b16 %v1399
        %v2136 = vunpack.c.h.b16 %v1399
        %v2137 = vunpack.c.l.b16 %v1400
        %v2138 = vunpack.c.h.b16 %v1400
        %v2139 = vunpack.c.l.b16 %v1401
        %v2140 = vunpack.c.h.b16 %v1401
        %v2141 = vunpack.c.l.b16 %v1402
        %v2142 = vunpack.c.h.b16 %v1402
        %v2143 = vunpack.c.l.b16 %v1403
        %v2144 = vunpack.c.h.b16 %v1403
        %v2145 = vunpack.c.l.b16 %v1404
        %v2146 = vunpack.c.h.b16 %v1404
        %v2147 = vunpack.c.l.b16 %v1405
        %v2148 = vunpack.c.h.b16 %v1405
        %v2149 = vunpack.c.l.b16 %v1406
        %v2150 = vunpack.c.h.b16 %v1406
        %v2151 = vunpack.c.l.b16 %v1407
        %v2152 = vunpack.c.h.b16 %v1407
        %v2153 = vunpack.c.l.b16 %v1408
        %v2154 = vunpack.c.h.b16 %v1408
        %v2155 = vunpack.c.l.b16 %v1409
        %v2156 = vunpack.c.h.b16 %v1409
        %v2157 = vunpack.c.l.b16 %v1410
        %v2158 = vunpack.c.h.b16 %v1410
        %v2159 = vunpack.c.l.b16 %v1411
        %v2160 = vunpack.c.h.b16 %v1411
        %v2161 = vunpack.c.l.b16 %v1412
        %v2162 = vunpack.c.h.b16 %v1412
        %v2163 = vunpack.c.l.b16 %v1413
        %v2164 = vunpack.c.h.b16 %v1413
        %v2165 = vunpack.c.l.b16 %v1414
        %v2166 = vunpack.c.h.b16 %v1414
        %v2167 = vunpack.c.l.b16 %v1415
        %v2168 = vunpack.c.h.b16 %v1415
        %v2169 = vunpack.c.l.b16 %v1416
        %v2170 = vunpack.c.h.b16 %v1416
        %v2171 = vunpack.c.l.b16 %v1417
        %v2172 = vunpack.c.h.b16 %v1417
        %v2173 = vunpack.c.l.b16 %v1418
        %v2174 = vunpack.c.h.b16 %v1418
        %v2175 = vunpack.c.l.b16 %v1419
        %v2176 = vunpack.c.h.b16 %v1419
        %v2177 = vunpack.c.l.b16 %v1420
        %v2178 = vunpack.c.h.b16 %v1420
        %v2179 = vunpack.c.l.b16 %v1421
        %v2180 = vunpack.c.h.b16 %v1421
        %v2181 = vunpack.c.l.b16 %v1422
        %v2182 = vunpack.c.h.b16 %v1422
        %v2183 = vunpack.c.l.b16 %v1423
        %v2184 = vunpack.c.h.b16 %v1423
        %v2185 = vunpack.c.l.b16 %v1424
        %v2186 = vunpack.c.h.b16 %v1424
        %v2187 = vunpack.c.l.b16 %v1425
        %v2188 = vunpack.c.h.b16 %v1425
        %v2189 = vunpack.c.l.b16 %v1426
        %v2190 = vunpack.c.h.b16 %v1426
        %v2191 = vunpack.c.l.b16 %v1427
        %v2192 = vunpack.c.h.b16 %v1427
        %v2193 = vunpack.c.l.b16 %v1428
        %v2194 = vunpack.c.h.b16 %v1428
        %v2195 = vunpack.c.l.b16 %v1429
        %v2196 = vunpack.c.h.b16 %v1429
        %v2197 = vunpack.c.l.b16 %v1430
        %v2198 = vunpack.c.h.b16 %v1430
        %v2199 = vunpack.c.l.b16 %v1431
        %v2200 = vunpack.c.h.b16 %v1431
        %v2201 = vunpack.c.l.b16 %v1432
        %v2202 = vunpack.c.h.b16 %v1432
        %v2203 = vunpack.c.l.b16 %v1433
        %v2204 = vunpack.c.h.b16 %v1433
        %v2205 = vunpack.c.l.b16 %v1434
        %v2206 = vunpack.c.h.b16 %v1434
        %v2207 = vunpack.c.l.b16 %v1435
        %v2208 = vunpack.c.h.b16 %v1435
        %v2209 = vunpack.c.l.b16 %v1436
        %v2210 = vunpack.c.h.b16 %v1436
        %v2211 = vunpack.c.l.b16 %v1437
        %v2212 = vunpack.c.h.b16 %v1437
        %v2213 = vunpack.c.l.b16 %v1438
        %v2214 = vunpack.c.h.b16 %v1438
        %v2215 = vunpack.c.l.b16 %v1439
        %v2216 = vunpack.c.h.b16 %v1439
        %v2217 = vunpack.c.l.b16 %v1440
        %v2218 = vunpack.c.h.b16 %v1440
        %v2219 = vunpack.c.l.b16 %v1441
        %v2220 = vunpack.c.h.b16 %v1441
        %v2221 = vunpack.c.l.b16 %v1442
        %v2222 = vunpack.c.h.b16 %v1442
        %v2223 = vunpack.c.l.b16 %v1443
        %v2224 = vunpack.c.h.b16 %v1443
        %v2225 = vunpack.c.l.b16 %v1444
        %v2226 = vunpack.c.h.b16 %v1444
        %v2227 = vunpack.c.l.b16 %v1445
        %v2228 = vunpack.c.h.b16 %v1445
        %v2229 = vunpack.c.l.b16 %v1446
        %v2230 = vunpack.c.h.b16 %v1446
        %v2231 = vunpack.c.l.b16 %v1447
        %v2232 = vunpack.c.h.b16 %v1447
        %v2233 = vunpack.c.l.b16 %v1448
        %v2234 = vunpack.c.h.b16 %v1448
        %v2235 = vunpack.c.l.b16 %v1449
        %v2236 = vunpack.c.h.b16 %v1449
        %v2237 = vunpack.c.l.b16 %v1450
        %v2238 = vunpack.c.h.b16 %v1450
        %v2239 = vunpack.c.l.b16 %v1451
        %v2240 = vunpack.c.h.b16 %v1451
        %v2241 = vunpack.c.l.b16 %v1452
        %v2242 = vunpack.c.h.b16 %v1452
        %v2243 = vunpack.c.l.b16 %v1453
        %v2244 = vunpack.c.h.b16 %v1453
        %v2245 = vunpack.c.l.b16 %v1454
        %v2246 = vunpack.c.h.b16 %v1454
        %v2247 = vunpack.c.l.b16 %v1455
        %v2248 = vunpack.c.h.b16 %v1455
        %v2249 = vunpack.c.l.b16 %v1456
        %v2250 = vunpack.c.h.b16 %v1456
        %v2251 = vunpack.c.l.b16 %v1457
        %v2252 = vunpack.c.h.b16 %v1457
        %v2253 = vunpack.c.l.b16 %v1458
        %v2254 = vunpack.c.h.b16 %v1458
        %v2255 = vunpack.c.l.b16 %v1459
        %v2256 = vunpack.c.h.b16 %v1459
        %v2257 = vunpack.c.l.b16 %v1460
        %v2258 = vunpack.c.h.b16 %v1460
        %v2259 = vunpack.c.l.b16 %v1461
        %v2260 = vunpack.c.h.b16 %v1461
        %v2261 = vunpack.c.l.b16 %v1462
        %v2262 = vunpack.c.h.b16 %v1462
        %v2263 = vunpack.c.l.b16 %v1463
        %v2264 = vunpack.c.h.b16 %v1463
        %v2265 = vunpack.c.l.b16 %v1464
        %v2266 = vunpack.c.h.b16 %v1464
        %v2267 = vunpack.c.l.b16 %v1465
        %v2268 = vunpack.c.h.b16 %v1465
        %v2269 = vunpack.c.l.b16 %v1466
        %v2270 = vunpack.c.h.b16 %v1466
        %v2271 = vunpack.c.l.b16 %v1467
        %v2272 = vunpack.c.h.b16 %v1467
        %v2273 = vunpack.c.l.b16 %v1468
        %v2274 = vunpack.c.h.b16 %v1468
        %v2275 = vunpack.c.l.b16 %v1469
        %v2276 = vunpack.c.h.b16 %v1469
        %v2277 = vunpack.c.l.b16 %v1470
        %v2278 = vunpack.c.h.b16 %v1470
        %v2279 = vunpack.c.l.b16 %v1471
        %v2280 = vunpack.c.h.b16 %v1471
        %v2281 = vunpack.c.l.b16 %v1472
        %v2282 = vunpack.c.h.b16 %v1472
        %v2283 = vpack.c.b16 %v1779, %v1771
        %v2284 = vpack.c.b16 %v1780, %v1772
        %v2285 = vpack.c.b16 %v1781, %v1773
        %v2286 = vpack.c.b16 %v1782, %v1774
        %v2287 = vpack.c.b16 %v1783, %v1775
        %v2288 = vpack.c.b16 %v1784, %v1776
        %v2289 = vpack.c.b16 %v1785, %v1777
        %v2290 = vpack.c.b16 %v1786, %v1778
        %v2291 = vpack.c.b16 %v1795, %v1787
        %v2292 = vpack.c.b16 %v1796, %v1788
        %v2293 = vpack.c.b16 %v1797, %v1789
        %v2294 = vpack.c.b16 %v1798, %v1790
        %v2295 = vpack.c.b16 %v1799, %v1791
        %v2296 = vpack.c.b16 %v1800, %v1792
        %v2297 = vpack.c.b16 %v1801, %v1793
        %v2298 = vpack.c.b16 %v1802, %v1794
        %v2299 = vpack.c.b16 %v1811, %v1803
        %v2300 = vpack.c.b16 %v1812, %v1804
        %v2301 = vpack.c.b16 %v1813, %v1805
        %v2302 = vpack.c.b16 %v1814, %v1806
        %v2303 = vpack.c.b16 %v1815, %v1807
        %v2304 = vpack.c.b16 %v1816, %v1808
        %v2305 = vpack.c.b16 %v1817, %v1809
        %v2306 = vpack.c.b16 %v1818, %v1810
        %v2307 = vpack.c.b16 %v1827, %v1819
        %v2308 = vpack.c.b16 %v1828, %v1820
        %v2309 = vpack.c.b16 %v1829, %v1821
        %v2310 = vpack.c.b16 %v1830, %v1822
        %v2311 = vpack.c.b16 %v1831, %v1823
        %v2312 = vpack.c.b16 %v1832, %v1824
        %v2313 = vpack.c.b16 %v1833, %v1825
        %v2314 = vpack.c.b16 %v1834, %v1826
        %v2315 = vpack.c.b16 %v1843, %v1835
        %v2316 = vpack.c.b16 %v1844, %v1836
        %v2317 = vpack.c.b16 %v1845, %v1837
        %v2318 = vpack.c.b16 %v1846, %v1838
        %v2319 = vpack.c.b16 %v1847, %v1839
        %v2320 = vpack.c.b16 %v1848, %v1840
        %v2321 = vpack.c.b16 %v1849, %v1841
        %v2322 = vpack.c.b16 %v1850, %v1842
        %v2323 = vpack.c.b16 %v1859, %v1851
        %v2324 = vpack.c.b16 %v1860, %v1852
        %v2325 = vpack.c.b16 %v1861, %v1853
        %v2326 = vpack.c.b16 %v1862, %v1854
        %v2327 = vpack.c.b16 %v1863, %v1855
        %v2328 = vpack.c.b16 %v1864, %v1856
        %v2329 = vpack.c.b16 %v1865, %v1857
        %v2330 = vpack.c.b16 %v1866, %v1858
        %v2331 = vpack.c.b16 %v1875, %v1867
        %v2332 = vpack.c.b16 %v1876, %v1868
        %v2333 = vpack.c.b16 %v1877, %v1869
        %v2334 = vpack.c.b16 %v1878, %v1870
        %v2335 = vpack.c.b16 %v1879, %v1871
        %v2336 = vpack.c.b16 %v1880, %v1872
        %v2337 = vpack.c.b16 %v1881, %v1873
        %v2338 = vpack.c.b16 %v1882, %v1874
        %v2339 = vpack.c.b16 %v1891, %v1883
        %v2340 = vpack.c.b16 %v1892, %v1884
        %v2341 = vpack.c.b16 %v1893, %v1885
        %v2342 = vpack.c.b16 %v1894, %v1886
        %v2343 = vpack.c.b16 %v1895, %v1887
        %v2344 = vpack.c.b16 %v1896, %v1888
        %v2345 = vpack.c.b16 %v1897, %v1889
        %v2346 = vpack.c.b16 %v1898, %v1890
        %v2347 = vpack.c.b16 %v1907, %v1899
        %v2348 = vpack.c.b16 %v1908, %v1900
        %v2349 = vpack.c.b16 %v1909, %v1901
        %v2350 = vpack.c.b16 %v1910, %v1902
        %v2351 = vpack.c.b16 %v1911, %v1903
        %v2352 = vpack.c.b16 %v1912, %v1904
        %v2353 = vpack.c.b16 %v1913, %v1905
        %v2354 = vpack.c.b16 %v1914, %v1906
        %v2355 = vpack.c.b16 %v1923, %v1915
        %v2356 = vpack.c.b16 %v1924, %v1916
        %v2357 = vpack.c.b16 %v1925, %v1917
        %v2358 = vpack.c.b16 %v1926, %v1918
        %v2359 = vpack.c.b16 %v1927, %v1919
        %v2360 = vpack.c.b16 %v1928, %v1920
        %v2361 = vpack.c.b16 %v1929, %v1921
        %v2362 = vpack.c.b16 %v1930, %v1922
        %v2363 = vpack.c.b16 %v1939, %v1931
        %v2364 = vpack.c.b16 %v1940, %v1932
        %v2365 = vpack.c.b16 %v1941, %v1933
        %v2366 = vpack.c.b16 %v1942, %v1934
        %v2367 = vpack.c.b16 %v1943, %v1935
        %v2368 = vpack.c.b16 %v1944, %v1936
        %v2369 = vpack.c.b16 %v1945, %v1937
        %v2370 = vpack.c.b16 %v1946, %v1938
        %v2371 = vpack.c.b16 %v1955, %v1947
        %v2372 = vpack.c.b16 %v1956, %v1948
        %v2373 = vpack.c.b16 %v1957, %v1949
        %v2374 = vpack.c.b16 %v1958, %v1950
        %v2375 = vpack.c.b16 %v1959, %v1951
        %v2376 = vpack.c.b16 %v1960, %v1952
        %v2377 = vpack.c.b16 %v1961, %v1953
        %v2378 = vpack.c.b16 %v1962, %v1954
        %v2379 = vpack.c.b16 %v1971, %v1963
        %v2380 = vpack.c.b16 %v1972, %v1964
        %v2381 = vpack.c.b16 %v1973, %v1965
        %v2382 = vpack.c.b16 %v1974, %v1966
        %v2383 = vpack.c.b16 %v1975, %v1967
        %v2384 = vpack.c.b16 %v1976, %v1968
        %v2385 = vpack.c.b16 %v1977, %v1969
        %v2386 = vpack.c.b16 %v1978, %v1970
        %v2387 = vpack.c.b16 %v1987, %v1979
        %v2388 = vpack.c.b16 %v1988, %v1980
        %v2389 = vpack.c.b16 %v1989, %v1981
        %v2390 = vpack.c.b16 %v1990, %v1982
        %v2391 = vpack.c.b16 %v1991, %v1983
        %v2392 = vpack.c.b16 %v1992, %v1984
        %v2393 = vpack.c.b16 %v1993, %v1985
        %v2394 = vpack.c.b16 %v1994, %v1986
        %v2395 = vpack.c.b16 %v2003, %v1995
        %v2396 = vpack.c.b16 %v2004, %v1996
        %v2397 = vpack.c.b16 %v2005, %v1997
        %v2398 = vpack.c.b16 %v2006, %v1998
        %v2399 = vpack.c.b16 %v2007, %v1999
        %v2400 = vpack.c.b16 %v2008, %v2000
        %v2401 = vpack.c.b16 %v2009, %v2001
        %v2402 = vpack.c.b16 %v2010, %v2002
        %v2403 = vpack.c.b16 %v2019, %v2011
        %v2404 = vpack.c.b16 %v2020, %v2012
        %v2405 = vpack.c.b16 %v2021, %v2013
        %v2406 = vpack.c.b16 %v2022, %v2014
        %v2407 = vpack.c.b16 %v2023, %v2015
        %v2408 = vpack.c.b16 %v2024, %v2016
        %v2409 = vpack.c.b16 %v2025, %v2017
        %v2410 = vpack.c.b16 %v2026, %v2018
        %v2411 = vpack.c.b16 %v2035, %v2027
        %v2412 = vpack.c.b16 %v2036, %v2028
        %v2413 = vpack.c.b16 %v2037, %v2029
        %v2414 = vpack.c.b16 %v2038, %v2030
        %v2415 = vpack.c.b16 %v2039, %v2031
        %v2416 = vpack.c.b16 %v2040, %v2032
        %v2417 = vpack.c.b16 %v2041, %v2033
        %v2418 = vpack.c.b16 %v2042, %v2034
        %v2419 = vpack.c.b16 %v2051, %v2043
        %v2420 = vpack.c.b16 %v2052, %v2044
        %v2421 = vpack.c.b16 %v2053, %v2045
        %v2422 = vpack.c.b16 %v2054, %v2046
        %v2423 = vpack.c.b16 %v2055, %v2047
        %v2424 = vpack.c.b16 %v2056, %v2048
        %v2425 = vpack.c.b16 %v2057, %v2049
        %v2426 = vpack.c.b16 %v2058, %v2050
        %v2427 = vpack.c.b16 %v2067, %v2059
        %v2428 = vpack.c.b16 %v2068, %v2060
        %v2429 = vpack.c.b16 %v2069, %v2061
        %v2430 = vpack.c.b16 %v2070, %v2062
        %v2431 = vpack.c.b16 %v2071, %v2063
        %v2432 = vpack.c.b16 %v2072, %v2064
        %v2433 = vpack.c.b16 %v2073, %v2065
        %v2434 = vpack.c.b16 %v2074, %v2066
        %v2435 = vpack.c.b16 %v2083, %v2075
        %v2436 = vpack.c.b16 %v2084, %v2076
        %v2437 = vpack.c.b16 %v2085, %v2077
        %v2438 = vpack.c.b16 %v2086, %v2078
        %v2439 = vpack.c.b16 %v2087, %v2079
        %v2440 = vpack.c.b16 %v2088, %v2080
        %v2441 = vpack.c.b16 %v2089, %v2081
        %v2442 = vpack.c.b16 %v2090, %v2082
        %v2443 = vpack.c.b16 %v2099, %v2091
        %v2444 = vpack.c.b16 %v2100, %v2092
        %v2445 = vpack.c.b16 %v2101, %v2093
        %v2446 = vpack.c.b16 %v2102, %v2094
        %v2447 = vpack.c.b16 %v2103, %v2095
        %v2448 = vpack.c.b16 %v2104, %v2096
        %v2449 = vpack.c.b16 %v2105, %v2097
        %v2450 = vpack.c.b16 %v2106, %v2098
        %v2451 = vpack.c.b16 %v2115, %v2107
        %v2452 = vpack.c.b16 %v2116, %v2108
        %v2453 = vpack.c.b16 %v2117, %v2109
        %v2454 = vpack.c.b16 %v2118, %v2110
        %v2455 = vpack.c.b16 %v2119, %v2111
        %v2456 = vpack.c.b16 %v2120, %v2112
        %v2457 = vpack.c.b16 %v2121, %v2113
        %v2458 = vpack.c.b16 %v2122, %v2114
        %v2459 = vpack.c.b16 %v2131, %v2123
        %v2460 = vpack.c.b16 %v2132, %v2124
        %v2461 = vpack.c.b16 %v2133, %v2125
        %v2462 = vpack.c.b16 %v2134, %v2126
        %v2463 = vpack.c.b16 %v2135, %v2127
        %v2464 = vpack.c.b16 %v2136, %v2128
        %v2465 = vpack.c.b16 %v2137, %v2129
        %v2466 = vpack.c.b16 %v2138, %v2130
        %v2467 = vpack.c.b16 %v2147, %v2139
        %v2468 = vpack.c.b16 %v2148, %v2140
        %v2469 = vpack.c.b16 %v2149, %v2141
        %v2470 = vpack.c.b16 %v2150, %v2142
        %v2471 = vpack.c.b16 %v2151, %v2143
        %v2472 = vpack.c.b16 %v2152, %v2144
        %v2473 = vpack.c.b16 %v2153, %v2145
        %v2474 = vpack.c.b16 %v2154, %v2146
        %v2475 = vpack.c.b16 %v2163, %v2155
        %v2476 = vpack.c.b16 %v2164, %v2156
        %v2477 = vpack.c.b16 %v2165, %v2157
        %v2478 = vpack.c.b16 %v2166, %v2158
        %v2479 = vpack.c.b16 %v2167, %v2159
        %v2480 = vpack.c.b16 %v2168, %v2160
        %v2481 = vpack.c.b16 %v2169, %v2161
        %v2482 = vpack.c.b16 %v2170, %v2162
        %v2483 = vpack.c.b16 %v2179, %v2171
        %v2484 = vpack.c.b16 %v2180, %v2172
        %v2485 = vpack.c.b16 %v2181, %v2173
        %v2486 = vpack.c.b16 %v2182, %v2174
        %v2487 = vpack.c.b16 %v2183, %v2175
        %v2488 = vpack.c.b16 %v2184, %v2176
        %v2489 = vpack.c.b16 %v2185, %v2177
        %v2490 = vpack.c.b16 %v2186, %v2178
        %v2491 = vpack.c.b16 %v2195, %v2187
        %v2492 = vpack.c.b16 %v2196, %v2188
        %v2493 = vpack.c.b16 %v2197, %v2189
        %v2494 = vpack.c.b16 %v2198, %v2190
        %v2495 = vpack.c.b16 %v2199, %v2191
        %v2496 = vpack.c.b16 %v2200, %v2192
        %v2497 = vpack.c.b16 %v2201, %v2193
        %v2498 = vpack.c.b16 %v2202, %v2194
        %v2499 = vpack.c.b16 %v2211, %v2203
        %v2500 = vpack.c.b16 %v2212, %v2204
        %v2501 = vpack.c.b16 %v2213, %v2205
        %v2502 = vpack.c.b16 %v2214, %v2206
        %v2503 = vpack.c.b16 %v2215, %v2207
        %v2504 = vpack.c.b16 %v2216, %v2208
        %v2505 = vpack.c.b16 %v2217, %v2209
        %v2506 = vpack.c.b16 %v2218, %v2210
        %v2507 = vpack.c.b16 %v2227, %v2219
        %v2508 = vpack.c.b16 %v2228, %v2220
        %v2509 = vpack.c.b16 %v2229, %v2221
        %v2510 = vpack.c.b16 %v2230, %v2222
        %v2511 = vpack.c.b16 %v2231, %v2223
        %v2512 = vpack.c.b16 %v2232, %v2224
        %v2513 = vpack.c.b16 %v2233, %v2225
        %v2514 = vpack.c.b16 %v2234, %v2226
        %v2515 = vpack.c.b16 %v2243, %v2235
        %v2516 = vpack.c.b16 %v2244, %v2236
        %v2517 = vpack.c.b16 %v2245, %v2237
        %v2518 = vpack.c.b16 %v2246, %v2238
        %v2519 = vpack.c.b16 %v2247, %v2239
        %v2520 = vpack.c.b16 %v2248, %v2240
        %v2521 = vpack.c.b16 %v2249, %v2241
        %v2522 = vpack.c.b16 %v2250, %v2242
        %v2523 = vpack.c.b16 %v2259, %v2251
        %v2524 = vpack.c.b16 %v2260, %v2252
        %v2525 = vpack.c.b16 %v2261, %v2253
        %v2526 = vpack.c.b16 %v2262, %v2254
        %v2527 = vpack.c.b16 %v2263, %v2255
        %v2528 = vpack.c.b16 %v2264, %v2256
        %v2529 = vpack.c.b16 %v2265, %v2257
        %v2530 = vpack.c.b16 %v2266, %v2258
        %v2531 = vpack.c.b16 %v2275, %v2267
        %v2532 = vpack.c.b16 %v2276, %v2268
        %v2533 = vpack.c.b16 %v2277, %v2269
        %v2534 = vpack.c.b16 %v2278, %v2270
        %v2535 = vpack.c.b16 %v2279, %v2271
        %v2536 = vpack.c.b16 %v2280, %v2272
        %v2537 = vpack.c.b16 %v2281, %v2273
        %v2538 = vpack.c.b16 %v2282, %v2274
        %2795 = vmatprep.subr.bf16.mxu0 %v2340
        %2796 = vmatpush1.bf16.msra.mxu0 %v2339
        %2797 = vmatprep.subr.bf16.mxu0 %v2332
        %2798 = vmatpush1.bf16.msra.mxu0 %v2331
        %2799 = vmatprep.subr.bf16.mxu0 %v2324
        %2800 = vmatpush1.bf16.msra.mxu0 %v2323
        %2801 = vmatprep.subr.bf16.mxu0 %v2316
        %2802 = vmatpush1.bf16.msra.mxu0 %v2315
        %2803 = vmatprep.subr.bf16.mxu0 %v2308
        %2804 = vmatpush1.bf16.msra.mxu0 %v2307
        %2805 = vmatprep.subr.bf16.mxu0 %v2300
        %2806 = vmatpush1.bf16.msra.mxu0 %v2299
        %2807 = vmatprep.subr.bf16.mxu0 %v2292
        %2808 = vmatpush1.bf16.msra.mxu0 %v2291
        %2809 = vmatprep.subr.bf16.mxu0 %v2284
        %2810 = vmatpush1.bf16.msra.mxu0 %v2283
        %2811 = vmatprep.subr.bf16.mxu0 %v2404
        %2812 = vmatpush2.bf16.msra.mxu0 %v2403
        %2813 = vmatprep.subr.bf16.mxu0 %v2396
        %2814 = vmatpush2.bf16.msra.mxu0 %v2395
        %2815 = vmatprep.subr.bf16.mxu0 %v2388
        %2816 = vmatpush2.bf16.msra.mxu0 %v2387
        %2817 = vmatprep.subr.bf16.mxu0 %v2380
        %2818 = vmatpush2.bf16.msra.mxu0 %v2379
        %2819 = vmatprep.subr.bf16.mxu0 %v2372
        %2820 = vmatpush2.bf16.msra.mxu0 %v2371
        %2821 = vmatprep.subr.bf16.mxu0 %v2364
        %2822 = vmatpush2.bf16.msra.mxu0 %v2363
        %2823 = vmatprep.subr.bf16.mxu0 %v2356
        %2824 = vmatpush2.bf16.msra.mxu0 %v2355
        %2825 = vmatprep.subr.bf16.mxu0 %v2348
        %2826 = vmatpush2.bf16.msra.mxu0 %v2347
        %2827 = vmatprep.mubr.bf16.mxu0 %v1210
        %2828 = vmatmul.mubr.bf16.gmra.mxu0 %v1209
        %v2829 = vpop.f32.mrf.mxu0
        %v2830 = vadd.f32 %v1478, %v2829
        %v2831 = vpop.f32.mrf.mxu0
        %v2832 = vadd.f32 %v1482, %v2831
        %v2833 = vpop.f32.mrf.mxu0
        %v2834 = vadd.f32 %v1478, %v2833
        %v2835 = vpop.f32.mrf.mxu0
        %v2836 = vadd.f32 %v1482, %v2835
        %2837 = vmatprep.mubr.bf16.mxu0 %v1214
        %2838 = vmatmul.mubr.bf16.gmra.mxu0 %v1213
        %v2839 = vpop.f32.mrf.mxu0
        %v2840 = vadd.f32 %v1478, %v2839
        %v2841 = vpop.f32.mrf.mxu0
        %v2842 = vadd.f32 %v1482, %v2841
        %v2843 = vpop.f32.mrf.mxu0
        %v2844 = vadd.f32 %v1478, %v2843
        %v2845 = vpop.f32.mrf.mxu0
        %v2846 = vadd.f32 %v1482, %v2845
        %2847 = vdwg.mxu0
        %2848 = vmatprep.subr.bf16.mxu0 %v2468
        %2849 = vmatpush1.bf16.msra.mxu0 %v2467
        %2850 = vmatprep.subr.bf16.mxu0 %v2460
        %2851 = vmatpush1.bf16.msra.mxu0 %v2459
        %2852 = vmatprep.subr.bf16.mxu0 %v2452
        %2853 = vmatpush1.bf16.msra.mxu0 %v2451
        %2854 = vmatprep.subr.bf16.mxu0 %v2444
        %2855 = vmatpush1.bf16.msra.mxu0 %v2443
        %2856 = vmatprep.subr.bf16.mxu0 %v2436
        %2857 = vmatpush1.bf16.msra.mxu0 %v2435
        %2858 = vmatprep.subr.bf16.mxu0 %v2428
        %2859 = vmatpush1.bf16.msra.mxu0 %v2427
        %2860 = vmatprep.subr.bf16.mxu0 %v2420
        %2861 = vmatpush1.bf16.msra.mxu0 %v2419
        %2862 = vmatprep.subr.bf16.mxu0 %v2412
        %2863 = vmatpush1.bf16.msra.mxu0 %v2411
        %2864 = vmatprep.subr.bf16.mxu0 %v2532
        %2865 = vmatpush2.bf16.msra.mxu0 %v2531
        %2866 = vmatprep.subr.bf16.mxu0 %v2524
        %2867 = vmatpush2.bf16.msra.mxu0 %v2523
        %2868 = vmatprep.subr.bf16.mxu0 %v2516
        %2869 = vmatpush2.bf16.msra.mxu0 %v2515
        %2870 = vmatprep.subr.bf16.mxu0 %v2508
        %2871 = vmatpush2.bf16.msra.mxu0 %v2507
        %2872 = vmatprep.subr.bf16.mxu0 %v2500
        %2873 = vmatpush2.bf16.msra.mxu0 %v2499
        %2874 = vmatprep.subr.bf16.mxu0 %v2492
        %2875 = vmatpush2.bf16.msra.mxu0 %v2491
        %2876 = vmatprep.subr.bf16.mxu0 %v2484
        %2877 = vmatpush2.bf16.msra.mxu0 %v2483
        %2878 = vmatprep.subr.bf16.mxu0 %v2476
        %2879 = vmatpush2.bf16.msra.mxu0 %v2475
        %2880 = vmatprep.mubr.bf16.mxu0 %v1212
        %2881 = vmatmul.mubr.bf16.gmra.mxu0 %v1211
        %v2882 = vpop.f32.mrf.mxu0
        %v2883 = vadd.f32 %v2830, %v2882
        %v2884 = vpop.f32.mrf.mxu0
        %v2885 = vadd.f32 %v2832, %v2884
        %v2886 = vpop.f32.mrf.mxu0
        %v2887 = vadd.f32 %v2834, %v2886
        %v2888 = vpop.f32.mrf.mxu0
        %v2889 = vadd.f32 %v2836, %v2888
        %2890 = vmatprep.mubr.bf16.mxu0 %v1216
        %2891 = vmatmul.mubr.bf16.gmra.mxu0 %v1215
        %v2892 = vpop.f32.mrf.mxu0
        %v2893 = vadd.f32 %v2840, %v2892
        %v2894 = vpop.f32.mrf.mxu0
        %v2895 = vadd.f32 %v2842, %v2894
        %v2896 = vpop.f32.mrf.mxu0
        %v2897 = vadd.f32 %v2844, %v2896
        %v2898 = vpop.f32.mrf.mxu0
        %v2899 = vadd.f32 %v2846, %v2898
        %2900 = vdwg.mxu0
        %2901 = vmatprep.subr.bf16.mxu0 %v2342
        %2902 = vmatpush1.bf16.msra.mxu0 %v2341
        %2903 = vmatprep.subr.bf16.mxu0 %v2334
        %2904 = vmatpush1.bf16.msra.mxu0 %v2333
        %2905 = vmatprep.subr.bf16.mxu0 %v2326
        %2906 = vmatpush1.bf16.msra.mxu0 %v2325
        %2907 = vmatprep.subr.bf16.mxu0 %v2318
        %2908 = vmatpush1.bf16.msra.mxu0 %v2317
        %2909 = vmatprep.subr.bf16.mxu0 %v2310
        %2910 = vmatpush1.bf16.msra.mxu0 %v2309
        %2911 = vmatprep.subr.bf16.mxu0 %v2302
        %2912 = vmatpush1.bf16.msra.mxu0 %v2301
        %2913 = vmatprep.subr.bf16.mxu0 %v2294
        %2914 = vmatpush1.bf16.msra.mxu0 %v2293
        %2915 = vmatprep.subr.bf16.mxu0 %v2286
        %2916 = vmatpush1.bf16.msra.mxu0 %v2285
        %2917 = vmatprep.subr.bf16.mxu0 %v2406
        %2918 = vmatpush2.bf16.msra.mxu0 %v2405
        %2919 = vmatprep.subr.bf16.mxu0 %v2398
        %2920 = vmatpush2.bf16.msra.mxu0 %v2397
        %2921 = vmatprep.subr.bf16.mxu0 %v2390
        %2922 = vmatpush2.bf16.msra.mxu0 %v2389
        %2923 = vmatprep.subr.bf16.mxu0 %v2382
        %2924 = vmatpush2.bf16.msra.mxu0 %v2381
        %2925 = vmatprep.subr.bf16.mxu0 %v2374
        %2926 = vmatpush2.bf16.msra.mxu0 %v2373
        %2927 = vmatprep.subr.bf16.mxu0 %v2366
        %2928 = vmatpush2.bf16.msra.mxu0 %v2365
        %2929 = vmatprep.subr.bf16.mxu0 %v2358
        %2930 = vmatpush2.bf16.msra.mxu0 %v2357
        %2931 = vmatprep.subr.bf16.mxu0 %v2350
        %2932 = vmatpush2.bf16.msra.mxu0 %v2349
        %2933 = vmatprep.mubr.bf16.mxu0 %v1210
        %2934 = vmatmul.mubr.bf16.gmra.mxu0 %v1209
        %v2935 = vpop.f32.mrf.mxu0
        %v2936 = vadd.f32 %v1486, %v2935
        %v2937 = vpop.f32.mrf.mxu0
        %v2938 = vadd.f32 %v1490, %v2937
        %v2939 = vpop.f32.mrf.mxu0
        %v2940 = vadd.f32 %v1486, %v2939
        %v2941 = vpop.f32.mrf.mxu0
        %v2942 = vadd.f32 %v1490, %v2941
        %2943 = vmatprep.mubr.bf16.mxu0 %v1214
        %2944 = vmatmul.mubr.bf16.gmra.mxu0 %v1213
        %v2945 = vpop.f32.mrf.mxu0
        %v2946 = vadd.f32 %v1486, %v2945
        %v2947 = vpop.f32.mrf.mxu0
        %v2948 = vadd.f32 %v1490, %v2947
        %v2949 = vpop.f32.mrf.mxu0
        %v2950 = vadd.f32 %v1486, %v2949
        %v2951 = vpop.f32.mrf.mxu0
        %v2952 = vadd.f32 %v1490, %v2951
        %2953 = vdwg.mxu0
        %2954 = vmatprep.subr.bf16.mxu0 %v2470
        %2955 = vmatpush1.bf16.msra.mxu0 %v2469
        %2956 = vmatprep.subr.bf16.mxu0 %v2462
        %2957 = vmatpush1.bf16.msra.mxu0 %v2461
        %2958 = vmatprep.subr.bf16.mxu0 %v2454
        %2959 = vmatpush1.bf16.msra.mxu0 %v2453
        %2960 = vmatprep.subr.bf16.mxu0 %v2446
        %2961 = vmatpush1.bf16.msra.mxu0 %v2445
        %2962 = vmatprep.subr.bf16.mxu0 %v2438
        %2963 = vmatpush1.bf16.msra.mxu0 %v2437
        %2964 = vmatprep.subr.bf16.mxu0 %v2430
        %2965 = vmatpush1.bf16.msra.mxu0 %v2429
        %2966 = vmatprep.subr.bf16.mxu0 %v2422
        %2967 = vmatpush1.bf16.msra.mxu0 %v2421
        %2968 = vmatprep.subr.bf16.mxu0 %v2414
        %2969 = vmatpush1.bf16.msra.mxu0 %v2413
        %2970 = vmatprep.subr.bf16.mxu0 %v2534
        %2971 = vmatpush2.bf16.msra.mxu0 %v2533
        %2972 = vmatprep.subr.bf16.mxu0 %v2526
        %2973 = vmatpush2.bf16.msra.mxu0 %v2525
        %2974 = vmatprep.subr.bf16.mxu0 %v2518
        %2975 = vmatpush2.bf16.msra.mxu0 %v2517
        %2976 = vmatprep.subr.bf16.mxu0 %v2510
        %2977 = vmatpush2.bf16.msra.mxu0 %v2509
        %2978 = vmatprep.subr.bf16.mxu0 %v2502
        %2979 = vmatpush2.bf16.msra.mxu0 %v2501
        %2980 = vmatprep.subr.bf16.mxu0 %v2494
        %2981 = vmatpush2.bf16.msra.mxu0 %v2493
        %2982 = vmatprep.subr.bf16.mxu0 %v2486
        %2983 = vmatpush2.bf16.msra.mxu0 %v2485
        %2984 = vmatprep.subr.bf16.mxu0 %v2478
        %2985 = vmatpush2.bf16.msra.mxu0 %v2477
        %2986 = vmatprep.mubr.bf16.mxu0 %v1212
        %2987 = vmatmul.mubr.bf16.gmra.mxu0 %v1211
        %v2988 = vpop.f32.mrf.mxu0
        %v2989 = vadd.f32 %v2936, %v2988
        %v2990 = vpop.f32.mrf.mxu0
        %v2991 = vadd.f32 %v2938, %v2990
        %v2992 = vpop.f32.mrf.mxu0
        %v2993 = vadd.f32 %v2940, %v2992
        %v2994 = vpop.f32.mrf.mxu0
        %v2995 = vadd.f32 %v2942, %v2994
        %2996 = vmatprep.mubr.bf16.mxu0 %v1216
        %2997 = vmatmul.mubr.bf16.gmra.mxu0 %v1215
        %v2998 = vpop.f32.mrf.mxu0
        %v2999 = vadd.f32 %v2946, %v2998
        %v3000 = vpop.f32.mrf.mxu0
        %v3001 = vadd.f32 %v2948, %v3000
        %v3002 = vpop.f32.mrf.mxu0
        %v3003 = vadd.f32 %v2950, %v3002
        %v3004 = vpop.f32.mrf.mxu0
        %v3005 = vadd.f32 %v2952, %v3004
        %3006 = vdwg.mxu0
        %3007 = vmatprep.subr.bf16.mxu0 %v2344
        %3008 = vmatpush1.bf16.msra.mxu0 %v2343
        %3009 = vmatprep.subr.bf16.mxu0 %v2336
        %3010 = vmatpush1.bf16.msra.mxu0 %v2335
        %3011 = vmatprep.subr.bf16.mxu0 %v2328
        %3012 = vmatpush1.bf16.msra.mxu0 %v2327
        %3013 = vmatprep.subr.bf16.mxu0 %v2320
        %3014 = vmatpush1.bf16.msra.mxu0 %v2319
        %3015 = vmatprep.subr.bf16.mxu0 %v2312
        %3016 = vmatpush1.bf16.msra.mxu0 %v2311
        %3017 = vmatprep.subr.bf16.mxu0 %v2304
        %3018 = vmatpush1.bf16.msra.mxu0 %v2303
        %3019 = vmatprep.subr.bf16.mxu0 %v2296
        %3020 = vmatpush1.bf16.msra.mxu0 %v2295
        %3021 = vmatprep.subr.bf16.mxu0 %v2288
        %3022 = vmatpush1.bf16.msra.mxu0 %v2287
        %3023 = vmatprep.subr.bf16.mxu0 %v2408
        %3024 = vmatpush2.bf16.msra.mxu0 %v2407
        %3025 = vmatprep.subr.bf16.mxu0 %v2400
        %3026 = vmatpush2.bf16.msra.mxu0 %v2399
        %3027 = vmatprep.subr.bf16.mxu0 %v2392
        %3028 = vmatpush2.bf16.msra.mxu0 %v2391
        %3029 = vmatprep.subr.bf16.mxu0 %v2384
        %3030 = vmatpush2.bf16.msra.mxu0 %v2383
        %3031 = vmatprep.subr.bf16.mxu0 %v2376
        %3032 = vmatpush2.bf16.msra.mxu0 %v2375
        %3033 = vmatprep.subr.bf16.mxu0 %v2368
        %3034 = vmatpush2.bf16.msra.mxu0 %v2367
        %3035 = vmatprep.subr.bf16.mxu0 %v2360
        %3036 = vmatpush2.bf16.msra.mxu0 %v2359
        %3037 = vmatprep.subr.bf16.mxu0 %v2352
        %3038 = vmatpush2.bf16.msra.mxu0 %v2351
        %3039 = vmatprep.mubr.bf16.mxu0 %v1210
        %3040 = vmatmul.mubr.bf16.gmra.mxu0 %v1209
        %v3041 = vpop.f32.mrf.mxu0
        %v3042 = vadd.f32 %v1494, %v3041
        %v3043 = vpop.f32.mrf.mxu0
        %v3044 = vadd.f32 %v1498, %v3043
        %v3045 = vpop.f32.mrf.mxu0
        %v3046 = vadd.f32 %v1494, %v3045
        %v3047 = vpop.f32.mrf.mxu0
        %v3048 = vadd.f32 %v1498, %v3047
        %3049 = vmatprep.mubr.bf16.mxu0 %v1214
        %3050 = vmatmul.mubr.bf16.gmra.mxu0 %v1213
        %v3051 = vpop.f32.mrf.mxu0
        %v3052 = vadd.f32 %v1494, %v3051
        %v3053 = vpop.f32.mrf.mxu0
        %v3054 = vadd.f32 %v1498, %v3053
        %v3055 = vpop.f32.mrf.mxu0
        %v3056 = vadd.f32 %v1494, %v3055
        %v3057 = vpop.f32.mrf.mxu0
        %v3058 = vadd.f32 %v1498, %v3057
        %3059 = vdwg.mxu0
        %3060 = vmatprep.subr.bf16.mxu0 %v2472
        %3061 = vmatpush1.bf16.msra.mxu0 %v2471
        %3062 = vmatprep.subr.bf16.mxu0 %v2464
        %3063 = vmatpush1.bf16.msra.mxu0 %v2463
        %3064 = vmatprep.subr.bf16.mxu0 %v2456
        %3065 = vmatpush1.bf16.msra.mxu0 %v2455
        %3066 = vmatprep.subr.bf16.mxu0 %v2448
        %3067 = vmatpush1.bf16.msra.mxu0 %v2447
        %3068 = vmatprep.subr.bf16.mxu0 %v2440
        %3069 = vmatpush1.bf16.msra.mxu0 %v2439
        %3070 = vmatprep.subr.bf16.mxu0 %v2432
        %3071 = vmatpush1.bf16.msra.mxu0 %v2431
        %3072 = vmatprep.subr.bf16.mxu0 %v2424
        %3073 = vmatpush1.bf16.msra.mxu0 %v2423
        %3074 = vmatprep.subr.bf16.mxu0 %v2416
        %3075 = vmatpush1.bf16.msra.mxu0 %v2415
        %3076 = vmatprep.subr.bf16.mxu0 %v2536
        %3077 = vmatpush2.bf16.msra.mxu0 %v2535
        %3078 = vmatprep.subr.bf16.mxu0 %v2528
        %3079 = vmatpush2.bf16.msra.mxu0 %v2527
        %3080 = vmatprep.subr.bf16.mxu0 %v2520
        %3081 = vmatpush2.bf16.msra.mxu0 %v2519
        %3082 = vmatprep.subr.bf16.mxu0 %v2512
        %3083 = vmatpush2.bf16.msra.mxu0 %v2511
        %3084 = vmatprep.subr.bf16.mxu0 %v2504
        %3085 = vmatpush2.bf16.msra.mxu0 %v2503
        %3086 = vmatprep.subr.bf16.mxu0 %v2496
        %3087 = vmatpush2.bf16.msra.mxu0 %v2495
        %3088 = vmatprep.subr.bf16.mxu0 %v2488
        %3089 = vmatpush2.bf16.msra.mxu0 %v2487
        %3090 = vmatprep.subr.bf16.mxu0 %v2480
        %3091 = vmatpush2.bf16.msra.mxu0 %v2479
        %3092 = vmatprep.mubr.bf16.mxu0 %v1212
        %3093 = vmatmul.mubr.bf16.gmra.mxu0 %v1211
        %v3094 = vpop.f32.mrf.mxu0
        %v3095 = vadd.f32 %v3042, %v3094
        %v3096 = vpop.f32.mrf.mxu0
        %v3097 = vadd.f32 %v3044, %v3096
        %v3098 = vpop.f32.mrf.mxu0
        %v3099 = vadd.f32 %v3046, %v3098
        %v3100 = vpop.f32.mrf.mxu0
        %v3101 = vadd.f32 %v3048, %v3100
        %3102 = vmatprep.mubr.bf16.mxu0 %v1216
        %3103 = vmatmul.mubr.bf16.gmra.mxu0 %v1215
        %v3104 = vpop.f32.mrf.mxu0
        %v3105 = vadd.f32 %v3052, %v3104
        %v3106 = vpop.f32.mrf.mxu0
        %v3107 = vadd.f32 %v3054, %v3106
        %v3108 = vpop.f32.mrf.mxu0
        %v3109 = vadd.f32 %v3056, %v3108
        %v3110 = vpop.f32.mrf.mxu0
        %v3111 = vadd.f32 %v3058, %v3110
        %3112 = vdwg.mxu0
        %3113 = vmatprep.subr.bf16.mxu0 %v2346
        %3114 = vmatpush1.bf16.msra.mxu0 %v2345
        %3115 = vmatprep.subr.bf16.mxu0 %v2338
        %3116 = vmatpush1.bf16.msra.mxu0 %v2337
        %3117 = vmatprep.subr.bf16.mxu0 %v2330
        %3118 = vmatpush1.bf16.msra.mxu0 %v2329
        %3119 = vmatprep.subr.bf16.mxu0 %v2322
        %3120 = vmatpush1.bf16.msra.mxu0 %v2321
        %3121 = vmatprep.subr.bf16.mxu0 %v2314
        %3122 = vmatpush1.bf16.msra.mxu0 %v2313
        %3123 = vmatprep.subr.bf16.mxu0 %v2306
        %3124 = vmatpush1.bf16.msra.mxu0 %v2305
        %3125 = vmatprep.subr.bf16.mxu0 %v2298
        %3126 = vmatpush1.bf16.msra.mxu0 %v2297
        %3127 = vmatprep.subr.bf16.mxu0 %v2290
        %3128 = vmatpush1.bf16.msra.mxu0 %v2289
        %3129 = vmatprep.subr.bf16.mxu0 %v2410
        %3130 = vmatpush2.bf16.msra.mxu0 %v2409
        %3131 = vmatprep.subr.bf16.mxu0 %v2402
        %3132 = vmatpush2.bf16.msra.mxu0 %v2401
        %3133 = vmatprep.subr.bf16.mxu0 %v2394
        %3134 = vmatpush2.bf16.msra.mxu0 %v2393
        %3135 = vmatprep.subr.bf16.mxu0 %v2386
        %3136 = vmatpush2.bf16.msra.mxu0 %v2385
        %3137 = vmatprep.subr.bf16.mxu0 %v2378
        %3138 = vmatpush2.bf16.msra.mxu0 %v2377
        %3139 = vmatprep.subr.bf16.mxu0 %v2370
        %3140 = vmatpush2.bf16.msra.mxu0 %v2369
        %3141 = vmatprep.subr.bf16.mxu0 %v2362
        %3142 = vmatpush2.bf16.msra.mxu0 %v2361
        %3143 = vmatprep.subr.bf16.mxu0 %v2354
        %3144 = vmatpush2.bf16.msra.mxu0 %v2353
        %3145 = vmatprep.mubr.bf16.mxu0 %v1210
        %3146 = vmatmul.mubr.bf16.gmra.mxu0 %v1209
        %v3147 = vpop.f32.mrf.mxu0
        %v3148 = vadd.f32 %v1502, %v3147
        %v3149 = vpop.f32.mrf.mxu0
        %v3150 = vadd.f32 %v1506, %v3149
        %v3151 = vpop.f32.mrf.mxu0
        %v3152 = vadd.f32 %v1502, %v3151
        %v3153 = vpop.f32.mrf.mxu0
        %v3154 = vadd.f32 %v1506, %v3153
        %3155 = vmatprep.mubr.bf16.mxu0 %v1214
        %3156 = vmatmul.mubr.bf16.gmra.mxu0 %v1213
        %v3157 = vpop.f32.mrf.mxu0
        %v3158 = vadd.f32 %v1502, %v3157
        %v3159 = vpop.f32.mrf.mxu0
        %v3160 = vadd.f32 %v1506, %v3159
        %v3161 = vpop.f32.mrf.mxu0
        %v3162 = vadd.f32 %v1502, %v3161
        %v3163 = vpop.f32.mrf.mxu0
        %v3164 = vadd.f32 %v1506, %v3163
        %3165 = vdwg.mxu0
        %3166 = vmatprep.subr.bf16.mxu0 %v2474
        %3167 = vmatpush1.bf16.msra.mxu0 %v2473
        %3168 = vmatprep.subr.bf16.mxu0 %v2466
        %3169 = vmatpush1.bf16.msra.mxu0 %v2465
        %3170 = vmatprep.subr.bf16.mxu0 %v2458
        %3171 = vmatpush1.bf16.msra.mxu0 %v2457
        %3172 = vmatprep.subr.bf16.mxu0 %v2450
        %3173 = vmatpush1.bf16.msra.mxu0 %v2449
        %3174 = vmatprep.subr.bf16.mxu0 %v2442
        %3175 = vmatpush1.bf16.msra.mxu0 %v2441
        %3176 = vmatprep.subr.bf16.mxu0 %v2434
        %3177 = vmatpush1.bf16.msra.mxu0 %v2433
        %3178 = vmatprep.subr.bf16.mxu0 %v2426
        %3179 = vmatpush1.bf16.msra.mxu0 %v2425
        %3180 = vmatprep.subr.bf16.mxu0 %v2418
        %3181 = vmatpush1.bf16.msra.mxu0 %v2417
        %3182 = vmatprep.subr.bf16.mxu0 %v2538
        %3183 = vmatpush2.bf16.msra.mxu0 %v2537
        %3184 = vmatprep.subr.bf16.mxu0 %v2530
        %3185 = vmatpush2.bf16.msra.mxu0 %v2529
        %3186 = vmatprep.subr.bf16.mxu0 %v2522
        %3187 = vmatpush2.bf16.msra.mxu0 %v2521
        %3188 = vmatprep.subr.bf16.mxu0 %v2514
        %3189 = vmatpush2.bf16.msra.mxu0 %v2513
        %3190 = vmatprep.subr.bf16.mxu0 %v2506
        %3191 = vmatpush2.bf16.msra.mxu0 %v2505
        %3192 = vmatprep.subr.bf16.mxu0 %v2498
        %3193 = vmatpush2.bf16.msra.mxu0 %v2497
        %3194 = vmatprep.subr.bf16.mxu0 %v2490
        %3195 = vmatpush2.bf16.msra.mxu0 %v2489
        %3196 = vmatprep.subr.bf16.mxu0 %v2482
        %3197 = vmatpush2.bf16.msra.mxu0 %v2481
        %3198 = vmatprep.mubr.bf16.mxu0 %v1212
        %3199 = vmatmul.mubr.bf16.gmra.mxu0 %v1211
        %v3200 = vpop.f32.mrf.mxu0
        %v3201 = vadd.f32 %v3148, %v3200
        %v3202 = vpop.f32.mrf.mxu0
        %v3203 = vadd.f32 %v3150, %v3202
        %v3204 = vpop.f32.mrf.mxu0
        %v3205 = vadd.f32 %v3152, %v3204
        %v3206 = vpop.f32.mrf.mxu0
        %v3207 = vadd.f32 %v3154, %v3206
        %3208 = vmatprep.mubr.bf16.mxu0 %v1216
        %3209 = vmatmul.mubr.bf16.gmra.mxu0 %v1215
        %v3210 = vpop.f32.mrf.mxu0
        %v3211 = vadd.f32 %v3158, %v3210
        %v3212 = vpop.f32.mrf.mxu0
        %v3213 = vadd.f32 %v3160, %v3212
        %v3214 = vpop.f32.mrf.mxu0
        %v3215 = vadd.f32 %v3162, %v3214
        %v3216 = vpop.f32.mrf.mxu0
        %v3217 = vadd.f32 %v3164, %v3216
        %3218 = vdwg.mxu0
        %vm3219 = vcmp.gt.f32.partialorder %v2883, 0.0
        %vm3220 = vcmp.gt.f32.partialorder %v2885, 0.0
        %vm3221 = vcmp.gt.f32.partialorder %v2989, 0.0
        %vm3222 = vcmp.gt.f32.partialorder %v2991, 0.0
        %vm3223 = vcmp.gt.f32.partialorder %v3095, 0.0
        %vm3224 = vcmp.gt.f32.partialorder %v3097, 0.0
        %vm3225 = vcmp.gt.f32.partialorder %v3201, 0.0
        %vm3226 = vcmp.gt.f32.partialorder %v3203, 0.0
        %vm3227 = vcmp.gt.f32.partialorder %v2887, 0.0
        %vm3228 = vcmp.gt.f32.partialorder %v2889, 0.0
        %vm3229 = vcmp.gt.f32.partialorder %v2993, 0.0
        %vm3230 = vcmp.gt.f32.partialorder %v2995, 0.0
        %vm3231 = vcmp.gt.f32.partialorder %v3099, 0.0
        %vm3232 = vcmp.gt.f32.partialorder %v3101, 0.0
        %vm3233 = vcmp.gt.f32.partialorder %v3205, 0.0
        %vm3234 = vcmp.gt.f32.partialorder %v3207, 0.0
        %vm3235 = vcmp.gt.f32.partialorder %v2893, 0.0
        %vm3236 = vcmp.gt.f32.partialorder %v2895, 0.0
        %vm3237 = vcmp.gt.f32.partialorder %v2999, 0.0
        %vm3238 = vcmp.gt.f32.partialorder %v3001, 0.0
        %vm3239 = vcmp.gt.f32.partialorder %v3105, 0.0
        %vm3240 = vcmp.gt.f32.partialorder %v3107, 0.0
        %vm3241 = vcmp.gt.f32.partialorder %v3211, 0.0
        %vm3242 = vcmp.gt.f32.partialorder %v3213, 0.0
        %vm3243 = vcmp.gt.f32.partialorder %v2897, 0.0
        %vm3244 = vcmp.gt.f32.partialorder %v2899, 0.0
        %vm3245 = vcmp.gt.f32.partialorder %v3003, 0.0
        %vm3246 = vcmp.gt.f32.partialorder %v3005, 0.0
        %vm3247 = vcmp.gt.f32.partialorder %v3109, 0.0
        %vm3248 = vcmp.gt.f32.partialorder %v3111, 0.0
        %vm3249 = vcmp.gt.f32.partialorder %v3215, 0.0
        %vm3250 = vcmp.gt.f32.partialorder %v3217, 0.0
        %v3251 = vmul.f32 %v2883, 0.2
        %v3252 = vmul.f32 %v2885, 0.2
        %v3253 = vmul.f32 %v2989, 0.2
        %v3254 = vmul.f32 %v2991, 0.2
        %v3255 = vmul.f32 %v3095, 0.2
        %v3256 = vmul.f32 %v3097, 0.2
        %v3257 = vmul.f32 %v3201, 0.2
        %v3258 = vmul.f32 %v3203, 0.2
        %v3259 = vmul.f32 %v2887, 0.2
        %v3260 = vmul.f32 %v2889, 0.2
        %v3261 = vmul.f32 %v2993, 0.2
        %v3262 = vmul.f32 %v2995, 0.2
        %v3263 = vmul.f32 %v3099, 0.2
        %v3264 = vmul.f32 %v3101, 0.2
        %v3265 = vmul.f32 %v3205, 0.2
        %v3266 = vmul.f32 %v3207, 0.2
        %v3267 = vmul.f32 %v2893, 0.2
        %v3268 = vmul.f32 %v2895, 0.2
        %v3269 = vmul.f32 %v2999, 0.2
        %v3270 = vmul.f32 %v3001, 0.2
        %v3271 = vmul.f32 %v3105, 0.2
        %v3272 = vmul.f32 %v3107, 0.2
        %v3273 = vmul.f32 %v3211, 0.2
        %v3274 = vmul.f32 %v3213, 0.2
        %v3275 = vmul.f32 %v2897, 0.2
        %v3276 = vmul.f32 %v2899, 0.2
        %v3277 = vmul.f32 %v3003, 0.2
        %v3278 = vmul.f32 %v3005, 0.2
        %v3279 = vmul.f32 %v3109, 0.2
        %v3280 = vmul.f32 %v3111, 0.2
        %v3281 = vmul.f32 %v3215, 0.2
        %v3282 = vmul.f32 %v3217, 0.2
        %v3283 = vsel %vm3219, %v2883, %v3251
        %v3284 = vsel %vm3220, %v2885, %v3252
        %v3285 = vsel %vm3221, %v2989, %v3253
        %v3286 = vsel %vm3222, %v2991, %v3254
        %v3287 = vsel %vm3223, %v3095, %v3255
        %v3288 = vsel %vm3224, %v3097, %v3256
        %v3289 = vsel %vm3225, %v3201, %v3257
        %v3290 = vsel %vm3226, %v3203, %v3258
        %v3291 = vsel %vm3227, %v2887, %v3259
        %v3292 = vsel %vm3228, %v2889, %v3260
        %v3293 = vsel %vm3229, %v2993, %v3261
        %v3294 = vsel %vm3230, %v2995, %v3262
        %v3295 = vsel %vm3231, %v3099, %v3263
        %v3296 = vsel %vm3232, %v3101, %v3264
        %v3297 = vsel %vm3233, %v3205, %v3265
        %v3298 = vsel %vm3234, %v3207, %v3266
        %v3299 = vsel %vm3235, %v2893, %v3267
        %v3300 = vsel %vm3236, %v2895, %v3268
        %v3301 = vsel %vm3237, %v2999, %v3269
        %v3302 = vsel %vm3238, %v3001, %v3270
        %v3303 = vsel %vm3239, %v3105, %v3271
        %v3304 = vsel %vm3240, %v3107, %v3272
        %v3305 = vsel %vm3241, %v3211, %v3273
        %v3306 = vsel %vm3242, %v3213, %v3274
        %v3307 = vsel %vm3243, %v2897, %v3275
        %v3308 = vsel %vm3244, %v2899, %v3276
        %v3309 = vsel %vm3245, %v3003, %v3277
        %v3310 = vsel %vm3246, %v3005, %v3278
        %v3311 = vsel %vm3247, %v3109, %v3279
        %v3312 = vsel %vm3248, %v3111, %v3280
        %v3313 = vsel %vm3249, %v3215, %v3281
        %v3314 = vsel %vm3250, %v3217, %v3282
        %v3315 = vpack.c.bf16 %v3291, %v3283
        %v3316 = vpack.c.bf16 %v3292, %v3284
        %v3317 = vpack.c.bf16 %v3293, %v3285
        %v3318 = vpack.c.bf16 %v3294, %v3286
        %v3319 = vpack.c.bf16 %v3295, %v3287
        %v3320 = vpack.c.bf16 %v3296, %v3288
        %v3321 = vpack.c.bf16 %v3297, %v3289
        %v3322 = vpack.c.bf16 %v3298, %v3290
        %v3323 = vpack.c.bf16 %v3307, %v3299
        %v3324 = vpack.c.bf16 %v3308, %v3300
        %v3325 = vpack.c.bf16 %v3309, %v3301
        %v3326 = vpack.c.bf16 %v3310, %v3302
        %v3327 = vpack.c.bf16 %v3311, %v3303
        %v3328 = vpack.c.bf16 %v3312, %v3304
        %v3329 = vpack.c.bf16 %v3313, %v3305
        %v3330 = vpack.c.bf16 %v3314, %v3306
        %v3331 = vld [vmem:[#allocation13] sm:$0xff]
        %v3332 = vld [vmem:[#allocation13 + $0x8] sm:$0xff]
        %v3333 = vld [vmem:[#allocation13 + $0x10] sm:$0xff]
        %v3334 = vld [vmem:[#allocation13 + $0x18] sm:$0xf]
        %v3335 = vld [vmem:[#allocation13 + $0x1c] sm:$0xff]
        %v3336 = vld [vmem:[#allocation13 + $0x24] sm:$0xff]
        %v3337 = vld [vmem:[#allocation13 + $0x2c] sm:$0xff]
        %v3338 = vld [vmem:[#allocation13 + $0x34] sm:$0xf]
        %v3339 = vld [vmem:[#allocation13 + $0x38] sm:$0xff]
        %v3340 = vld [vmem:[#allocation13 + $0x40] sm:$0xff]
        %v3341 = vld [vmem:[#allocation13 + $0x48] sm:$0xff]
        %v3342 = vld [vmem:[#allocation13 + $0x50] sm:$0xf]
        %v3343 = vld [vmem:[#allocation13 + $0x54] sm:$0xff]
        %v3344 = vld [vmem:[#allocation13 + $0x5c] sm:$0xff]
        %v3345 = vld [vmem:[#allocation13 + $0x64] sm:$0xff]
        %v3346 = vld [vmem:[#allocation13 + $0x6c] sm:$0xf]
        %v3347 = vld [vmem:[#allocation13 + $0x70] sm:$0xff]
        %v3348 = vld [vmem:[#allocation13 + $0x78] sm:$0xff]
        %v3349 = vld [vmem:[#allocation13 + $0x80] sm:$0xff]
        %v3350 = vld [vmem:[#allocation13 + $0x88] sm:$0xf]
        %v3351 = vld [vmem:[#allocation13 + $0x8c] sm:$0xff]
        %v3352 = vld [vmem:[#allocation13 + $0x94] sm:$0xff]
        %v3353 = vld [vmem:[#allocation13 + $0x9c] sm:$0xff]
        %v3354 = vld [vmem:[#allocation13 + $0xa4] sm:$0xf]
        %v3355 = vld [vmem:[#allocation13 + $0xa8] sm:$0xff]
        %v3356 = vld [vmem:[#allocation13 + $0xb0] sm:$0xff]
        %v3357 = vld [vmem:[#allocation13 + $0xb8] sm:$0xff]
        %v3358 = vld [vmem:[#allocation13 + $0xc0] sm:$0xf]
        %v3359 = vld [vmem:[#allocation13 + $0xc4] sm:$0xff]
        %v3360 = vld [vmem:[#allocation13 + $0xcc] sm:$0xff]
        %v3361 = vld [vmem:[#allocation13 + $0xd4] sm:$0xff]
        %v3362 = vld [vmem:[#allocation13 + $0xdc] sm:$0xf]
        %v3363 = vld [vmem:[#allocation13 + $0xe0] sm:$0xff]
        %v3364 = vld [vmem:[#allocation13 + $0xe8] sm:$0xff]
        %v3365 = vld [vmem:[#allocation13 + $0xf0] sm:$0xff]
        %v3366 = vld [vmem:[#allocation13 + $0xf8] sm:$0xf]
        %v3367 = vld [vmem:[#allocation13 + $0xfc] sm:$0xff]
        %v3368 = vld [vmem:[#allocation13 + $0x104] sm:$0xff]
        %v3369 = vld [vmem:[#allocation13 + $0x10c] sm:$0xff]
        %v3370 = vld [vmem:[#allocation13 + $0x114] sm:$0xf]
        %v3371 = vld [vmem:[#allocation13 + $0x118] sm:$0xff]
        %v3372 = vld [vmem:[#allocation13 + $0x120] sm:$0xff]
        %v3373 = vld [vmem:[#allocation13 + $0x128] sm:$0xff]
        %v3374 = vld [vmem:[#allocation13 + $0x130] sm:$0xf]
        %v3375 = vld [vmem:[#allocation13 + $0x134] sm:$0xff]
        %v3376 = vld [vmem:[#allocation13 + $0x13c] sm:$0xff]
        %v3377 = vld [vmem:[#allocation13 + $0x144] sm:$0xff]
        %v3378 = vld [vmem:[#allocation13 + $0x14c] sm:$0xf]
        %v3379 = vld [vmem:[#allocation13 + $0x150] sm:$0xff]
        %v3380 = vld [vmem:[#allocation13 + $0x158] sm:$0xff]
        %v3381 = vld [vmem:[#allocation13 + $0x160] sm:$0xff]
        %v3382 = vld [vmem:[#allocation13 + $0x168] sm:$0xf]
        %v3383 = vld [vmem:[#allocation13 + $0x16c] sm:$0xff]
        %v3384 = vld [vmem:[#allocation13 + $0x174] sm:$0xff]
        %v3385 = vld [vmem:[#allocation13 + $0x17c] sm:$0xff]
        %v3386 = vld [vmem:[#allocation13 + $0x184] sm:$0xf]
        %v3387 = vld [vmem:[#allocation13 + $0x188] sm:$0xff]
        %v3388 = vld [vmem:[#allocation13 + $0x190] sm:$0xff]
        %v3389 = vld [vmem:[#allocation13 + $0x198] sm:$0xff]
        %v3390 = vld [vmem:[#allocation13 + $0x1a0] sm:$0xf]
        %v3391 = vld [vmem:[#allocation13 + $0x1a4] sm:$0xff]
        %v3392 = vld [vmem:[#allocation13 + $0x1ac] sm:$0xff]
        %v3393 = vld [vmem:[#allocation13 + $0x1b4] sm:$0xff]
        %v3394 = vld [vmem:[#allocation13 + $0x1bc] sm:$0xf]
        %v3395 = vld [vmem:[#allocation13 + $0x1c0] sm:$0xff]
        %v3396 = vld [vmem:[#allocation13 + $0x1c8] sm:$0xff]
        %v3397 = vld [vmem:[#allocation13 + $0x1d0] sm:$0xff]
        %v3398 = vld [vmem:[#allocation13 + $0x1d8] sm:$0xf]
        %v3399 = vld [vmem:[#allocation13 + $0x1dc] sm:$0xff]
        %v3400 = vld [vmem:[#allocation13 + $0x1e4] sm:$0xff]
        %v3401 = vld [vmem:[#allocation13 + $0x1ec] sm:$0xff]
        %v3402 = vld [vmem:[#allocation13 + $0x1f4] sm:$0xf]
        %v3403 = vld [vmem:[#allocation13 + $0x1f8] sm:$0xff]
        %v3404 = vld [vmem:[#allocation13 + $0x200] sm:$0xff]
        %v3405 = vld [vmem:[#allocation13 + $0x208] sm:$0xff]
        %v3406 = vld [vmem:[#allocation13 + $0x210] sm:$0xf]
        %v3407 = vld [vmem:[#allocation13 + $0x214] sm:$0xff]
        %v3408 = vld [vmem:[#allocation13 + $0x21c] sm:$0xff]
        %v3409 = vld [vmem:[#allocation13 + $0x224] sm:$0xff]
        %v3410 = vld [vmem:[#allocation13 + $0x22c] sm:$0xf]
        %v3411 = vld [vmem:[#allocation13 + $0x230] sm:$0xff]
        %v3412 = vld [vmem:[#allocation13 + $0x238] sm:$0xff]
        %v3413 = vld [vmem:[#allocation13 + $0x240] sm:$0xff]
        %v3414 = vld [vmem:[#allocation13 + $0x248] sm:$0xf]
        %v3415 = vld [vmem:[#allocation13 + $0x24c] sm:$0xff]
        %v3416 = vld [vmem:[#allocation13 + $0x254] sm:$0xff]
        %v3417 = vld [vmem:[#allocation13 + $0x25c] sm:$0xff]
        %v3418 = vld [vmem:[#allocation13 + $0x264] sm:$0xf]
        %v3419 = vld [vmem:[#allocation13 + $0x268] sm:$0xff]
        %v3420 = vld [vmem:[#allocation13 + $0x270] sm:$0xff]
        %v3421 = vld [vmem:[#allocation13 + $0x278] sm:$0xff]
        %v3422 = vld [vmem:[#allocation13 + $0x280] sm:$0xf]
        %v3423 = vld [vmem:[#allocation13 + $0x284] sm:$0xff]
        %v3424 = vld [vmem:[#allocation13 + $0x28c] sm:$0xff]
        %v3425 = vld [vmem:[#allocation13 + $0x294] sm:$0xff]
        %v3426 = vld [vmem:[#allocation13 + $0x29c] sm:$0xf]
        %v3427 = vld [vmem:[#allocation13 + $0x2a0] sm:$0xff]
        %v3428 = vld [vmem:[#allocation13 + $0x2a8] sm:$0xff]
        %v3429 = vld [vmem:[#allocation13 + $0x2b0] sm:$0xff]
        %v3430 = vld [vmem:[#allocation13 + $0x2b8] sm:$0xf]
        %v3431 = vld [vmem:[#allocation13 + $0x2bc] sm:$0xff]
        %v3432 = vld [vmem:[#allocation13 + $0x2c4] sm:$0xff]
        %v3433 = vld [vmem:[#allocation13 + $0x2cc] sm:$0xff]
        %v3434 = vld [vmem:[#allocation13 + $0x2d4] sm:$0xf]
        %v3435 = vld [vmem:[#allocation13 + $0x2d8] sm:$0xff]
        %v3436 = vld [vmem:[#allocation13 + $0x2e0] sm:$0xff]
        %v3437 = vld [vmem:[#allocation13 + $0x2e8] sm:$0xff]
        %v3438 = vld [vmem:[#allocation13 + $0x2f0] sm:$0xf]
        %v3439 = vld [vmem:[#allocation13 + $0x2f4] sm:$0xff]
        %v3440 = vld [vmem:[#allocation13 + $0x2fc] sm:$0xff]
        %v3441 = vld [vmem:[#allocation13 + $0x304] sm:$0xff]
        %v3442 = vld [vmem:[#allocation13 + $0x30c] sm:$0xf]
        %v3443 = vld [vmem:[#allocation13 + $0x310] sm:$0xff]
        %v3444 = vld [vmem:[#allocation13 + $0x318] sm:$0xff]
        %v3445 = vld [vmem:[#allocation13 + $0x320] sm:$0xff]
        %v3446 = vld [vmem:[#allocation13 + $0x328] sm:$0xf]
        %v3447 = vld [vmem:[#allocation13 + $0x32c] sm:$0xff]
        %v3448 = vld [vmem:[#allocation13 + $0x334] sm:$0xff]
        %v3449 = vld [vmem:[#allocation13 + $0x33c] sm:$0xff]
        %v3450 = vld [vmem:[#allocation13 + $0x344] sm:$0xf]
        %v3451 = vld [vmem:[#allocation13 + $0x348] sm:$0xff]
        %v3452 = vld [vmem:[#allocation13 + $0x350] sm:$0xff]
        %v3453 = vld [vmem:[#allocation13 + $0x358] sm:$0xff]
        %v3454 = vld [vmem:[#allocation13 + $0x360] sm:$0xf]
        %v3455 = vld [vmem:[#allocation13 + $0x364] sm:$0xff]
        %v3456 = vld [vmem:[#allocation13 + $0x36c] sm:$0xff]
        %v3457 = vld [vmem:[#allocation13 + $0x374] sm:$0xff]
        %v3458 = vld [vmem:[#allocation13 + $0x37c] sm:$0xf]
        %v3459 = vld [vmem:[#allocation13 + $0x380] sm:$0xff]
        %v3460 = vld [vmem:[#allocation13 + $0x388] sm:$0xff]
        %v3461 = vld [vmem:[#allocation13 + $0x390] sm:$0xff]
        %v3462 = vld [vmem:[#allocation13 + $0x398] sm:$0xf]
        %v3463 = vld [vmem:[#allocation13 + $0x39c] sm:$0xff]
        %v3464 = vld [vmem:[#allocation13 + $0x3a4] sm:$0xff]
        %v3465 = vld [vmem:[#allocation13 + $0x3ac] sm:$0xff]
        %v3466 = vld [vmem:[#allocation13 + $0x3b4] sm:$0xf]
        %v3467 = vld [vmem:[#allocation13 + $0x3b8] sm:$0xff]
        %v3468 = vld [vmem:[#allocation13 + $0x3c0] sm:$0xff]
        %v3469 = vld [vmem:[#allocation13 + $0x3c8] sm:$0xff]
        %v3470 = vld [vmem:[#allocation13 + $0x3d0] sm:$0xf]
        %v3471 = vld [vmem:[#allocation13 + $0x3d4] sm:$0xff]
        %v3472 = vld [vmem:[#allocation13 + $0x3dc] sm:$0xff]
        %v3473 = vld [vmem:[#allocation13 + $0x3e4] sm:$0xff]
        %v3474 = vld [vmem:[#allocation13 + $0x3ec] sm:$0xf]
        %v3475 = vld [vmem:[#allocation13 + $0x3f0] sm:$0xff]
        %v3476 = vld [vmem:[#allocation13 + $0x3f8] sm:$0xff]
        %v3477 = vld [vmem:[#allocation13 + $0x400] sm:$0xff]
        %v3478 = vld [vmem:[#allocation13 + $0x408] sm:$0xf]
        %v3479 = vld [vmem:[#allocation13 + $0x40c] sm:$0xff]
        %v3480 = vld [vmem:[#allocation13 + $0x414] sm:$0xff]
        %v3481 = vld [vmem:[#allocation13 + $0x41c] sm:$0xff]
        %v3482 = vld [vmem:[#allocation13 + $0x424] sm:$0xf]
        %v3483 = vld [vmem:[#allocation13 + $0x428] sm:$0xff]
        %v3484 = vld [vmem:[#allocation13 + $0x430] sm:$0xff]
        %v3485 = vld [vmem:[#allocation13 + $0x438] sm:$0xff]
        %v3486 = vld [vmem:[#allocation13 + $0x440] sm:$0xf]
        %v3487 = vld [vmem:[#allocation13 + $0x444] sm:$0xff]
        %v3488 = vld [vmem:[#allocation13 + $0x44c] sm:$0xff]
        %v3489 = vld [vmem:[#allocation13 + $0x454] sm:$0xff]
        %v3490 = vld [vmem:[#allocation13 + $0x45c] sm:$0xf]
        %v3491 = vld [vmem:[#allocation13 + $0x460] sm:$0xff]
        %v3492 = vld [vmem:[#allocation13 + $0x468] sm:$0xff]
        %v3493 = vld [vmem:[#allocation13 + $0x470] sm:$0xff]
        %v3494 = vld [vmem:[#allocation13 + $0x478] sm:$0xf]
        %v3495 = vld [vmem:[#allocation13 + $0x47c] sm:$0xff]
        %v3496 = vld [vmem:[#allocation13 + $0x484] sm:$0xff]
        %v3497 = vld [vmem:[#allocation13 + $0x48c] sm:$0xff]
        %v3498 = vld [vmem:[#allocation13 + $0x494] sm:$0xf]
        %v3499 = vld [vmem:[#allocation13 + $0x498] sm:$0xff]
        %v3500 = vld [vmem:[#allocation13 + $0x4a0] sm:$0xff]
        %v3501 = vld [vmem:[#allocation13 + $0x4a8] sm:$0xff]
        %v3502 = vld [vmem:[#allocation13 + $0x4b0] sm:$0xf]
        %v3503 = vld [vmem:[#allocation13 + $0x4b4] sm:$0xff]
        %v3504 = vld [vmem:[#allocation13 + $0x4bc] sm:$0xff]
        %v3505 = vld [vmem:[#allocation13 + $0x4c4] sm:$0xff]
        %v3506 = vld [vmem:[#allocation13 + $0x4cc] sm:$0xf]
        %v3507 = vld [vmem:[#allocation13 + $0x4d0] sm:$0xff]
        %v3508 = vld [vmem:[#allocation13 + $0x4d8] sm:$0xff]
        %v3509 = vld [vmem:[#allocation13 + $0x4e0] sm:$0xff]
        %v3510 = vld [vmem:[#allocation13 + $0x4e8] sm:$0xf]
        %v3511 = vld [vmem:[#allocation13 + $0x4ec] sm:$0xff]
        %v3512 = vld [vmem:[#allocation13 + $0x4f4] sm:$0xff]
        %v3513 = vld [vmem:[#allocation13 + $0x4fc] sm:$0xff]
        %v3514 = vld [vmem:[#allocation13 + $0x504] sm:$0xf]
        %v3515 = vld [vmem:[#allocation13 + $0x508] sm:$0xff]
        %v3516 = vld [vmem:[#allocation13 + $0x510] sm:$0xff]
        %v3517 = vld [vmem:[#allocation13 + $0x518] sm:$0xff]
        %v3518 = vld [vmem:[#allocation13 + $0x520] sm:$0xf]
        %v3519 = vld [vmem:[#allocation13 + $0x524] sm:$0xff]
        %v3520 = vld [vmem:[#allocation13 + $0x52c] sm:$0xff]
        %v3521 = vld [vmem:[#allocation13 + $0x534] sm:$0xff]
        %v3522 = vld [vmem:[#allocation13 + $0x53c] sm:$0xf]
        %v3523 = vld [vmem:[#allocation13 + $0x540] sm:$0xff]
        %v3524 = vld [vmem:[#allocation13 + $0x548] sm:$0xff]
        %v3525 = vld [vmem:[#allocation13 + $0x550] sm:$0xff]
        %v3526 = vld [vmem:[#allocation13 + $0x558] sm:$0xf]
        %v3527 = vld [vmem:[#allocation13 + $0x55c] sm:$0xff]
        %v3528 = vld [vmem:[#allocation13 + $0x564] sm:$0xff]
        %v3529 = vld [vmem:[#allocation13 + $0x56c] sm:$0xff]
        %v3530 = vld [vmem:[#allocation13 + $0x574] sm:$0xf]
        %v3531 = vld [vmem:[#allocation13 + $0x578] sm:$0xff]
        %v3532 = vld [vmem:[#allocation13 + $0x580] sm:$0xff]
        %v3533 = vld [vmem:[#allocation13 + $0x588] sm:$0xff]
        %v3534 = vld [vmem:[#allocation13 + $0x590] sm:$0xf]
        %v3535 = vld [vmem:[#allocation13 + $0x594] sm:$0xff]
        %v3536 = vld [vmem:[#allocation13 + $0x59c] sm:$0xff]
        %v3537 = vld [vmem:[#allocation13 + $0x5a4] sm:$0xff]
        %v3538 = vld [vmem:[#allocation13 + $0x5ac] sm:$0xf]
        %v3539 = vld [vmem:[#allocation13 + $0x5b0] sm:$0xff]
        %v3540 = vld [vmem:[#allocation13 + $0x5b8] sm:$0xff]
        %v3541 = vld [vmem:[#allocation13 + $0x5c0] sm:$0xff]
        %v3542 = vld [vmem:[#allocation13 + $0x5c8] sm:$0xf]
        %v3543 = vld [vmem:[#allocation13 + $0x5cc] sm:$0xff]
        %v3544 = vld [vmem:[#allocation13 + $0x5d4] sm:$0xff]
        %v3545 = vld [vmem:[#allocation13 + $0x5dc] sm:$0xff]
        %v3546 = vld [vmem:[#allocation13 + $0x5e4] sm:$0xf]
        %v3547 = vld [vmem:[#allocation13 + $0x5e8] sm:$0xff]
        %v3548 = vld [vmem:[#allocation13 + $0x5f0] sm:$0xff]
        %v3549 = vld [vmem:[#allocation13 + $0x5f8] sm:$0xff]
        %v3550 = vld [vmem:[#allocation13 + $0x600] sm:$0xf]
        %v3551 = vld [vmem:[#allocation13 + $0x604] sm:$0xff]
        %v3552 = vld [vmem:[#allocation13 + $0x60c] sm:$0xff]
        %v3553 = vld [vmem:[#allocation13 + $0x614] sm:$0xff]
        %v3554 = vld [vmem:[#allocation13 + $0x61c] sm:$0xf]
        %v3555 = vld [vmem:[#allocation13 + $0x620] sm:$0xff]
        %v3556 = vld [vmem:[#allocation13 + $0x628] sm:$0xff]
        %v3557 = vld [vmem:[#allocation13 + $0x630] sm:$0xff]
        %v3558 = vld [vmem:[#allocation13 + $0x638] sm:$0xf]
        %v3559 = vld [vmem:[#allocation13 + $0x63c] sm:$0xff]
        %v3560 = vld [vmem:[#allocation13 + $0x644] sm:$0xff]
        %v3561 = vld [vmem:[#allocation13 + $0x64c] sm:$0xff]
        %v3562 = vld [vmem:[#allocation13 + $0x654] sm:$0xf]
        %v3563 = vld [vmem:[#allocation13 + $0x658] sm:$0xff]
        %v3564 = vld [vmem:[#allocation13 + $0x660] sm:$0xff]
        %v3565 = vld [vmem:[#allocation13 + $0x668] sm:$0xff]
        %v3566 = vld [vmem:[#allocation13 + $0x670] sm:$0xf]
        %v3567 = vld [vmem:[#allocation13 + $0x674] sm:$0xff]
        %v3568 = vld [vmem:[#allocation13 + $0x67c] sm:$0xff]
        %v3569 = vld [vmem:[#allocation13 + $0x684] sm:$0xff]
        %v3570 = vld [vmem:[#allocation13 + $0x68c] sm:$0xf]
        %v3571 = vld [vmem:[#allocation13 + $0x690] sm:$0xff]
        %v3572 = vld [vmem:[#allocation13 + $0x698] sm:$0xff]
        %v3573 = vld [vmem:[#allocation13 + $0x6a0] sm:$0xff]
        %v3574 = vld [vmem:[#allocation13 + $0x6a8] sm:$0xf]
        %v3575 = vld [vmem:[#allocation13 + $0x6ac] sm:$0xff]
        %v3576 = vld [vmem:[#allocation13 + $0x6b4] sm:$0xff]
        %v3577 = vld [vmem:[#allocation13 + $0x6bc] sm:$0xff]
        %v3578 = vld [vmem:[#allocation13 + $0x6c4] sm:$0xf]
        %v3579 = vld [vmem:[#allocation13 + $0x6c8] sm:$0xff]
        %v3580 = vld [vmem:[#allocation13 + $0x6d0] sm:$0xff]
        %v3581 = vld [vmem:[#allocation13 + $0x6d8] sm:$0xff]
        %v3582 = vld [vmem:[#allocation13 + $0x6e0] sm:$0xf]
        %v3583 = vld [vmem:[#allocation13 + $0x6e4] sm:$0xff]
        %v3584 = vld [vmem:[#allocation13 + $0x6ec] sm:$0xff]
        %v3585 = vld [vmem:[#allocation13 + $0x6f4] sm:$0xff]
        %v3586 = vld [vmem:[#allocation13 + $0x6fc] sm:$0xf]
        %v3587 = vld [vmem:[#allocation13 + $0x700] sm:$0xff]
        %v3588 = vld [vmem:[#allocation13 + $0x708] sm:$0xff]
        %v3589 = vld [vmem:[#allocation13 + $0x710] sm:$0xff]
        %v3590 = vld [vmem:[#allocation13 + $0x718] sm:$0xf]
        %v3591 = vld [vmem:[#allocation13 + $0x71c] sm:$0xff]
        %v3592 = vld [vmem:[#allocation13 + $0x724] sm:$0xff]
        %v3593 = vld [vmem:[#allocation13 + $0x72c] sm:$0xff]
        %v3594 = vld [vmem:[#allocation13 + $0x734] sm:$0xf]
        %v3595 = vld [vmem:[#allocation13 + $0x738] sm:$0xff]
        %v3596 = vld [vmem:[#allocation13 + $0x740] sm:$0xff]
        %v3597 = vld [vmem:[#allocation13 + $0x748] sm:$0xff]
        %v3598 = vld [vmem:[#allocation13 + $0x750] sm:$0xf]
        %v3599 = vld [vmem:[#allocation13 + $0x754] sm:$0xff]
        %v3600 = vld [vmem:[#allocation13 + $0x75c] sm:$0xff]
        %v3601 = vld [vmem:[#allocation13 + $0x764] sm:$0xff]
        %v3602 = vld [vmem:[#allocation13 + $0x76c] sm:$0xf]
        %v3603 = vld [vmem:[#allocation13 + $0x770] sm:$0xff]
        %v3604 = vld [vmem:[#allocation13 + $0x778] sm:$0xff]
        %v3605 = vld [vmem:[#allocation13 + $0x780] sm:$0xff]
        %v3606 = vld [vmem:[#allocation13 + $0x788] sm:$0xf]
        %v3607 = vld [vmem:[#allocation13 + $0x78c] sm:$0xff]
        %v3608 = vld [vmem:[#allocation13 + $0x794] sm:$0xff]
        %v3609 = vld [vmem:[#allocation13 + $0x79c] sm:$0xff]
        %v3610 = vld [vmem:[#allocation13 + $0x7a4] sm:$0xf]
        %v3611 = vld [vmem:[#allocation13 + $0x7a8] sm:$0xff]
        %v3612 = vld [vmem:[#allocation13 + $0x7b0] sm:$0xff]
        %v3613 = vld [vmem:[#allocation13 + $0x7b8] sm:$0xff]
        %v3614 = vld [vmem:[#allocation13 + $0x7c0] sm:$0xf]
        %v3615 = vld [vmem:[#allocation13 + $0x7c4] sm:$0xff]
        %v3616 = vld [vmem:[#allocation13 + $0x7cc] sm:$0xff]
        %v3617 = vld [vmem:[#allocation13 + $0x7d4] sm:$0xff]
        %v3618 = vld [vmem:[#allocation13 + $0x7dc] sm:$0xf]
        %v3619 = vld [vmem:[#allocation13 + $0x7e0] sm:$0xff]
        %v3620 = vld [vmem:[#allocation13 + $0x7e8] sm:$0xff]
        %v3621 = vld [vmem:[#allocation13 + $0x7f0] sm:$0xff]
        %v3622 = vld [vmem:[#allocation13 + $0x7f8] sm:$0xf]
        %v3623 = vld [vmem:[#allocation13 + $0x7fc] sm:$0xff]
        %v3624 = vld [vmem:[#allocation13 + $0x804] sm:$0xff]
        %v3625 = vld [vmem:[#allocation13 + $0x80c] sm:$0xff]
        %v3626 = vld [vmem:[#allocation13 + $0x814] sm:$0xf]
        %v3627 = vld [vmem:[#allocation13 + $0x818] sm:$0xff]
        %v3628 = vld [vmem:[#allocation13 + $0x820] sm:$0xff]
        %v3629 = vld [vmem:[#allocation13 + $0x828] sm:$0xff]
        %v3630 = vld [vmem:[#allocation13 + $0x830] sm:$0xf]
        %v3631 = vld [vmem:[#allocation13 + $0x834] sm:$0xff]
        %v3632 = vld [vmem:[#allocation13 + $0x83c] sm:$0xff]
        %v3633 = vld [vmem:[#allocation13 + $0x844] sm:$0xff]
        %v3634 = vld [vmem:[#allocation13 + $0x84c] sm:$0xf]
        %v3635 = vld [vmem:[#allocation13 + $0x850] sm:$0xff]
        %v3636 = vld [vmem:[#allocation13 + $0x858] sm:$0xff]
        %v3637 = vld [vmem:[#allocation13 + $0x860] sm:$0xff]
        %v3638 = vld [vmem:[#allocation13 + $0x868] sm:$0xf]
        %v3639 = vld [vmem:[#allocation13 + $0x86c] sm:$0xff]
        %v3640 = vld [vmem:[#allocation13 + $0x874] sm:$0xff]
        %v3641 = vld [vmem:[#allocation13 + $0x87c] sm:$0xff]
        %v3642 = vld [vmem:[#allocation13 + $0x884] sm:$0xf]
        %v3643 = vld [vmem:[#allocation13 + $0x888] sm:$0xff]
        %v3644 = vld [vmem:[#allocation13 + $0x890] sm:$0xff]
        %v3645 = vld [vmem:[#allocation13 + $0x898] sm:$0xff]
        %v3646 = vld [vmem:[#allocation13 + $0x8a0] sm:$0xf]
        %v3647 = vld [vmem:[#allocation13 + $0x8a4] sm:$0xff]
        %v3648 = vld [vmem:[#allocation13 + $0x8ac] sm:$0xff]
        %v3649 = vld [vmem:[#allocation13 + $0x8b4] sm:$0xff]
        %v3650 = vld [vmem:[#allocation13 + $0x8bc] sm:$0xf]
        %v3651 = vld [vmem:[#allocation13 + $0x8c0] sm:$0xff]
        %v3652 = vld [vmem:[#allocation13 + $0x8c8] sm:$0xff]
        %v3653 = vld [vmem:[#allocation13 + $0x8d0] sm:$0xff]
        %v3654 = vld [vmem:[#allocation13 + $0x8d8] sm:$0xf]
        %v3655 = vld [vmem:[#allocation13 + $0x8dc] sm:$0xff]
        %v3656 = vld [vmem:[#allocation13 + $0x8e4] sm:$0xff]
        %v3657 = vld [vmem:[#allocation13 + $0x8ec] sm:$0xff]
        %v3658 = vld [vmem:[#allocation13 + $0x8f4] sm:$0xf]
        %v3659 = vld [vmem:[#allocation13 + $0x8f8] sm:$0xff]
        %v3660 = vld [vmem:[#allocation13 + $0x900] sm:$0xff]
        %v3661 = vld [vmem:[#allocation13 + $0x908] sm:$0xff]
        %v3662 = vld [vmem:[#allocation13 + $0x910] sm:$0xf]
        %v3663 = vld [vmem:[#allocation13 + $0x914] sm:$0xff]
        %v3664 = vld [vmem:[#allocation13 + $0x91c] sm:$0xff]
        %v3665 = vld [vmem:[#allocation13 + $0x924] sm:$0xff]
        %v3666 = vld [vmem:[#allocation13 + $0x92c] sm:$0xf]
        %v3667 = vld [vmem:[#allocation13 + $0x930] sm:$0xff]
        %v3668 = vld [vmem:[#allocation13 + $0x938] sm:$0xff]
        %v3669 = vld [vmem:[#allocation13 + $0x940] sm:$0xff]
        %v3670 = vld [vmem:[#allocation13 + $0x948] sm:$0xf]
        %v3671 = vld [vmem:[#allocation13 + $0x94c] sm:$0xff]
        %v3672 = vld [vmem:[#allocation13 + $0x954] sm:$0xff]
        %v3673 = vld [vmem:[#allocation13 + $0x95c] sm:$0xff]
        %v3674 = vld [vmem:[#allocation13 + $0x964] sm:$0xf]
        %v3675 = vld [vmem:[#allocation13 + $0x968] sm:$0xff]
        %v3676 = vld [vmem:[#allocation13 + $0x970] sm:$0xff]
        %v3677 = vld [vmem:[#allocation13 + $0x978] sm:$0xff]
        %v3678 = vld [vmem:[#allocation13 + $0x980] sm:$0xf]
        %v3679 = vld [vmem:[#allocation13 + $0x984] sm:$0xff]
        %v3680 = vld [vmem:[#allocation13 + $0x98c] sm:$0xff]
        %v3681 = vld [vmem:[#allocation13 + $0x994] sm:$0xff]
        %v3682 = vld [vmem:[#allocation13 + $0x99c] sm:$0xf]
        %v3683 = vld [vmem:[#allocation13 + $0x9a0] sm:$0xff]
        %v3684 = vld [vmem:[#allocation13 + $0x9a8] sm:$0xff]
        %v3685 = vld [vmem:[#allocation13 + $0x9b0] sm:$0xff]
        %v3686 = vld [vmem:[#allocation13 + $0x9b8] sm:$0xf]
        %v3687 = vld [vmem:[#allocation13 + $0x9bc] sm:$0xff]
        %v3688 = vld [vmem:[#allocation13 + $0x9c4] sm:$0xff]
        %v3689 = vld [vmem:[#allocation13 + $0x9cc] sm:$0xff]
        %v3690 = vld [vmem:[#allocation13 + $0x9d4] sm:$0xf]
        %v3691 = vld [vmem:[#allocation13 + $0x9d8] sm:$0xff]
        %v3692 = vld [vmem:[#allocation13 + $0x9e0] sm:$0xff]
        %v3693 = vld [vmem:[#allocation13 + $0x9e8] sm:$0xff]
        %v3694 = vld [vmem:[#allocation13 + $0x9f0] sm:$0xf]
        %v3695 = vld [vmem:[#allocation13 + $0x9f4] sm:$0xff]
        %v3696 = vld [vmem:[#allocation13 + $0x9fc] sm:$0xff]
        %v3697 = vld [vmem:[#allocation13 + $0xa04] sm:$0xff]
        %v3698 = vld [vmem:[#allocation13 + $0xa0c] sm:$0xf]
        %v3699 = vld [vmem:[#allocation13 + $0xa10] sm:$0xff]
        %v3700 = vld [vmem:[#allocation13 + $0xa18] sm:$0xff]
        %v3701 = vld [vmem:[#allocation13 + $0xa20] sm:$0xff]
        %v3702 = vld [vmem:[#allocation13 + $0xa28] sm:$0xf]
        %v3703 = vld [vmem:[#allocation13 + $0xa2c] sm:$0xff]
        %v3704 = vld [vmem:[#allocation13 + $0xa34] sm:$0xff]
        %v3705 = vld [vmem:[#allocation13 + $0xa3c] sm:$0xff]
        %v3706 = vld [vmem:[#allocation13 + $0xa44] sm:$0xf]
        %v3707 = vld [vmem:[#allocation13 + $0xa48] sm:$0xff]
        %v3708 = vld [vmem:[#allocation13 + $0xa50] sm:$0xff]
        %v3709 = vld [vmem:[#allocation13 + $0xa58] sm:$0xff]
        %v3710 = vld [vmem:[#allocation13 + $0xa60] sm:$0xf]
        %v3711 = vld [vmem:[#allocation13 + $0xa64] sm:$0xff]
        %v3712 = vld [vmem:[#allocation13 + $0xa6c] sm:$0xff]
        %v3713 = vld [vmem:[#allocation13 + $0xa74] sm:$0xff]
        %v3714 = vld [vmem:[#allocation13 + $0xa7c] sm:$0xf]
        %v3715 = vld [vmem:[#allocation13 + $0xa80] sm:$0xff]
        %v3716 = vld [vmem:[#allocation13 + $0xa88] sm:$0xff]
        %v3717 = vld [vmem:[#allocation13 + $0xa90] sm:$0xff]
        %v3718 = vld [vmem:[#allocation13 + $0xa98] sm:$0xf]
        %v3719 = vld [vmem:[#allocation13 + $0xa9c] sm:$0xff]
        %v3720 = vld [vmem:[#allocation13 + $0xaa4] sm:$0xff]
        %v3721 = vld [vmem:[#allocation13 + $0xaac] sm:$0xff]
        %v3722 = vld [vmem:[#allocation13 + $0xab4] sm:$0xf]
        %v3723 = vld [vmem:[#allocation13 + $0xab8] sm:$0xff]
        %v3724 = vld [vmem:[#allocation13 + $0xac0] sm:$0xff]
        %v3725 = vld [vmem:[#allocation13 + $0xac8] sm:$0xff]
        %v3726 = vld [vmem:[#allocation13 + $0xad0] sm:$0xf]
        %v3727 = vld [vmem:[#allocation13 + $0xad4] sm:$0xff]
        %v3728 = vld [vmem:[#allocation13 + $0xadc] sm:$0xff]
        %v3729 = vld [vmem:[#allocation13 + $0xae4] sm:$0xff]
        %v3730 = vld [vmem:[#allocation13 + $0xaec] sm:$0xf]
        %v3731 = vld [vmem:[#allocation13 + $0xaf0] sm:$0xff]
        %v3732 = vld [vmem:[#allocation13 + $0xaf8] sm:$0xff]
        %v3733 = vld [vmem:[#allocation13 + $0xb00] sm:$0xff]
        %v3734 = vld [vmem:[#allocation13 + $0xb08] sm:$0xf]
        %v3735 = vld [vmem:[#allocation13 + $0xb0c] sm:$0xff]
        %v3736 = vld [vmem:[#allocation13 + $0xb14] sm:$0xff]
        %v3737 = vld [vmem:[#allocation13 + $0xb1c] sm:$0xff]
        %v3738 = vld [vmem:[#allocation13 + $0xb24] sm:$0xf]
        %v3739 = vld [vmem:[#allocation13 + $0xb28] sm:$0xff]
        %v3740 = vld [vmem:[#allocation13 + $0xb30] sm:$0xff]
        %v3741 = vld [vmem:[#allocation13 + $0xb38] sm:$0xff]
        %v3742 = vld [vmem:[#allocation13 + $0xb40] sm:$0xf]
        %v3743 = vld [vmem:[#allocation13 + $0xb44] sm:$0xff]
        %v3744 = vld [vmem:[#allocation13 + $0xb4c] sm:$0xff]
        %v3745 = vld [vmem:[#allocation13 + $0xb54] sm:$0xff]
        %v3746 = vld [vmem:[#allocation13 + $0xb5c] sm:$0xf]
        %v3747 = vld [vmem:[#allocation13 + $0xb60] sm:$0xff]
        %v3748 = vld [vmem:[#allocation13 + $0xb68] sm:$0xff]
        %v3749 = vld [vmem:[#allocation13 + $0xb70] sm:$0xff]
        %v3750 = vld [vmem:[#allocation13 + $0xb78] sm:$0xf]
        %v3751 = vld [vmem:[#allocation13 + $0xb7c] sm:$0xff]
        %v3752 = vld [vmem:[#allocation13 + $0xb84] sm:$0xff]
        %v3753 = vld [vmem:[#allocation13 + $0xb8c] sm:$0xff]
        %v3754 = vld [vmem:[#allocation13 + $0xb94] sm:$0xf]
        %v3755 = vld [vmem:[#allocation13 + $0xb98] sm:$0xff]
        %v3756 = vld [vmem:[#allocation13 + $0xba0] sm:$0xff]
        %v3757 = vld [vmem:[#allocation13 + $0xba8] sm:$0xff]
        %v3758 = vld [vmem:[#allocation13 + $0xbb0] sm:$0xf]
        %v3759 = vld [vmem:[#allocation13 + $0xbb4] sm:$0xff]
        %v3760 = vld [vmem:[#allocation13 + $0xbbc] sm:$0xff]
        %v3761 = vld [vmem:[#allocation13 + $0xbc4] sm:$0xff]
        %v3762 = vld [vmem:[#allocation13 + $0xbcc] sm:$0xf]
        %v3763 = vld [vmem:[#allocation13 + $0xbd0] sm:$0xff]
        %v3764 = vld [vmem:[#allocation13 + $0xbd8] sm:$0xff]
        %v3765 = vld [vmem:[#allocation13 + $0xbe0] sm:$0xff]
        %v3766 = vld [vmem:[#allocation13 + $0xbe8] sm:$0xf]
        %v3767 = vld [vmem:[#allocation13 + $0xbec] sm:$0xff]
        %v3768 = vld [vmem:[#allocation13 + $0xbf4] sm:$0xff]
        %v3769 = vld [vmem:[#allocation13 + $0xbfc] sm:$0xff]
        %v3770 = vld [vmem:[#allocation13 + $0xc04] sm:$0xf]
        %v3771 = vld [vmem:[#allocation13 + $0xc08] sm:$0xff]
        %v3772 = vld [vmem:[#allocation13 + $0xc10] sm:$0xff]
        %v3773 = vld [vmem:[#allocation13 + $0xc18] sm:$0xff]
        %v3774 = vld [vmem:[#allocation13 + $0xc20] sm:$0xf]
        %v3775 = vld [vmem:[#allocation13 + $0xc24] sm:$0xff]
        %v3776 = vld [vmem:[#allocation13 + $0xc2c] sm:$0xff]
        %v3777 = vld [vmem:[#allocation13 + $0xc34] sm:$0xff]
        %v3778 = vld [vmem:[#allocation13 + $0xc3c] sm:$0xf]
        %v3779 = vld [vmem:[#allocation13 + $0xc40] sm:$0xff]
        %v3780 = vld [vmem:[#allocation13 + $0xc48] sm:$0xff]
        %v3781 = vld [vmem:[#allocation13 + $0xc50] sm:$0xff]
        %v3782 = vld [vmem:[#allocation13 + $0xc58] sm:$0xf]
        %v3783 = vld [vmem:[#allocation13 + $0xc5c] sm:$0xff]
        %v3784 = vld [vmem:[#allocation13 + $0xc64] sm:$0xff]
        %v3785 = vld [vmem:[#allocation13 + $0xc6c] sm:$0xff]
        %v3786 = vld [vmem:[#allocation13 + $0xc74] sm:$0xf]
        %v3787 = vld [vmem:[#allocation13 + $0xc78] sm:$0xff]
        %v3788 = vld [vmem:[#allocation13 + $0xc80] sm:$0xff]
        %v3789 = vld [vmem:[#allocation13 + $0xc88] sm:$0xff]
        %v3790 = vld [vmem:[#allocation13 + $0xc90] sm:$0xf]
        %v3791 = vld [vmem:[#allocation13 + $0xc94] sm:$0xff]
        %v3792 = vld [vmem:[#allocation13 + $0xc9c] sm:$0xff]
        %v3793 = vld [vmem:[#allocation13 + $0xca4] sm:$0xff]
        %v3794 = vld [vmem:[#allocation13 + $0xcac] sm:$0xf]
        %v3795 = vld [vmem:[#allocation13 + $0xcb0] sm:$0xff]
        %v3796 = vld [vmem:[#allocation13 + $0xcb8] sm:$0xff]
        %v3797 = vld [vmem:[#allocation13 + $0xcc0] sm:$0xff]
        %v3798 = vld [vmem:[#allocation13 + $0xcc8] sm:$0xf]
        %v3799 = vld [vmem:[#allocation13 + $0xccc] sm:$0xff]
        %v3800 = vld [vmem:[#allocation13 + $0xcd4] sm:$0xff]
        %v3801 = vld [vmem:[#allocation13 + $0xcdc] sm:$0xff]
        %v3802 = vld [vmem:[#allocation13 + $0xce4] sm:$0xf]
        %v3803 = vld [vmem:[#allocation13 + $0xce8] sm:$0xff]
        %v3804 = vld [vmem:[#allocation13 + $0xcf0] sm:$0xff]
        %v3805 = vld [vmem:[#allocation13 + $0xcf8] sm:$0xff]
        %v3806 = vld [vmem:[#allocation13 + $0xd00] sm:$0xf]
        %v3807 = vld [vmem:[#allocation13 + $0xd04] sm:$0xff]
        %v3808 = vld [vmem:[#allocation13 + $0xd0c] sm:$0xff]
        %v3809 = vld [vmem:[#allocation13 + $0xd14] sm:$0xff]
        %v3810 = vld [vmem:[#allocation13 + $0xd1c] sm:$0xf]
        %v3811 = vld [vmem:[#allocation13 + $0xd20] sm:$0xff]
        %v3812 = vld [vmem:[#allocation13 + $0xd28] sm:$0xff]
        %v3813 = vld [vmem:[#allocation13 + $0xd30] sm:$0xff]
        %v3814 = vld [vmem:[#allocation13 + $0xd38] sm:$0xf]
        %v3815 = vld [vmem:[#allocation13 + $0xd3c] sm:$0xff]
        %v3816 = vld [vmem:[#allocation13 + $0xd44] sm:$0xff]
        %v3817 = vld [vmem:[#allocation13 + $0xd4c] sm:$0xff]
        %v3818 = vld [vmem:[#allocation13 + $0xd54] sm:$0xf]
        %v3819 = vld [vmem:[#allocation13 + $0xd58] sm:$0xff]
        %v3820 = vld [vmem:[#allocation13 + $0xd60] sm:$0xff]
        %v3821 = vld [vmem:[#allocation13 + $0xd68] sm:$0xff]
        %v3822 = vld [vmem:[#allocation13 + $0xd70] sm:$0xf]
        %v3823 = vld [vmem:[#allocation13 + $0xd74] sm:$0xff]
        %v3824 = vld [vmem:[#allocation13 + $0xd7c] sm:$0xff]
        %v3825 = vld [vmem:[#allocation13 + $0xd84] sm:$0xff]
        %v3826 = vld [vmem:[#allocation13 + $0xd8c] sm:$0xf]
        %v3827 = vld [vmem:[#allocation13 + $0xd90] sm:$0xff]
        %v3828 = vld [vmem:[#allocation13 + $0xd98] sm:$0xff]
        %v3829 = vld [vmem:[#allocation13 + $0xda0] sm:$0xff]
        %v3830 = vld [vmem:[#allocation13 + $0xda8] sm:$0xf]
        %v3831 = vld [vmem:[#allocation13 + $0xdac] sm:$0xff]
        %v3832 = vld [vmem:[#allocation13 + $0xdb4] sm:$0xff]
        %v3833 = vld [vmem:[#allocation13 + $0xdbc] sm:$0xff]
        %v3834 = vld [vmem:[#allocation13 + $0xdc4] sm:$0xf]
        %v3835 = vld [vmem:[#allocation13 + $0xdc8] sm:$0xff]
        %v3836 = vld [vmem:[#allocation13 + $0xdd0] sm:$0xff]
        %v3837 = vld [vmem:[#allocation13 + $0xdd8] sm:$0xff]
        %v3838 = vld [vmem:[#allocation13 + $0xde0] sm:$0xf]
        %v3839 = vld [vmem:[#allocation13 + $0xde4] sm:$0xff]
        %v3840 = vld [vmem:[#allocation13 + $0xdec] sm:$0xff]
        %v3841 = vld [vmem:[#allocation13 + $0xdf4] sm:$0xff]
        %v3842 = vld [vmem:[#allocation13 + $0xdfc] sm:$0xf]
        %v3843 = vld [vmem:[#allocation14] sm:$0xff]
        %v3845 = vlaneseq
        %v3846 = vshrl.u32 %v3845, 7
        %v3847 = vsub.s32 0, %v3846
        %v3848 = vrot.slane %v3843, %v3847
        %v3849 = vlaneseq
        %v3850 = vshrl.u32 %v3849, 7
        %v3851 = vsub.s32 1, %v3850
        %v3852 = vrot.slane %v3843, %v3851
        %v3853 = vlaneseq
        %v3854 = vshrl.u32 %v3853, 7
        %v3855 = vsub.s32 2, %v3854
        %v3856 = vrot.slane %v3843, %v3855
        %v3857 = vlaneseq
        %v3858 = vshrl.u32 %v3857, 7
        %v3859 = vsub.s32 3, %v3858
        %v3860 = vrot.slane %v3843, %v3859
        %v3861 = vlaneseq
        %v3862 = vshrl.u32 %v3861, 7
        %v3863 = vsub.s32 4, %v3862
        %v3864 = vrot.slane %v3843, %v3863
        %v3865 = vlaneseq
        %v3866 = vshrl.u32 %v3865, 7
        %v3867 = vsub.s32 5, %v3866
        %v3868 = vrot.slane %v3843, %v3867
        %v3869 = vlaneseq
        %v3870 = vshrl.u32 %v3869, 7
        %v3871 = vsub.s32 6, %v3870
        %v3872 = vrot.slane %v3843, %v3871
        %v4392 = vunpack.c.l.b16 %v3331
        %v4393 = vunpack.c.h.b16 %v3331
        %v4394 = vunpack.c.l.b16 %v3332
        %v4395 = vunpack.c.h.b16 %v3332
        %v4396 = vunpack.c.l.b16 %v3333
        %v4397 = vunpack.c.h.b16 %v3333
        %v4398 = vunpack.c.l.b16 %v3334
        %v4399 = vunpack.c.l.b16 %v3335
        %v4400 = vunpack.c.h.b16 %v3335
        %v4401 = vunpack.c.l.b16 %v3336
        %v4402 = vunpack.c.h.b16 %v3336
        %v4403 = vunpack.c.l.b16 %v3337
        %v4404 = vunpack.c.h.b16 %v3337
        %v4405 = vunpack.c.l.b16 %v3338
        %v4406 = vunpack.c.l.b16 %v3339
        %v4407 = vunpack.c.h.b16 %v3339
        %v4408 = vunpack.c.l.b16 %v3340
        %v4409 = vunpack.c.h.b16 %v3340
        %v4410 = vunpack.c.l.b16 %v3341
        %v4411 = vunpack.c.h.b16 %v3341
        %v4412 = vunpack.c.l.b16 %v3342
        %v4413 = vunpack.c.l.b16 %v3343
        %v4414 = vunpack.c.h.b16 %v3343
        %v4415 = vunpack.c.l.b16 %v3344
        %v4416 = vunpack.c.h.b16 %v3344
        %v4417 = vunpack.c.l.b16 %v3345
        %v4418 = vunpack.c.h.b16 %v3345
        %v4419 = vunpack.c.l.b16 %v3346
        %v4420 = vunpack.c.l.b16 %v3347
        %v4421 = vunpack.c.h.b16 %v3347
        %v4422 = vunpack.c.l.b16 %v3348
        %v4423 = vunpack.c.h.b16 %v3348
        %v4424 = vunpack.c.l.b16 %v3349
        %v4425 = vunpack.c.h.b16 %v3349
        %v4426 = vunpack.c.l.b16 %v3350
        %v4427 = vunpack.c.l.b16 %v3351
        %v4428 = vunpack.c.h.b16 %v3351
        %v4429 = vunpack.c.l.b16 %v3352
        %v4430 = vunpack.c.h.b16 %v3352
        %v4431 = vunpack.c.l.b16 %v3353
        %v4432 = vunpack.c.h.b16 %v3353
        %v4433 = vunpack.c.l.b16 %v3354
        %v4434 = vunpack.c.l.b16 %v3355
        %v4435 = vunpack.c.h.b16 %v3355
        %v4436 = vunpack.c.l.b16 %v3356
        %v4437 = vunpack.c.h.b16 %v3356
        %v4438 = vunpack.c.l.b16 %v3357
        %v4439 = vunpack.c.h.b16 %v3357
        %v4440 = vunpack.c.l.b16 %v3358
        %v4441 = vunpack.c.l.b16 %v3359
        %v4442 = vunpack.c.h.b16 %v3359
        %v4443 = vunpack.c.l.b16 %v3360
        %v4444 = vunpack.c.h.b16 %v3360
        %v4445 = vunpack.c.l.b16 %v3361
        %v4446 = vunpack.c.h.b16 %v3361
        %v4447 = vunpack.c.l.b16 %v3362
        %v4448 = vunpack.c.l.b16 %v3363
        %v4449 = vunpack.c.h.b16 %v3363
        %v4450 = vunpack.c.l.b16 %v3364
        %v4451 = vunpack.c.h.b16 %v3364
        %v4452 = vunpack.c.l.b16 %v3365
        %v4453 = vunpack.c.h.b16 %v3365
        %v4454 = vunpack.c.l.b16 %v3366
        %v4455 = vunpack.c.l.b16 %v3367
        %v4456 = vunpack.c.h.b16 %v3367
        %v4457 = vunpack.c.l.b16 %v3368
        %v4458 = vunpack.c.h.b16 %v3368
        %v4459 = vunpack.c.l.b16 %v3369
        %v4460 = vunpack.c.h.b16 %v3369
        %v4461 = vunpack.c.l.b16 %v3370
        %v4462 = vunpack.c.l.b16 %v3371
        %v4463 = vunpack.c.h.b16 %v3371
        %v4464 = vunpack.c.l.b16 %v3372
        %v4465 = vunpack.c.h.b16 %v3372
        %v4466 = vunpack.c.l.b16 %v3373
        %v4467 = vunpack.c.h.b16 %v3373
        %v4468 = vunpack.c.l.b16 %v3374
        %v4469 = vunpack.c.l.b16 %v3375
        %v4470 = vunpack.c.h.b16 %v3375
        %v4471 = vunpack.c.l.b16 %v3376
        %v4472 = vunpack.c.h.b16 %v3376
        %v4473 = vunpack.c.l.b16 %v3377
        %v4474 = vunpack.c.h.b16 %v3377
        %v4475 = vunpack.c.l.b16 %v3378
        %v4476 = vunpack.c.l.b16 %v3379
        %v4477 = vunpack.c.h.b16 %v3379
        %v4478 = vunpack.c.l.b16 %v3380
        %v4479 = vunpack.c.h.b16 %v3380
        %v4480 = vunpack.c.l.b16 %v3381
        %v4481 = vunpack.c.h.b16 %v3381
        %v4482 = vunpack.c.l.b16 %v3382
        %v4483 = vunpack.c.l.b16 %v3383
        %v4484 = vunpack.c.h.b16 %v3383
        %v4485 = vunpack.c.l.b16 %v3384
        %v4486 = vunpack.c.h.b16 %v3384
        %v4487 = vunpack.c.l.b16 %v3385
        %v4488 = vunpack.c.h.b16 %v3385
        %v4489 = vunpack.c.l.b16 %v3386
        %v4490 = vunpack.c.l.b16 %v3387
        %v4491 = vunpack.c.h.b16 %v3387
        %v4492 = vunpack.c.l.b16 %v3388
        %v4493 = vunpack.c.h.b16 %v3388
        %v4494 = vunpack.c.l.b16 %v3389
        %v4495 = vunpack.c.h.b16 %v3389
        %v4496 = vunpack.c.l.b16 %v3390
        %v4497 = vunpack.c.l.b16 %v3391
        %v4498 = vunpack.c.h.b16 %v3391
        %v4499 = vunpack.c.l.b16 %v3392
        %v4500 = vunpack.c.h.b16 %v3392
        %v4501 = vunpack.c.l.b16 %v3393
        %v4502 = vunpack.c.h.b16 %v3393
        %v4503 = vunpack.c.l.b16 %v3394
        %v4504 = vunpack.c.l.b16 %v3395
        %v4505 = vunpack.c.h.b16 %v3395
        %v4506 = vunpack.c.l.b16 %v3396
        %v4507 = vunpack.c.h.b16 %v3396
        %v4508 = vunpack.c.l.b16 %v3397
        %v4509 = vunpack.c.h.b16 %v3397
        %v4510 = vunpack.c.l.b16 %v3398
        %v4511 = vunpack.c.l.b16 %v3399
        %v4512 = vunpack.c.h.b16 %v3399
        %v4513 = vunpack.c.l.b16 %v3400
        %v4514 = vunpack.c.h.b16 %v3400
        %v4515 = vunpack.c.l.b16 %v3401
        %v4516 = vunpack.c.h.b16 %v3401
        %v4517 = vunpack.c.l.b16 %v3402
        %v4518 = vunpack.c.l.b16 %v3403
        %v4519 = vunpack.c.h.b16 %v3403
        %v4520 = vunpack.c.l.b16 %v3404
        %v4521 = vunpack.c.h.b16 %v3404
        %v4522 = vunpack.c.l.b16 %v3405
        %v4523 = vunpack.c.h.b16 %v3405
        %v4524 = vunpack.c.l.b16 %v3406
        %v4525 = vunpack.c.l.b16 %v3407
        %v4526 = vunpack.c.h.b16 %v3407
        %v4527 = vunpack.c.l.b16 %v3408
        %v4528 = vunpack.c.h.b16 %v3408
        %v4529 = vunpack.c.l.b16 %v3409
        %v4530 = vunpack.c.h.b16 %v3409
        %v4531 = vunpack.c.l.b16 %v3410
        %v4532 = vunpack.c.l.b16 %v3411
        %v4533 = vunpack.c.h.b16 %v3411
        %v4534 = vunpack.c.l.b16 %v3412
        %v4535 = vunpack.c.h.b16 %v3412
        %v4536 = vunpack.c.l.b16 %v3413
        %v4537 = vunpack.c.h.b16 %v3413
        %v4538 = vunpack.c.l.b16 %v3414
        %v4539 = vunpack.c.l.b16 %v3415
        %v4540 = vunpack.c.h.b16 %v3415
        %v4541 = vunpack.c.l.b16 %v3416
        %v4542 = vunpack.c.h.b16 %v3416
        %v4543 = vunpack.c.l.b16 %v3417
        %v4544 = vunpack.c.h.b16 %v3417
        %v4545 = vunpack.c.l.b16 %v3418
        %v4546 = vunpack.c.l.b16 %v3419
        %v4547 = vunpack.c.h.b16 %v3419
        %v4548 = vunpack.c.l.b16 %v3420
        %v4549 = vunpack.c.h.b16 %v3420
        %v4550 = vunpack.c.l.b16 %v3421
        %v4551 = vunpack.c.h.b16 %v3421
        %v4552 = vunpack.c.l.b16 %v3422
        %v4553 = vunpack.c.l.b16 %v3423
        %v4554 = vunpack.c.h.b16 %v3423
        %v4555 = vunpack.c.l.b16 %v3424
        %v4556 = vunpack.c.h.b16 %v3424
        %v4557 = vunpack.c.l.b16 %v3425
        %v4558 = vunpack.c.h.b16 %v3425
        %v4559 = vunpack.c.l.b16 %v3426
        %v4560 = vunpack.c.l.b16 %v3427
        %v4561 = vunpack.c.h.b16 %v3427
        %v4562 = vunpack.c.l.b16 %v3428
        %v4563 = vunpack.c.h.b16 %v3428
        %v4564 = vunpack.c.l.b16 %v3429
        %v4565 = vunpack.c.h.b16 %v3429
        %v4566 = vunpack.c.l.b16 %v3430
        %v4567 = vunpack.c.l.b16 %v3431
        %v4568 = vunpack.c.h.b16 %v3431
        %v4569 = vunpack.c.l.b16 %v3432
        %v4570 = vunpack.c.h.b16 %v3432
        %v4571 = vunpack.c.l.b16 %v3433
        %v4572 = vunpack.c.h.b16 %v3433
        %v4573 = vunpack.c.l.b16 %v3434
        %v4574 = vunpack.c.l.b16 %v3435
        %v4575 = vunpack.c.h.b16 %v3435
        %v4576 = vunpack.c.l.b16 %v3436
        %v4577 = vunpack.c.h.b16 %v3436
        %v4578 = vunpack.c.l.b16 %v3437
        %v4579 = vunpack.c.h.b16 %v3437
        %v4580 = vunpack.c.l.b16 %v3438
        %v4581 = vunpack.c.l.b16 %v3439
        %v4582 = vunpack.c.h.b16 %v3439
        %v4583 = vunpack.c.l.b16 %v3440
        %v4584 = vunpack.c.h.b16 %v3440
        %v4585 = vunpack.c.l.b16 %v3441
        %v4586 = vunpack.c.h.b16 %v3441
        %v4587 = vunpack.c.l.b16 %v3442
        %v4588 = vunpack.c.l.b16 %v3443
        %v4589 = vunpack.c.h.b16 %v3443
        %v4590 = vunpack.c.l.b16 %v3444
        %v4591 = vunpack.c.h.b16 %v3444
        %v4592 = vunpack.c.l.b16 %v3445
        %v4593 = vunpack.c.h.b16 %v3445
        %v4594 = vunpack.c.l.b16 %v3446
        %v4595 = vunpack.c.l.b16 %v3447
        %v4596 = vunpack.c.h.b16 %v3447
        %v4597 = vunpack.c.l.b16 %v3448
        %v4598 = vunpack.c.h.b16 %v3448
        %v4599 = vunpack.c.l.b16 %v3449
        %v4600 = vunpack.c.h.b16 %v3449
        %v4601 = vunpack.c.l.b16 %v3450
        %v4602 = vunpack.c.l.b16 %v3451
        %v4603 = vunpack.c.h.b16 %v3451
        %v4604 = vunpack.c.l.b16 %v3452
        %v4605 = vunpack.c.h.b16 %v3452
        %v4606 = vunpack.c.l.b16 %v3453
        %v4607 = vunpack.c.h.b16 %v3453
        %v4608 = vunpack.c.l.b16 %v3454
        %v4609 = vunpack.c.l.b16 %v3455
        %v4610 = vunpack.c.h.b16 %v3455
        %v4611 = vunpack.c.l.b16 %v3456
        %v4612 = vunpack.c.h.b16 %v3456
        %v4613 = vunpack.c.l.b16 %v3457
        %v4614 = vunpack.c.h.b16 %v3457
        %v4615 = vunpack.c.l.b16 %v3458
        %v4616 = vunpack.c.l.b16 %v3459
        %v4617 = vunpack.c.h.b16 %v3459
        %v4618 = vunpack.c.l.b16 %v3460
        %v4619 = vunpack.c.h.b16 %v3460
        %v4620 = vunpack.c.l.b16 %v3461
        %v4621 = vunpack.c.h.b16 %v3461
        %v4622 = vunpack.c.l.b16 %v3462
        %v4623 = vunpack.c.l.b16 %v3463
        %v4624 = vunpack.c.h.b16 %v3463
        %v4625 = vunpack.c.l.b16 %v3464
        %v4626 = vunpack.c.h.b16 %v3464
        %v4627 = vunpack.c.l.b16 %v3465
        %v4628 = vunpack.c.h.b16 %v3465
        %v4629 = vunpack.c.l.b16 %v3466
        %v4630 = vunpack.c.l.b16 %v3467
        %v4631 = vunpack.c.h.b16 %v3467
        %v4632 = vunpack.c.l.b16 %v3468
        %v4633 = vunpack.c.h.b16 %v3468
        %v4634 = vunpack.c.l.b16 %v3469
        %v4635 = vunpack.c.h.b16 %v3469
        %v4636 = vunpack.c.l.b16 %v3470
        %v4637 = vunpack.c.l.b16 %v3471
        %v4638 = vunpack.c.h.b16 %v3471
        %v4639 = vunpack.c.l.b16 %v3472
        %v4640 = vunpack.c.h.b16 %v3472
        %v4641 = vunpack.c.l.b16 %v3473
        %v4642 = vunpack.c.h.b16 %v3473
        %v4643 = vunpack.c.l.b16 %v3474
        %v4644 = vunpack.c.l.b16 %v3475
        %v4645 = vunpack.c.h.b16 %v3475
        %v4646 = vunpack.c.l.b16 %v3476
        %v4647 = vunpack.c.h.b16 %v3476
        %v4648 = vunpack.c.l.b16 %v3477
        %v4649 = vunpack.c.h.b16 %v3477
        %v4650 = vunpack.c.l.b16 %v3478
        %v4651 = vunpack.c.l.b16 %v3479
        %v4652 = vunpack.c.h.b16 %v3479
        %v4653 = vunpack.c.l.b16 %v3480
        %v4654 = vunpack.c.h.b16 %v3480
        %v4655 = vunpack.c.l.b16 %v3481
        %v4656 = vunpack.c.h.b16 %v3481
        %v4657 = vunpack.c.l.b16 %v3482
        %v4658 = vunpack.c.l.b16 %v3483
        %v4659 = vunpack.c.h.b16 %v3483
        %v4660 = vunpack.c.l.b16 %v3484
        %v4661 = vunpack.c.h.b16 %v3484
        %v4662 = vunpack.c.l.b16 %v3485
        %v4663 = vunpack.c.h.b16 %v3485
        %v4664 = vunpack.c.l.b16 %v3486
        %v4665 = vunpack.c.l.b16 %v3487
        %v4666 = vunpack.c.h.b16 %v3487
        %v4667 = vunpack.c.l.b16 %v3488
        %v4668 = vunpack.c.h.b16 %v3488
        %v4669 = vunpack.c.l.b16 %v3489
        %v4670 = vunpack.c.h.b16 %v3489
        %v4671 = vunpack.c.l.b16 %v3490
        %v4672 = vunpack.c.l.b16 %v3491
        %v4673 = vunpack.c.h.b16 %v3491
        %v4674 = vunpack.c.l.b16 %v3492
        %v4675 = vunpack.c.h.b16 %v3492
        %v4676 = vunpack.c.l.b16 %v3493
        %v4677 = vunpack.c.h.b16 %v3493
        %v4678 = vunpack.c.l.b16 %v3494
        %v4679 = vunpack.c.l.b16 %v3495
        %v4680 = vunpack.c.h.b16 %v3495
        %v4681 = vunpack.c.l.b16 %v3496
        %v4682 = vunpack.c.h.b16 %v3496
        %v4683 = vunpack.c.l.b16 %v3497
        %v4684 = vunpack.c.h.b16 %v3497
        %v4685 = vunpack.c.l.b16 %v3498
        %v4686 = vunpack.c.l.b16 %v3499
        %v4687 = vunpack.c.h.b16 %v3499
        %v4688 = vunpack.c.l.b16 %v3500
        %v4689 = vunpack.c.h.b16 %v3500
        %v4690 = vunpack.c.l.b16 %v3501
        %v4691 = vunpack.c.h.b16 %v3501
        %v4692 = vunpack.c.l.b16 %v3502
        %v4693 = vunpack.c.l.b16 %v3503
        %v4694 = vunpack.c.h.b16 %v3503
        %v4695 = vunpack.c.l.b16 %v3504
        %v4696 = vunpack.c.h.b16 %v3504
        %v4697 = vunpack.c.l.b16 %v3505
        %v4698 = vunpack.c.h.b16 %v3505
        %v4699 = vunpack.c.l.b16 %v3506
        %v4700 = vunpack.c.l.b16 %v3507
        %v4701 = vunpack.c.h.b16 %v3507
        %v4702 = vunpack.c.l.b16 %v3508
        %v4703 = vunpack.c.h.b16 %v3508
        %v4704 = vunpack.c.l.b16 %v3509
        %v4705 = vunpack.c.h.b16 %v3509
        %v4706 = vunpack.c.l.b16 %v3510
        %v4707 = vunpack.c.l.b16 %v3511
        %v4708 = vunpack.c.h.b16 %v3511
        %v4709 = vunpack.c.l.b16 %v3512
        %v4710 = vunpack.c.h.b16 %v3512
        %v4711 = vunpack.c.l.b16 %v3513
        %v4712 = vunpack.c.h.b16 %v3513
        %v4713 = vunpack.c.l.b16 %v3514
        %v4714 = vunpack.c.l.b16 %v3515
        %v4715 = vunpack.c.h.b16 %v3515
        %v4716 = vunpack.c.l.b16 %v3516
        %v4717 = vunpack.c.h.b16 %v3516
        %v4718 = vunpack.c.l.b16 %v3517
        %v4719 = vunpack.c.h.b16 %v3517
        %v4720 = vunpack.c.l.b16 %v3518
        %v4721 = vunpack.c.l.b16 %v3519
        %v4722 = vunpack.c.h.b16 %v3519
        %v4723 = vunpack.c.l.b16 %v3520
        %v4724 = vunpack.c.h.b16 %v3520
        %v4725 = vunpack.c.l.b16 %v3521
        %v4726 = vunpack.c.h.b16 %v3521
        %v4727 = vunpack.c.l.b16 %v3522
        %v4728 = vunpack.c.l.b16 %v3523
        %v4729 = vunpack.c.h.b16 %v3523
        %v4730 = vunpack.c.l.b16 %v3524
        %v4731 = vunpack.c.h.b16 %v3524
        %v4732 = vunpack.c.l.b16 %v3525
        %v4733 = vunpack.c.h.b16 %v3525
        %v4734 = vunpack.c.l.b16 %v3526
        %v4735 = vunpack.c.l.b16 %v3527
        %v4736 = vunpack.c.h.b16 %v3527
        %v4737 = vunpack.c.l.b16 %v3528
        %v4738 = vunpack.c.h.b16 %v3528
        %v4739 = vunpack.c.l.b16 %v3529
        %v4740 = vunpack.c.h.b16 %v3529
        %v4741 = vunpack.c.l.b16 %v3530
        %v4742 = vunpack.c.l.b16 %v3531
        %v4743 = vunpack.c.h.b16 %v3531
        %v4744 = vunpack.c.l.b16 %v3532
        %v4745 = vunpack.c.h.b16 %v3532
        %v4746 = vunpack.c.l.b16 %v3533
        %v4747 = vunpack.c.h.b16 %v3533
        %v4748 = vunpack.c.l.b16 %v3534
        %v4749 = vunpack.c.l.b16 %v3535
        %v4750 = vunpack.c.h.b16 %v3535
        %v4751 = vunpack.c.l.b16 %v3536
        %v4752 = vunpack.c.h.b16 %v3536
        %v4753 = vunpack.c.l.b16 %v3537
        %v4754 = vunpack.c.h.b16 %v3537
        %v4755 = vunpack.c.l.b16 %v3538
        %v4756 = vunpack.c.l.b16 %v3539
        %v4757 = vunpack.c.h.b16 %v3539
        %v4758 = vunpack.c.l.b16 %v3540
        %v4759 = vunpack.c.h.b16 %v3540
        %v4760 = vunpack.c.l.b16 %v3541
        %v4761 = vunpack.c.h.b16 %v3541
        %v4762 = vunpack.c.l.b16 %v3542
        %v4763 = vunpack.c.l.b16 %v3543
        %v4764 = vunpack.c.h.b16 %v3543
        %v4765 = vunpack.c.l.b16 %v3544
        %v4766 = vunpack.c.h.b16 %v3544
        %v4767 = vunpack.c.l.b16 %v3545
        %v4768 = vunpack.c.h.b16 %v3545
        %v4769 = vunpack.c.l.b16 %v3546
        %v4770 = vunpack.c.l.b16 %v3547
        %v4771 = vunpack.c.h.b16 %v3547
        %v4772 = vunpack.c.l.b16 %v3548
        %v4773 = vunpack.c.h.b16 %v3548
        %v4774 = vunpack.c.l.b16 %v3549
        %v4775 = vunpack.c.h.b16 %v3549
        %v4776 = vunpack.c.l.b16 %v3550
        %v4777 = vunpack.c.l.b16 %v3551
        %v4778 = vunpack.c.h.b16 %v3551
        %v4779 = vunpack.c.l.b16 %v3552
        %v4780 = vunpack.c.h.b16 %v3552
        %v4781 = vunpack.c.l.b16 %v3553
        %v4782 = vunpack.c.h.b16 %v3553
        %v4783 = vunpack.c.l.b16 %v3554
        %v4784 = vunpack.c.l.b16 %v3555
        %v4785 = vunpack.c.h.b16 %v3555
        %v4786 = vunpack.c.l.b16 %v3556
        %v4787 = vunpack.c.h.b16 %v3556
        %v4788 = vunpack.c.l.b16 %v3557
        %v4789 = vunpack.c.h.b16 %v3557
        %v4790 = vunpack.c.l.b16 %v3558
        %v4791 = vunpack.c.l.b16 %v3559
        %v4792 = vunpack.c.h.b16 %v3559
        %v4793 = vunpack.c.l.b16 %v3560
        %v4794 = vunpack.c.h.b16 %v3560
        %v4795 = vunpack.c.l.b16 %v3561
        %v4796 = vunpack.c.h.b16 %v3561
        %v4797 = vunpack.c.l.b16 %v3562
        %v4798 = vunpack.c.l.b16 %v3563
        %v4799 = vunpack.c.h.b16 %v3563
        %v4800 = vunpack.c.l.b16 %v3564
        %v4801 = vunpack.c.h.b16 %v3564
        %v4802 = vunpack.c.l.b16 %v3565
        %v4803 = vunpack.c.h.b16 %v3565
        %v4804 = vunpack.c.l.b16 %v3566
        %v4805 = vunpack.c.l.b16 %v3567
        %v4806 = vunpack.c.h.b16 %v3567
        %v4807 = vunpack.c.l.b16 %v3568
        %v4808 = vunpack.c.h.b16 %v3568
        %v4809 = vunpack.c.l.b16 %v3569
        %v4810 = vunpack.c.h.b16 %v3569
        %v4811 = vunpack.c.l.b16 %v3570
        %v4812 = vunpack.c.l.b16 %v3571
        %v4813 = vunpack.c.h.b16 %v3571
        %v4814 = vunpack.c.l.b16 %v3572
        %v4815 = vunpack.c.h.b16 %v3572
        %v4816 = vunpack.c.l.b16 %v3573
        %v4817 = vunpack.c.h.b16 %v3573
        %v4818 = vunpack.c.l.b16 %v3574
        %v4819 = vunpack.c.l.b16 %v3575
        %v4820 = vunpack.c.h.b16 %v3575
        %v4821 = vunpack.c.l.b16 %v3576
        %v4822 = vunpack.c.h.b16 %v3576
        %v4823 = vunpack.c.l.b16 %v3577
        %v4824 = vunpack.c.h.b16 %v3577
        %v4825 = vunpack.c.l.b16 %v3578
        %v4826 = vunpack.c.l.b16 %v3579
        %v4827 = vunpack.c.h.b16 %v3579
        %v4828 = vunpack.c.l.b16 %v3580
        %v4829 = vunpack.c.h.b16 %v3580
        %v4830 = vunpack.c.l.b16 %v3581
        %v4831 = vunpack.c.h.b16 %v3581
        %v4832 = vunpack.c.l.b16 %v3582
        %v4833 = vunpack.c.l.b16 %v3583
        %v4834 = vunpack.c.h.b16 %v3583
        %v4835 = vunpack.c.l.b16 %v3584
        %v4836 = vunpack.c.h.b16 %v3584
        %v4837 = vunpack.c.l.b16 %v3585
        %v4838 = vunpack.c.h.b16 %v3585
        %v4839 = vunpack.c.l.b16 %v3586
        %v4840 = vunpack.c.l.b16 %v3587
        %v4841 = vunpack.c.h.b16 %v3587
        %v4842 = vunpack.c.l.b16 %v3588
        %v4843 = vunpack.c.h.b16 %v3588
        %v4844 = vunpack.c.l.b16 %v3589
        %v4845 = vunpack.c.h.b16 %v3589
        %v4846 = vunpack.c.l.b16 %v3590
        %v4847 = vunpack.c.l.b16 %v3591
        %v4848 = vunpack.c.h.b16 %v3591
        %v4849 = vunpack.c.l.b16 %v3592
        %v4850 = vunpack.c.h.b16 %v3592
        %v4851 = vunpack.c.l.b16 %v3593
        %v4852 = vunpack.c.h.b16 %v3593
        %v4853 = vunpack.c.l.b16 %v3594
        %v4854 = vunpack.c.l.b16 %v3595
        %v4855 = vunpack.c.h.b16 %v3595
        %v4856 = vunpack.c.l.b16 %v3596
        %v4857 = vunpack.c.h.b16 %v3596
        %v4858 = vunpack.c.l.b16 %v3597
        %v4859 = vunpack.c.h.b16 %v3597
        %v4860 = vunpack.c.l.b16 %v3598
        %v4861 = vunpack.c.l.b16 %v3599
        %v4862 = vunpack.c.h.b16 %v3599
        %v4863 = vunpack.c.l.b16 %v3600
        %v4864 = vunpack.c.h.b16 %v3600
        %v4865 = vunpack.c.l.b16 %v3601
        %v4866 = vunpack.c.h.b16 %v3601
        %v4867 = vunpack.c.l.b16 %v3602
        %v4868 = vunpack.c.l.b16 %v3603
        %v4869 = vunpack.c.h.b16 %v3603
        %v4870 = vunpack.c.l.b16 %v3604
        %v4871 = vunpack.c.h.b16 %v3604
        %v4872 = vunpack.c.l.b16 %v3605
        %v4873 = vunpack.c.h.b16 %v3605
        %v4874 = vunpack.c.l.b16 %v3606
        %v4875 = vunpack.c.l.b16 %v3607
        %v4876 = vunpack.c.h.b16 %v3607
        %v4877 = vunpack.c.l.b16 %v3608
        %v4878 = vunpack.c.h.b16 %v3608
        %v4879 = vunpack.c.l.b16 %v3609
        %v4880 = vunpack.c.h.b16 %v3609
        %v4881 = vunpack.c.l.b16 %v3610
        %v4882 = vunpack.c.l.b16 %v3611
        %v4883 = vunpack.c.h.b16 %v3611
        %v4884 = vunpack.c.l.b16 %v3612
        %v4885 = vunpack.c.h.b16 %v3612
        %v4886 = vunpack.c.l.b16 %v3613
        %v4887 = vunpack.c.h.b16 %v3613
        %v4888 = vunpack.c.l.b16 %v3614
        %v4889 = vunpack.c.l.b16 %v3615
        %v4890 = vunpack.c.h.b16 %v3615
        %v4891 = vunpack.c.l.b16 %v3616
        %v4892 = vunpack.c.h.b16 %v3616
        %v4893 = vunpack.c.l.b16 %v3617
        %v4894 = vunpack.c.h.b16 %v3617
        %v4895 = vunpack.c.l.b16 %v3618
        %v4896 = vunpack.c.l.b16 %v3619
        %v4897 = vunpack.c.h.b16 %v3619
        %v4898 = vunpack.c.l.b16 %v3620
        %v4899 = vunpack.c.h.b16 %v3620
        %v4900 = vunpack.c.l.b16 %v3621
        %v4901 = vunpack.c.h.b16 %v3621
        %v4902 = vunpack.c.l.b16 %v3622
        %v4903 = vunpack.c.l.b16 %v3623
        %v4904 = vunpack.c.h.b16 %v3623
        %v4905 = vunpack.c.l.b16 %v3624
        %v4906 = vunpack.c.h.b16 %v3624
        %v4907 = vunpack.c.l.b16 %v3625
        %v4908 = vunpack.c.h.b16 %v3625
        %v4909 = vunpack.c.l.b16 %v3626
        %v4910 = vunpack.c.l.b16 %v3627
        %v4911 = vunpack.c.h.b16 %v3627
        %v4912 = vunpack.c.l.b16 %v3628
        %v4913 = vunpack.c.h.b16 %v3628
        %v4914 = vunpack.c.l.b16 %v3629
        %v4915 = vunpack.c.h.b16 %v3629
        %v4916 = vunpack.c.l.b16 %v3630
        %v4917 = vunpack.c.l.b16 %v3631
        %v4918 = vunpack.c.h.b16 %v3631
        %v4919 = vunpack.c.l.b16 %v3632
        %v4920 = vunpack.c.h.b16 %v3632
        %v4921 = vunpack.c.l.b16 %v3633
        %v4922 = vunpack.c.h.b16 %v3633
        %v4923 = vunpack.c.l.b16 %v3634
        %v4924 = vunpack.c.l.b16 %v3635
        %v4925 = vunpack.c.h.b16 %v3635
        %v4926 = vunpack.c.l.b16 %v3636
        %v4927 = vunpack.c.h.b16 %v3636
        %v4928 = vunpack.c.l.b16 %v3637
        %v4929 = vunpack.c.h.b16 %v3637
        %v4930 = vunpack.c.l.b16 %v3638
        %v4931 = vunpack.c.l.b16 %v3639
        %v4932 = vunpack.c.h.b16 %v3639
        %v4933 = vunpack.c.l.b16 %v3640
        %v4934 = vunpack.c.h.b16 %v3640
        %v4935 = vunpack.c.l.b16 %v3641
        %v4936 = vunpack.c.h.b16 %v3641
        %v4937 = vunpack.c.l.b16 %v3642
        %v4938 = vunpack.c.l.b16 %v3643
        %v4939 = vunpack.c.h.b16 %v3643
        %v4940 = vunpack.c.l.b16 %v3644
        %v4941 = vunpack.c.h.b16 %v3644
        %v4942 = vunpack.c.l.b16 %v3645
        %v4943 = vunpack.c.h.b16 %v3645
        %v4944 = vunpack.c.l.b16 %v3646
        %v4945 = vunpack.c.l.b16 %v3647
        %v4946 = vunpack.c.h.b16 %v3647
        %v4947 = vunpack.c.l.b16 %v3648
        %v4948 = vunpack.c.h.b16 %v3648
        %v4949 = vunpack.c.l.b16 %v3649
        %v4950 = vunpack.c.h.b16 %v3649
        %v4951 = vunpack.c.l.b16 %v3650
        %v4952 = vunpack.c.l.b16 %v3651
        %v4953 = vunpack.c.h.b16 %v3651
        %v4954 = vunpack.c.l.b16 %v3652
        %v4955 = vunpack.c.h.b16 %v3652
        %v4956 = vunpack.c.l.b16 %v3653
        %v4957 = vunpack.c.h.b16 %v3653
        %v4958 = vunpack.c.l.b16 %v3654
        %v4959 = vunpack.c.l.b16 %v3655
        %v4960 = vunpack.c.h.b16 %v3655
        %v4961 = vunpack.c.l.b16 %v3656
        %v4962 = vunpack.c.h.b16 %v3656
        %v4963 = vunpack.c.l.b16 %v3657
        %v4964 = vunpack.c.h.b16 %v3657
        %v4965 = vunpack.c.l.b16 %v3658
        %v4966 = vunpack.c.l.b16 %v3659
        %v4967 = vunpack.c.h.b16 %v3659
        %v4968 = vunpack.c.l.b16 %v3660
        %v4969 = vunpack.c.h.b16 %v3660
        %v4970 = vunpack.c.l.b16 %v3661
        %v4971 = vunpack.c.h.b16 %v3661
        %v4972 = vunpack.c.l.b16 %v3662
        %v4973 = vunpack.c.l.b16 %v3663
        %v4974 = vunpack.c.h.b16 %v3663
        %v4975 = vunpack.c.l.b16 %v3664
        %v4976 = vunpack.c.h.b16 %v3664
        %v4977 = vunpack.c.l.b16 %v3665
        %v4978 = vunpack.c.h.b16 %v3665
        %v4979 = vunpack.c.l.b16 %v3666
        %v4980 = vunpack.c.l.b16 %v3667
        %v4981 = vunpack.c.h.b16 %v3667
        %v4982 = vunpack.c.l.b16 %v3668
        %v4983 = vunpack.c.h.b16 %v3668
        %v4984 = vunpack.c.l.b16 %v3669
        %v4985 = vunpack.c.h.b16 %v3669
        %v4986 = vunpack.c.l.b16 %v3670
        %v4987 = vunpack.c.l.b16 %v3671
        %v4988 = vunpack.c.h.b16 %v3671
        %v4989 = vunpack.c.l.b16 %v3672
        %v4990 = vunpack.c.h.b16 %v3672
        %v4991 = vunpack.c.l.b16 %v3673
        %v4992 = vunpack.c.h.b16 %v3673
        %v4993 = vunpack.c.l.b16 %v3674
        %v4994 = vunpack.c.l.b16 %v3675
        %v4995 = vunpack.c.h.b16 %v3675
        %v4996 = vunpack.c.l.b16 %v3676
        %v4997 = vunpack.c.h.b16 %v3676
        %v4998 = vunpack.c.l.b16 %v3677
        %v4999 = vunpack.c.h.b16 %v3677
        %v5000 = vunpack.c.l.b16 %v3678
        %v5001 = vunpack.c.l.b16 %v3679
        %v5002 = vunpack.c.h.b16 %v3679
        %v5003 = vunpack.c.l.b16 %v3680
        %v5004 = vunpack.c.h.b16 %v3680
        %v5005 = vunpack.c.l.b16 %v3681
        %v5006 = vunpack.c.h.b16 %v3681
        %v5007 = vunpack.c.l.b16 %v3682
        %v5008 = vunpack.c.l.b16 %v3683
        %v5009 = vunpack.c.h.b16 %v3683
        %v5010 = vunpack.c.l.b16 %v3684
        %v5011 = vunpack.c.h.b16 %v3684
        %v5012 = vunpack.c.l.b16 %v3685
        %v5013 = vunpack.c.h.b16 %v3685
        %v5014 = vunpack.c.l.b16 %v3686
        %v5015 = vunpack.c.l.b16 %v3687
        %v5016 = vunpack.c.h.b16 %v3687
        %v5017 = vunpack.c.l.b16 %v3688
        %v5018 = vunpack.c.h.b16 %v3688
        %v5019 = vunpack.c.l.b16 %v3689
        %v5020 = vunpack.c.h.b16 %v3689
        %v5021 = vunpack.c.l.b16 %v3690
        %v5022 = vunpack.c.l.b16 %v3691
        %v5023 = vunpack.c.h.b16 %v3691
        %v5024 = vunpack.c.l.b16 %v3692
        %v5025 = vunpack.c.h.b16 %v3692
        %v5026 = vunpack.c.l.b16 %v3693
        %v5027 = vunpack.c.h.b16 %v3693
        %v5028 = vunpack.c.l.b16 %v3694
        %v5029 = vunpack.c.l.b16 %v3695
        %v5030 = vunpack.c.h.b16 %v3695
        %v5031 = vunpack.c.l.b16 %v3696
        %v5032 = vunpack.c.h.b16 %v3696
        %v5033 = vunpack.c.l.b16 %v3697
        %v5034 = vunpack.c.h.b16 %v3697
        %v5035 = vunpack.c.l.b16 %v3698
        %v5036 = vunpack.c.l.b16 %v3699
        %v5037 = vunpack.c.h.b16 %v3699
        %v5038 = vunpack.c.l.b16 %v3700
        %v5039 = vunpack.c.h.b16 %v3700
        %v5040 = vunpack.c.l.b16 %v3701
        %v5041 = vunpack.c.h.b16 %v3701
        %v5042 = vunpack.c.l.b16 %v3702
        %v5043 = vunpack.c.l.b16 %v3703
        %v5044 = vunpack.c.h.b16 %v3703
        %v5045 = vunpack.c.l.b16 %v3704
        %v5046 = vunpack.c.h.b16 %v3704
        %v5047 = vunpack.c.l.b16 %v3705
        %v5048 = vunpack.c.h.b16 %v3705
        %v5049 = vunpack.c.l.b16 %v3706
        %v5050 = vunpack.c.l.b16 %v3707
        %v5051 = vunpack.c.h.b16 %v3707
        %v5052 = vunpack.c.l.b16 %v3708
        %v5053 = vunpack.c.h.b16 %v3708
        %v5054 = vunpack.c.l.b16 %v3709
        %v5055 = vunpack.c.h.b16 %v3709
        %v5056 = vunpack.c.l.b16 %v3710
        %v5057 = vunpack.c.l.b16 %v3711
        %v5058 = vunpack.c.h.b16 %v3711
        %v5059 = vunpack.c.l.b16 %v3712
        %v5060 = vunpack.c.h.b16 %v3712
        %v5061 = vunpack.c.l.b16 %v3713
        %v5062 = vunpack.c.h.b16 %v3713
        %v5063 = vunpack.c.l.b16 %v3714
        %v5064 = vunpack.c.l.b16 %v3715
        %v5065 = vunpack.c.h.b16 %v3715
        %v5066 = vunpack.c.l.b16 %v3716
        %v5067 = vunpack.c.h.b16 %v3716
        %v5068 = vunpack.c.l.b16 %v3717
        %v5069 = vunpack.c.h.b16 %v3717
        %v5070 = vunpack.c.l.b16 %v3718
        %v5071 = vunpack.c.l.b16 %v3719
        %v5072 = vunpack.c.h.b16 %v3719
        %v5073 = vunpack.c.l.b16 %v3720
        %v5074 = vunpack.c.h.b16 %v3720
        %v5075 = vunpack.c.l.b16 %v3721
        %v5076 = vunpack.c.h.b16 %v3721
        %v5077 = vunpack.c.l.b16 %v3722
        %v5078 = vunpack.c.l.b16 %v3723
        %v5079 = vunpack.c.h.b16 %v3723
        %v5080 = vunpack.c.l.b16 %v3724
        %v5081 = vunpack.c.h.b16 %v3724
        %v5082 = vunpack.c.l.b16 %v3725
        %v5083 = vunpack.c.h.b16 %v3725
        %v5084 = vunpack.c.l.b16 %v3726
        %v5085 = vunpack.c.l.b16 %v3727
        %v5086 = vunpack.c.h.b16 %v3727
        %v5087 = vunpack.c.l.b16 %v3728
        %v5088 = vunpack.c.h.b16 %v3728
        %v5089 = vunpack.c.l.b16 %v3729
        %v5090 = vunpack.c.h.b16 %v3729
        %v5091 = vunpack.c.l.b16 %v3730
        %v5092 = vunpack.c.l.b16 %v3731
        %v5093 = vunpack.c.h.b16 %v3731
        %v5094 = vunpack.c.l.b16 %v3732
        %v5095 = vunpack.c.h.b16 %v3732
        %v5096 = vunpack.c.l.b16 %v3733
        %v5097 = vunpack.c.h.b16 %v3733
        %v5098 = vunpack.c.l.b16 %v3734
        %v5099 = vunpack.c.l.b16 %v3735
        %v5100 = vunpack.c.h.b16 %v3735
        %v5101 = vunpack.c.l.b16 %v3736
        %v5102 = vunpack.c.h.b16 %v3736
        %v5103 = vunpack.c.l.b16 %v3737
        %v5104 = vunpack.c.h.b16 %v3737
        %v5105 = vunpack.c.l.b16 %v3738
        %v5106 = vunpack.c.l.b16 %v3739
        %v5107 = vunpack.c.h.b16 %v3739
        %v5108 = vunpack.c.l.b16 %v3740
        %v5109 = vunpack.c.h.b16 %v3740
        %v5110 = vunpack.c.l.b16 %v3741
        %v5111 = vunpack.c.h.b16 %v3741
        %v5112 = vunpack.c.l.b16 %v3742
        %v5113 = vunpack.c.l.b16 %v3743
        %v5114 = vunpack.c.h.b16 %v3743
        %v5115 = vunpack.c.l.b16 %v3744
        %v5116 = vunpack.c.h.b16 %v3744
        %v5117 = vunpack.c.l.b16 %v3745
        %v5118 = vunpack.c.h.b16 %v3745
        %v5119 = vunpack.c.l.b16 %v3746
        %v5120 = vunpack.c.l.b16 %v3747
        %v5121 = vunpack.c.h.b16 %v3747
        %v5122 = vunpack.c.l.b16 %v3748
        %v5123 = vunpack.c.h.b16 %v3748
        %v5124 = vunpack.c.l.b16 %v3749
        %v5125 = vunpack.c.h.b16 %v3749
        %v5126 = vunpack.c.l.b16 %v3750
        %v5127 = vunpack.c.l.b16 %v3751
        %v5128 = vunpack.c.h.b16 %v3751
        %v5129 = vunpack.c.l.b16 %v3752
        %v5130 = vunpack.c.h.b16 %v3752
        %v5131 = vunpack.c.l.b16 %v3753
        %v5132 = vunpack.c.h.b16 %v3753
        %v5133 = vunpack.c.l.b16 %v3754
        %v5134 = vunpack.c.l.b16 %v3755
        %v5135 = vunpack.c.h.b16 %v3755
        %v5136 = vunpack.c.l.b16 %v3756
        %v5137 = vunpack.c.h.b16 %v3756
        %v5138 = vunpack.c.l.b16 %v3757
        %v5139 = vunpack.c.h.b16 %v3757
        %v5140 = vunpack.c.l.b16 %v3758
        %v5141 = vunpack.c.l.b16 %v3759
        %v5142 = vunpack.c.h.b16 %v3759
        %v5143 = vunpack.c.l.b16 %v3760
        %v5144 = vunpack.c.h.b16 %v3760
        %v5145 = vunpack.c.l.b16 %v3761
        %v5146 = vunpack.c.h.b16 %v3761
        %v5147 = vunpack.c.l.b16 %v3762
        %v5148 = vunpack.c.l.b16 %v3763
        %v5149 = vunpack.c.h.b16 %v3763
        %v5150 = vunpack.c.l.b16 %v3764
        %v5151 = vunpack.c.h.b16 %v3764
        %v5152 = vunpack.c.l.b16 %v3765
        %v5153 = vunpack.c.h.b16 %v3765
        %v5154 = vunpack.c.l.b16 %v3766
        %v5155 = vunpack.c.l.b16 %v3767
        %v5156 = vunpack.c.h.b16 %v3767
        %v5157 = vunpack.c.l.b16 %v3768
        %v5158 = vunpack.c.h.b16 %v3768
        %v5159 = vunpack.c.l.b16 %v3769
        %v5160 = vunpack.c.h.b16 %v3769
        %v5161 = vunpack.c.l.b16 %v3770
        %v5162 = vunpack.c.l.b16 %v3771
        %v5163 = vunpack.c.h.b16 %v3771
        %v5164 = vunpack.c.l.b16 %v3772
        %v5165 = vunpack.c.h.b16 %v3772
        %v5166 = vunpack.c.l.b16 %v3773
        %v5167 = vunpack.c.h.b16 %v3773
        %v5168 = vunpack.c.l.b16 %v3774
        %v5169 = vunpack.c.l.b16 %v3775
        %v5170 = vunpack.c.h.b16 %v3775
        %v5171 = vunpack.c.l.b16 %v3776
        %v5172 = vunpack.c.h.b16 %v3776
        %v5173 = vunpack.c.l.b16 %v3777
        %v5174 = vunpack.c.h.b16 %v3777
        %v5175 = vunpack.c.l.b16 %v3778
        %v5176 = vunpack.c.l.b16 %v3779
        %v5177 = vunpack.c.h.b16 %v3779
        %v5178 = vunpack.c.l.b16 %v3780
        %v5179 = vunpack.c.h.b16 %v3780
        %v5180 = vunpack.c.l.b16 %v3781
        %v5181 = vunpack.c.h.b16 %v3781
        %v5182 = vunpack.c.l.b16 %v3782
        %v5183 = vunpack.c.l.b16 %v3783
        %v5184 = vunpack.c.h.b16 %v3783
        %v5185 = vunpack.c.l.b16 %v3784
        %v5186 = vunpack.c.h.b16 %v3784
        %v5187 = vunpack.c.l.b16 %v3785
        %v5188 = vunpack.c.h.b16 %v3785
        %v5189 = vunpack.c.l.b16 %v3786
        %v5190 = vunpack.c.l.b16 %v3787
        %v5191 = vunpack.c.h.b16 %v3787
        %v5192 = vunpack.c.l.b16 %v3788
        %v5193 = vunpack.c.h.b16 %v3788
        %v5194 = vunpack.c.l.b16 %v3789
        %v5195 = vunpack.c.h.b16 %v3789
        %v5196 = vunpack.c.l.b16 %v3790
        %v5197 = vunpack.c.l.b16 %v3791
        %v5198 = vunpack.c.h.b16 %v3791
        %v5199 = vunpack.c.l.b16 %v3792
        %v5200 = vunpack.c.h.b16 %v3792
        %v5201 = vunpack.c.l.b16 %v3793
        %v5202 = vunpack.c.h.b16 %v3793
        %v5203 = vunpack.c.l.b16 %v3794
        %v5204 = vunpack.c.l.b16 %v3795
        %v5205 = vunpack.c.h.b16 %v3795
        %v5206 = vunpack.c.l.b16 %v3796
        %v5207 = vunpack.c.h.b16 %v3796
        %v5208 = vunpack.c.l.b16 %v3797
        %v5209 = vunpack.c.h.b16 %v3797
        %v5210 = vunpack.c.l.b16 %v3798
        %v5211 = vunpack.c.l.b16 %v3799
        %v5212 = vunpack.c.h.b16 %v3799
        %v5213 = vunpack.c.l.b16 %v3800
        %v5214 = vunpack.c.h.b16 %v3800
        %v5215 = vunpack.c.l.b16 %v3801
        %v5216 = vunpack.c.h.b16 %v3801
        %v5217 = vunpack.c.l.b16 %v3802
        %v5218 = vunpack.c.l.b16 %v3803
        %v5219 = vunpack.c.h.b16 %v3803
        %v5220 = vunpack.c.l.b16 %v3804
        %v5221 = vunpack.c.h.b16 %v3804
        %v5222 = vunpack.c.l.b16 %v3805
        %v5223 = vunpack.c.h.b16 %v3805
        %v5224 = vunpack.c.l.b16 %v3806
        %v5225 = vunpack.c.l.b16 %v3807
        %v5226 = vunpack.c.h.b16 %v3807
        %v5227 = vunpack.c.l.b16 %v3808
        %v5228 = vunpack.c.h.b16 %v3808
        %v5229 = vunpack.c.l.b16 %v3809
        %v5230 = vunpack.c.h.b16 %v3809
        %v5231 = vunpack.c.l.b16 %v3810
        %v5232 = vunpack.c.l.b16 %v3811
        %v5233 = vunpack.c.h.b16 %v3811
        %v5234 = vunpack.c.l.b16 %v3812
        %v5235 = vunpack.c.h.b16 %v3812
        %v5236 = vunpack.c.l.b16 %v3813
        %v5237 = vunpack.c.h.b16 %v3813
        %v5238 = vunpack.c.l.b16 %v3814
        %v5239 = vunpack.c.l.b16 %v3815
        %v5240 = vunpack.c.h.b16 %v3815
        %v5241 = vunpack.c.l.b16 %v3816
        %v5242 = vunpack.c.h.b16 %v3816
        %v5243 = vunpack.c.l.b16 %v3817
        %v5244 = vunpack.c.h.b16 %v3817
        %v5245 = vunpack.c.l.b16 %v3818
        %v5246 = vunpack.c.l.b16 %v3819
        %v5247 = vunpack.c.h.b16 %v3819
        %v5248 = vunpack.c.l.b16 %v3820
        %v5249 = vunpack.c.h.b16 %v3820
        %v5250 = vunpack.c.l.b16 %v3821
        %v5251 = vunpack.c.h.b16 %v3821
        %v5252 = vunpack.c.l.b16 %v3822
        %v5253 = vunpack.c.l.b16 %v3823
        %v5254 = vunpack.c.h.b16 %v3823
        %v5255 = vunpack.c.l.b16 %v3824
        %v5256 = vunpack.c.h.b16 %v3824
        %v5257 = vunpack.c.l.b16 %v3825
        %v5258 = vunpack.c.h.b16 %v3825
        %v5259 = vunpack.c.l.b16 %v3826
        %v5260 = vunpack.c.l.b16 %v3827
        %v5261 = vunpack.c.h.b16 %v3827
        %v5262 = vunpack.c.l.b16 %v3828
        %v5263 = vunpack.c.h.b16 %v3828
        %v5264 = vunpack.c.l.b16 %v3829
        %v5265 = vunpack.c.h.b16 %v3829
        %v5266 = vunpack.c.l.b16 %v3830
        %v5267 = vunpack.c.l.b16 %v3831
        %v5268 = vunpack.c.h.b16 %v3831
        %v5269 = vunpack.c.l.b16 %v3832
        %v5270 = vunpack.c.h.b16 %v3832
        %v5271 = vunpack.c.l.b16 %v3833
        %v5272 = vunpack.c.h.b16 %v3833
        %v5273 = vunpack.c.l.b16 %v3834
        %v5274 = vunpack.c.l.b16 %v3835
        %v5275 = vunpack.c.h.b16 %v3835
        %v5276 = vunpack.c.l.b16 %v3836
        %v5277 = vunpack.c.h.b16 %v3836
        %v5278 = vunpack.c.l.b16 %v3837
        %v5279 = vunpack.c.h.b16 %v3837
        %v5280 = vunpack.c.l.b16 %v3838
        %v5281 = vunpack.c.l.b16 %v3839
        %v5282 = vunpack.c.h.b16 %v3839
        %v5283 = vunpack.c.l.b16 %v3840
        %v5284 = vunpack.c.h.b16 %v3840
        %v5285 = vunpack.c.l.b16 %v3841
        %v5286 = vunpack.c.h.b16 %v3841
        %v5287 = vunpack.c.l.b16 %v3842
        %v5288 = vpack.c.b16 %v4399, %v4392
        %v5289 = vpack.c.b16 %v4400, %v4393
        %v5290 = vpack.c.b16 %v4401, %v4394
        %v5291 = vpack.c.b16 %v4402, %v4395
        %v5292 = vpack.c.b16 %v4403, %v4396
        %v5293 = vpack.c.b16 %v4404, %v4397
        %v5294 = vpack.c.b16 %v4405, %v4398
        %v5295 = vpack.c.b16 %v4413, %v4406
        %v5296 = vpack.c.b16 %v4414, %v4407
        %v5297 = vpack.c.b16 %v4415, %v4408
        %v5298 = vpack.c.b16 %v4416, %v4409
        %v5299 = vpack.c.b16 %v4417, %v4410
        %v5300 = vpack.c.b16 %v4418, %v4411
        %v5301 = vpack.c.b16 %v4419, %v4412
        %v5302 = vpack.c.b16 %v4427, %v4420
        %v5303 = vpack.c.b16 %v4428, %v4421
        %v5304 = vpack.c.b16 %v4429, %v4422
        %v5305 = vpack.c.b16 %v4430, %v4423
        %v5306 = vpack.c.b16 %v4431, %v4424
        %v5307 = vpack.c.b16 %v4432, %v4425
        %v5308 = vpack.c.b16 %v4433, %v4426
        %v5309 = vpack.c.b16 %v4441, %v4434
        %v5310 = vpack.c.b16 %v4442, %v4435
        %v5311 = vpack.c.b16 %v4443, %v4436
        %v5312 = vpack.c.b16 %v4444, %v4437
        %v5313 = vpack.c.b16 %v4445, %v4438
        %v5314 = vpack.c.b16 %v4446, %v4439
        %v5315 = vpack.c.b16 %v4447, %v4440
        %v5316 = vpack.c.b16 %v4455, %v4448
        %v5317 = vpack.c.b16 %v4456, %v4449
        %v5318 = vpack.c.b16 %v4457, %v4450
        %v5319 = vpack.c.b16 %v4458, %v4451
        %v5320 = vpack.c.b16 %v4459, %v4452
        %v5321 = vpack.c.b16 %v4460, %v4453
        %v5322 = vpack.c.b16 %v4461, %v4454
        %v5323 = vpack.c.b16 %v4469, %v4462
        %v5324 = vpack.c.b16 %v4470, %v4463
        %v5325 = vpack.c.b16 %v4471, %v4464
        %v5326 = vpack.c.b16 %v4472, %v4465
        %v5327 = vpack.c.b16 %v4473, %v4466
        %v5328 = vpack.c.b16 %v4474, %v4467
        %v5329 = vpack.c.b16 %v4475, %v4468
        %v5330 = vpack.c.b16 %v4483, %v4476
        %v5331 = vpack.c.b16 %v4484, %v4477
        %v5332 = vpack.c.b16 %v4485, %v4478
        %v5333 = vpack.c.b16 %v4486, %v4479
        %v5334 = vpack.c.b16 %v4487, %v4480
        %v5335 = vpack.c.b16 %v4488, %v4481
        %v5336 = vpack.c.b16 %v4489, %v4482
        %v5337 = vpack.c.b16 %v4497, %v4490
        %v5338 = vpack.c.b16 %v4498, %v4491
        %v5339 = vpack.c.b16 %v4499, %v4492
        %v5340 = vpack.c.b16 %v4500, %v4493
        %v5341 = vpack.c.b16 %v4501, %v4494
        %v5342 = vpack.c.b16 %v4502, %v4495
        %v5343 = vpack.c.b16 %v4503, %v4496
        %v5344 = vpack.c.b16 %v4511, %v4504
        %v5345 = vpack.c.b16 %v4512, %v4505
        %v5346 = vpack.c.b16 %v4513, %v4506
        %v5347 = vpack.c.b16 %v4514, %v4507
        %v5348 = vpack.c.b16 %v4515, %v4508
        %v5349 = vpack.c.b16 %v4516, %v4509
        %v5350 = vpack.c.b16 %v4517, %v4510
        %v5351 = vpack.c.b16 %v4525, %v4518
        %v5352 = vpack.c.b16 %v4526, %v4519
        %v5353 = vpack.c.b16 %v4527, %v4520
        %v5354 = vpack.c.b16 %v4528, %v4521
        %v5355 = vpack.c.b16 %v4529, %v4522
        %v5356 = vpack.c.b16 %v4530, %v4523
        %v5357 = vpack.c.b16 %v4531, %v4524
        %v5358 = vpack.c.b16 %v4539, %v4532
        %v5359 = vpack.c.b16 %v4540, %v4533
        %v5360 = vpack.c.b16 %v4541, %v4534
        %v5361 = vpack.c.b16 %v4542, %v4535
        %v5362 = vpack.c.b16 %v4543, %v4536
        %v5363 = vpack.c.b16 %v4544, %v4537
        %v5364 = vpack.c.b16 %v4545, %v4538
        %v5365 = vpack.c.b16 %v4553, %v4546
        %v5366 = vpack.c.b16 %v4554, %v4547
        %v5367 = vpack.c.b16 %v4555, %v4548
        %v5368 = vpack.c.b16 %v4556, %v4549
        %v5369 = vpack.c.b16 %v4557, %v4550
        %v5370 = vpack.c.b16 %v4558, %v4551
        %v5371 = vpack.c.b16 %v4559, %v4552
        %v5372 = vpack.c.b16 %v4567, %v4560
        %v5373 = vpack.c.b16 %v4568, %v4561
        %v5374 = vpack.c.b16 %v4569, %v4562
        %v5375 = vpack.c.b16 %v4570, %v4563
        %v5376 = vpack.c.b16 %v4571, %v4564
        %v5377 = vpack.c.b16 %v4572, %v4565
        %v5378 = vpack.c.b16 %v4573, %v4566
        %v5379 = vpack.c.b16 %v4581, %v4574
        %v5380 = vpack.c.b16 %v4582, %v4575
        %v5381 = vpack.c.b16 %v4583, %v4576
        %v5382 = vpack.c.b16 %v4584, %v4577
        %v5383 = vpack.c.b16 %v4585, %v4578
        %v5384 = vpack.c.b16 %v4586, %v4579
        %v5385 = vpack.c.b16 %v4587, %v4580
        %v5386 = vpack.c.b16 %v4595, %v4588
        %v5387 = vpack.c.b16 %v4596, %v4589
        %v5388 = vpack.c.b16 %v4597, %v4590
        %v5389 = vpack.c.b16 %v4598, %v4591
        %v5390 = vpack.c.b16 %v4599, %v4592
        %v5391 = vpack.c.b16 %v4600, %v4593
        %v5392 = vpack.c.b16 %v4601, %v4594
        %v5393 = vpack.c.b16 %v4609, %v4602
        %v5394 = vpack.c.b16 %v4610, %v4603
        %v5395 = vpack.c.b16 %v4611, %v4604
        %v5396 = vpack.c.b16 %v4612, %v4605
        %v5397 = vpack.c.b16 %v4613, %v4606
        %v5398 = vpack.c.b16 %v4614, %v4607
        %v5399 = vpack.c.b16 %v4615, %v4608
        %v5400 = vpack.c.b16 %v4623, %v4616
        %v5401 = vpack.c.b16 %v4624, %v4617
        %v5402 = vpack.c.b16 %v4625, %v4618
        %v5403 = vpack.c.b16 %v4626, %v4619
        %v5404 = vpack.c.b16 %v4627, %v4620
        %v5405 = vpack.c.b16 %v4628, %v4621
        %v5406 = vpack.c.b16 %v4629, %v4622
        %v5407 = vpack.c.b16 %v4637, %v4630
        %v5408 = vpack.c.b16 %v4638, %v4631
        %v5409 = vpack.c.b16 %v4639, %v4632
        %v5410 = vpack.c.b16 %v4640, %v4633
        %v5411 = vpack.c.b16 %v4641, %v4634
        %v5412 = vpack.c.b16 %v4642, %v4635
        %v5413 = vpack.c.b16 %v4643, %v4636
        %v5414 = vpack.c.b16 %v4651, %v4644
        %v5415 = vpack.c.b16 %v4652, %v4645
        %v5416 = vpack.c.b16 %v4653, %v4646
        %v5417 = vpack.c.b16 %v4654, %v4647
        %v5418 = vpack.c.b16 %v4655, %v4648
        %v5419 = vpack.c.b16 %v4656, %v4649
        %v5420 = vpack.c.b16 %v4657, %v4650
        %v5421 = vpack.c.b16 %v4665, %v4658
        %v5422 = vpack.c.b16 %v4666, %v4659
        %v5423 = vpack.c.b16 %v4667, %v4660
        %v5424 = vpack.c.b16 %v4668, %v4661
        %v5425 = vpack.c.b16 %v4669, %v4662
        %v5426 = vpack.c.b16 %v4670, %v4663
        %v5427 = vpack.c.b16 %v4671, %v4664
        %v5428 = vpack.c.b16 %v4679, %v4672
        %v5429 = vpack.c.b16 %v4680, %v4673
        %v5430 = vpack.c.b16 %v4681, %v4674
        %v5431 = vpack.c.b16 %v4682, %v4675
        %v5432 = vpack.c.b16 %v4683, %v4676
        %v5433 = vpack.c.b16 %v4684, %v4677
        %v5434 = vpack.c.b16 %v4685, %v4678
        %v5435 = vpack.c.b16 %v4693, %v4686
        %v5436 = vpack.c.b16 %v4694, %v4687
        %v5437 = vpack.c.b16 %v4695, %v4688
        %v5438 = vpack.c.b16 %v4696, %v4689
        %v5439 = vpack.c.b16 %v4697, %v4690
        %v5440 = vpack.c.b16 %v4698, %v4691
        %v5441 = vpack.c.b16 %v4699, %v4692
        %v5442 = vpack.c.b16 %v4707, %v4700
        %v5443 = vpack.c.b16 %v4708, %v4701
        %v5444 = vpack.c.b16 %v4709, %v4702
        %v5445 = vpack.c.b16 %v4710, %v4703
        %v5446 = vpack.c.b16 %v4711, %v4704
        %v5447 = vpack.c.b16 %v4712, %v4705
        %v5448 = vpack.c.b16 %v4713, %v4706
        %v5449 = vpack.c.b16 %v4721, %v4714
        %v5450 = vpack.c.b16 %v4722, %v4715
        %v5451 = vpack.c.b16 %v4723, %v4716
        %v5452 = vpack.c.b16 %v4724, %v4717
        %v5453 = vpack.c.b16 %v4725, %v4718
        %v5454 = vpack.c.b16 %v4726, %v4719
        %v5455 = vpack.c.b16 %v4727, %v4720
        %v5456 = vpack.c.b16 %v4735, %v4728
        %v5457 = vpack.c.b16 %v4736, %v4729
        %v5458 = vpack.c.b16 %v4737, %v4730
        %v5459 = vpack.c.b16 %v4738, %v4731
        %v5460 = vpack.c.b16 %v4739, %v4732
        %v5461 = vpack.c.b16 %v4740, %v4733
        %v5462 = vpack.c.b16 %v4741, %v4734
        %v5463 = vpack.c.b16 %v4749, %v4742
        %v5464 = vpack.c.b16 %v4750, %v4743
        %v5465 = vpack.c.b16 %v4751, %v4744
        %v5466 = vpack.c.b16 %v4752, %v4745
        %v5467 = vpack.c.b16 %v4753, %v4746
        %v5468 = vpack.c.b16 %v4754, %v4747
        %v5469 = vpack.c.b16 %v4755, %v4748
        %v5470 = vpack.c.b16 %v4763, %v4756
        %v5471 = vpack.c.b16 %v4764, %v4757
        %v5472 = vpack.c.b16 %v4765, %v4758
        %v5473 = vpack.c.b16 %v4766, %v4759
        %v5474 = vpack.c.b16 %v4767, %v4760
        %v5475 = vpack.c.b16 %v4768, %v4761
        %v5476 = vpack.c.b16 %v4769, %v4762
        %v5477 = vpack.c.b16 %v4777, %v4770
        %v5478 = vpack.c.b16 %v4778, %v4771
        %v5479 = vpack.c.b16 %v4779, %v4772
        %v5480 = vpack.c.b16 %v4780, %v4773
        %v5481 = vpack.c.b16 %v4781, %v4774
        %v5482 = vpack.c.b16 %v4782, %v4775
        %v5483 = vpack.c.b16 %v4783, %v4776
        %v5484 = vpack.c.b16 %v4791, %v4784
        %v5485 = vpack.c.b16 %v4792, %v4785
        %v5486 = vpack.c.b16 %v4793, %v4786
        %v5487 = vpack.c.b16 %v4794, %v4787
        %v5488 = vpack.c.b16 %v4795, %v4788
        %v5489 = vpack.c.b16 %v4796, %v4789
        %v5490 = vpack.c.b16 %v4797, %v4790
        %v5491 = vpack.c.b16 %v4805, %v4798
        %v5492 = vpack.c.b16 %v4806, %v4799
        %v5493 = vpack.c.b16 %v4807, %v4800
        %v5494 = vpack.c.b16 %v4808, %v4801
        %v5495 = vpack.c.b16 %v4809, %v4802
        %v5496 = vpack.c.b16 %v4810, %v4803
        %v5497 = vpack.c.b16 %v4811, %v4804
        %v5498 = vpack.c.b16 %v4819, %v4812
        %v5499 = vpack.c.b16 %v4820, %v4813
        %v5500 = vpack.c.b16 %v4821, %v4814
        %v5501 = vpack.c.b16 %v4822, %v4815
        %v5502 = vpack.c.b16 %v4823, %v4816
        %v5503 = vpack.c.b16 %v4824, %v4817
        %v5504 = vpack.c.b16 %v4825, %v4818
        %v5505 = vpack.c.b16 %v4833, %v4826
        %v5506 = vpack.c.b16 %v4834, %v4827
        %v5507 = vpack.c.b16 %v4835, %v4828
        %v5508 = vpack.c.b16 %v4836, %v4829
        %v5509 = vpack.c.b16 %v4837, %v4830
        %v5510 = vpack.c.b16 %v4838, %v4831
        %v5511 = vpack.c.b16 %v4839, %v4832
        %v5512 = vpack.c.b16 %v4847, %v4840
        %v5513 = vpack.c.b16 %v4848, %v4841
        %v5514 = vpack.c.b16 %v4849, %v4842
        %v5515 = vpack.c.b16 %v4850, %v4843
        %v5516 = vpack.c.b16 %v4851, %v4844
        %v5517 = vpack.c.b16 %v4852, %v4845
        %v5518 = vpack.c.b16 %v4853, %v4846
        %v5519 = vpack.c.b16 %v4861, %v4854
        %v5520 = vpack.c.b16 %v4862, %v4855
        %v5521 = vpack.c.b16 %v4863, %v4856
        %v5522 = vpack.c.b16 %v4864, %v4857
        %v5523 = vpack.c.b16 %v4865, %v4858
        %v5524 = vpack.c.b16 %v4866, %v4859
        %v5525 = vpack.c.b16 %v4867, %v4860
        %v5526 = vpack.c.b16 %v4875, %v4868
        %v5527 = vpack.c.b16 %v4876, %v4869
        %v5528 = vpack.c.b16 %v4877, %v4870
        %v5529 = vpack.c.b16 %v4878, %v4871
        %v5530 = vpack.c.b16 %v4879, %v4872
        %v5531 = vpack.c.b16 %v4880, %v4873
        %v5532 = vpack.c.b16 %v4881, %v4874
        %v5533 = vpack.c.b16 %v4889, %v4882
        %v5534 = vpack.c.b16 %v4890, %v4883
        %v5535 = vpack.c.b16 %v4891, %v4884
        %v5536 = vpack.c.b16 %v4892, %v4885
        %v5537 = vpack.c.b16 %v4893, %v4886
        %v5538 = vpack.c.b16 %v4894, %v4887
        %v5539 = vpack.c.b16 %v4895, %v4888
        %v5540 = vpack.c.b16 %v4903, %v4896
        %v5541 = vpack.c.b16 %v4904, %v4897
        %v5542 = vpack.c.b16 %v4905, %v4898
        %v5543 = vpack.c.b16 %v4906, %v4899
        %v5544 = vpack.c.b16 %v4907, %v4900
        %v5545 = vpack.c.b16 %v4908, %v4901
        %v5546 = vpack.c.b16 %v4909, %v4902
        %v5547 = vpack.c.b16 %v4917, %v4910
        %v5548 = vpack.c.b16 %v4918, %v4911
        %v5549 = vpack.c.b16 %v4919, %v4912
        %v5550 = vpack.c.b16 %v4920, %v4913
        %v5551 = vpack.c.b16 %v4921, %v4914
        %v5552 = vpack.c.b16 %v4922, %v4915
        %v5553 = vpack.c.b16 %v4923, %v4916
        %v5554 = vpack.c.b16 %v4931, %v4924
        %v5555 = vpack.c.b16 %v4932, %v4925
        %v5556 = vpack.c.b16 %v4933, %v4926
        %v5557 = vpack.c.b16 %v4934, %v4927
        %v5558 = vpack.c.b16 %v4935, %v4928
        %v5559 = vpack.c.b16 %v4936, %v4929
        %v5560 = vpack.c.b16 %v4937, %v4930
        %v5561 = vpack.c.b16 %v4945, %v4938
        %v5562 = vpack.c.b16 %v4946, %v4939
        %v5563 = vpack.c.b16 %v4947, %v4940
        %v5564 = vpack.c.b16 %v4948, %v4941
        %v5565 = vpack.c.b16 %v4949, %v4942
        %v5566 = vpack.c.b16 %v4950, %v4943
        %v5567 = vpack.c.b16 %v4951, %v4944
        %v5568 = vpack.c.b16 %v4959, %v4952
        %v5569 = vpack.c.b16 %v4960, %v4953
        %v5570 = vpack.c.b16 %v4961, %v4954
        %v5571 = vpack.c.b16 %v4962, %v4955
        %v5572 = vpack.c.b16 %v4963, %v4956
        %v5573 = vpack.c.b16 %v4964, %v4957
        %v5574 = vpack.c.b16 %v4965, %v4958
        %v5575 = vpack.c.b16 %v4973, %v4966
        %v5576 = vpack.c.b16 %v4974, %v4967
        %v5577 = vpack.c.b16 %v4975, %v4968
        %v5578 = vpack.c.b16 %v4976, %v4969
        %v5579 = vpack.c.b16 %v4977, %v4970
        %v5580 = vpack.c.b16 %v4978, %v4971
        %v5581 = vpack.c.b16 %v4979, %v4972
        %v5582 = vpack.c.b16 %v4987, %v4980
        %v5583 = vpack.c.b16 %v4988, %v4981
        %v5584 = vpack.c.b16 %v4989, %v4982
        %v5585 = vpack.c.b16 %v4990, %v4983
        %v5586 = vpack.c.b16 %v4991, %v4984
        %v5587 = vpack.c.b16 %v4992, %v4985
        %v5588 = vpack.c.b16 %v4993, %v4986
        %v5589 = vpack.c.b16 %v5001, %v4994
        %v5590 = vpack.c.b16 %v5002, %v4995
        %v5591 = vpack.c.b16 %v5003, %v4996
        %v5592 = vpack.c.b16 %v5004, %v4997
        %v5593 = vpack.c.b16 %v5005, %v4998
        %v5594 = vpack.c.b16 %v5006, %v4999
        %v5595 = vpack.c.b16 %v5007, %v5000
        %v5596 = vpack.c.b16 %v5015, %v5008
        %v5597 = vpack.c.b16 %v5016, %v5009
        %v5598 = vpack.c.b16 %v5017, %v5010
        %v5599 = vpack.c.b16 %v5018, %v5011
        %v5600 = vpack.c.b16 %v5019, %v5012
        %v5601 = vpack.c.b16 %v5020, %v5013
        %v5602 = vpack.c.b16 %v5021, %v5014
        %v5603 = vpack.c.b16 %v5029, %v5022
        %v5604 = vpack.c.b16 %v5030, %v5023
        %v5605 = vpack.c.b16 %v5031, %v5024
        %v5606 = vpack.c.b16 %v5032, %v5025
        %v5607 = vpack.c.b16 %v5033, %v5026
        %v5608 = vpack.c.b16 %v5034, %v5027
        %v5609 = vpack.c.b16 %v5035, %v5028
        %v5610 = vpack.c.b16 %v5043, %v5036
        %v5611 = vpack.c.b16 %v5044, %v5037
        %v5612 = vpack.c.b16 %v5045, %v5038
        %v5613 = vpack.c.b16 %v5046, %v5039
        %v5614 = vpack.c.b16 %v5047, %v5040
        %v5615 = vpack.c.b16 %v5048, %v5041
        %v5616 = vpack.c.b16 %v5049, %v5042
        %v5617 = vpack.c.b16 %v5057, %v5050
        %v5618 = vpack.c.b16 %v5058, %v5051
        %v5619 = vpack.c.b16 %v5059, %v5052
        %v5620 = vpack.c.b16 %v5060, %v5053
        %v5621 = vpack.c.b16 %v5061, %v5054
        %v5622 = vpack.c.b16 %v5062, %v5055
        %v5623 = vpack.c.b16 %v5063, %v5056
        %v5624 = vpack.c.b16 %v5071, %v5064
        %v5625 = vpack.c.b16 %v5072, %v5065
        %v5626 = vpack.c.b16 %v5073, %v5066
        %v5627 = vpack.c.b16 %v5074, %v5067
        %v5628 = vpack.c.b16 %v5075, %v5068
        %v5629 = vpack.c.b16 %v5076, %v5069
        %v5630 = vpack.c.b16 %v5077, %v5070
        %v5631 = vpack.c.b16 %v5085, %v5078
        %v5632 = vpack.c.b16 %v5086, %v5079
        %v5633 = vpack.c.b16 %v5087, %v5080
        %v5634 = vpack.c.b16 %v5088, %v5081
        %v5635 = vpack.c.b16 %v5089, %v5082
        %v5636 = vpack.c.b16 %v5090, %v5083
        %v5637 = vpack.c.b16 %v5091, %v5084
        %v5638 = vpack.c.b16 %v5099, %v5092
        %v5639 = vpack.c.b16 %v5100, %v5093
        %v5640 = vpack.c.b16 %v5101, %v5094
        %v5641 = vpack.c.b16 %v5102, %v5095
        %v5642 = vpack.c.b16 %v5103, %v5096
        %v5643 = vpack.c.b16 %v5104, %v5097
        %v5644 = vpack.c.b16 %v5105, %v5098
        %v5645 = vpack.c.b16 %v5113, %v5106
        %v5646 = vpack.c.b16 %v5114, %v5107
        %v5647 = vpack.c.b16 %v5115, %v5108
        %v5648 = vpack.c.b16 %v5116, %v5109
        %v5649 = vpack.c.b16 %v5117, %v5110
        %v5650 = vpack.c.b16 %v5118, %v5111
        %v5651 = vpack.c.b16 %v5119, %v5112
        %v5652 = vpack.c.b16 %v5127, %v5120
        %v5653 = vpack.c.b16 %v5128, %v5121
        %v5654 = vpack.c.b16 %v5129, %v5122
        %v5655 = vpack.c.b16 %v5130, %v5123
        %v5656 = vpack.c.b16 %v5131, %v5124
        %v5657 = vpack.c.b16 %v5132, %v5125
        %v5658 = vpack.c.b16 %v5133, %v5126
        %v5659 = vpack.c.b16 %v5141, %v5134
        %v5660 = vpack.c.b16 %v5142, %v5135
        %v5661 = vpack.c.b16 %v5143, %v5136
        %v5662 = vpack.c.b16 %v5144, %v5137
        %v5663 = vpack.c.b16 %v5145, %v5138
        %v5664 = vpack.c.b16 %v5146, %v5139
        %v5665 = vpack.c.b16 %v5147, %v5140
        %v5666 = vpack.c.b16 %v5155, %v5148
        %v5667 = vpack.c.b16 %v5156, %v5149
        %v5668 = vpack.c.b16 %v5157, %v5150
        %v5669 = vpack.c.b16 %v5158, %v5151
        %v5670 = vpack.c.b16 %v5159, %v5152
        %v5671 = vpack.c.b16 %v5160, %v5153
        %v5672 = vpack.c.b16 %v5161, %v5154
        %v5673 = vpack.c.b16 %v5169, %v5162
        %v5674 = vpack.c.b16 %v5170, %v5163
        %v5675 = vpack.c.b16 %v5171, %v5164
        %v5676 = vpack.c.b16 %v5172, %v5165
        %v5677 = vpack.c.b16 %v5173, %v5166
        %v5678 = vpack.c.b16 %v5174, %v5167
        %v5679 = vpack.c.b16 %v5175, %v5168
        %v5680 = vpack.c.b16 %v5183, %v5176
        %v5681 = vpack.c.b16 %v5184, %v5177
        %v5682 = vpack.c.b16 %v5185, %v5178
        %v5683 = vpack.c.b16 %v5186, %v5179
        %v5684 = vpack.c.b16 %v5187, %v5180
        %v5685 = vpack.c.b16 %v5188, %v5181
        %v5686 = vpack.c.b16 %v5189, %v5182
        %v5687 = vpack.c.b16 %v5197, %v5190
        %v5688 = vpack.c.b16 %v5198, %v5191
        %v5689 = vpack.c.b16 %v5199, %v5192
        %v5690 = vpack.c.b16 %v5200, %v5193
        %v5691 = vpack.c.b16 %v5201, %v5194
        %v5692 = vpack.c.b16 %v5202, %v5195
        %v5693 = vpack.c.b16 %v5203, %v5196
        %v5694 = vpack.c.b16 %v5211, %v5204
        %v5695 = vpack.c.b16 %v5212, %v5205
        %v5696 = vpack.c.b16 %v5213, %v5206
        %v5697 = vpack.c.b16 %v5214, %v5207
        %v5698 = vpack.c.b16 %v5215, %v5208
        %v5699 = vpack.c.b16 %v5216, %v5209
        %v5700 = vpack.c.b16 %v5217, %v5210
        %v5701 = vpack.c.b16 %v5225, %v5218
        %v5702 = vpack.c.b16 %v5226, %v5219
        %v5703 = vpack.c.b16 %v5227, %v5220
        %v5704 = vpack.c.b16 %v5228, %v5221
        %v5705 = vpack.c.b16 %v5229, %v5222
        %v5706 = vpack.c.b16 %v5230, %v5223
        %v5707 = vpack.c.b16 %v5231, %v5224
        %v5708 = vpack.c.b16 %v5239, %v5232
        %v5709 = vpack.c.b16 %v5240, %v5233
        %v5710 = vpack.c.b16 %v5241, %v5234
        %v5711 = vpack.c.b16 %v5242, %v5235
        %v5712 = vpack.c.b16 %v5243, %v5236
        %v5713 = vpack.c.b16 %v5244, %v5237
        %v5714 = vpack.c.b16 %v5245, %v5238
        %v5715 = vpack.c.b16 %v5253, %v5246
        %v5716 = vpack.c.b16 %v5254, %v5247
        %v5717 = vpack.c.b16 %v5255, %v5248
        %v5718 = vpack.c.b16 %v5256, %v5249
        %v5719 = vpack.c.b16 %v5257, %v5250
        %v5720 = vpack.c.b16 %v5258, %v5251
        %v5721 = vpack.c.b16 %v5259, %v5252
        %v5722 = vpack.c.b16 %v5267, %v5260
        %v5723 = vpack.c.b16 %v5268, %v5261
        %v5724 = vpack.c.b16 %v5269, %v5262
        %v5725 = vpack.c.b16 %v5270, %v5263
        %v5726 = vpack.c.b16 %v5271, %v5264
        %v5727 = vpack.c.b16 %v5272, %v5265
        %v5728 = vpack.c.b16 %v5273, %v5266
        %v5729 = vpack.c.b16 %v5281, %v5274
        %v5730 = vpack.c.b16 %v5282, %v5275
        %v5731 = vpack.c.b16 %v5283, %v5276
        %v5732 = vpack.c.b16 %v5284, %v5277
        %v5733 = vpack.c.b16 %v5285, %v5278
        %v5734 = vpack.c.b16 %v5286, %v5279
        %v5735 = vpack.c.b16 %v5287, %v5280
        %6184 = vmatprep.subr.bf16.mxu0 %v5338
        %6185 = vmatpush1.bf16.msra.mxu0 %v5337
        %6186 = vmatprep.subr.bf16.mxu0 %v5331
        %6187 = vmatpush1.bf16.msra.mxu0 %v5330
        %6188 = vmatprep.subr.bf16.mxu0 %v5324
        %6189 = vmatpush1.bf16.msra.mxu0 %v5323
        %6190 = vmatprep.subr.bf16.mxu0 %v5317
        %6191 = vmatpush1.bf16.msra.mxu0 %v5316
        %6192 = vmatprep.subr.bf16.mxu0 %v5310
        %6193 = vmatpush1.bf16.msra.mxu0 %v5309
        %6194 = vmatprep.subr.bf16.mxu0 %v5303
        %6195 = vmatpush1.bf16.msra.mxu0 %v5302
        %6196 = vmatprep.subr.bf16.mxu0 %v5296
        %6197 = vmatpush1.bf16.msra.mxu0 %v5295
        %6198 = vmatprep.subr.bf16.mxu0 %v5289
        %6199 = vmatpush1.bf16.msra.mxu0 %v5288
        %6200 = vmatprep.subr.bf16.mxu0 %v5394
        %6201 = vmatpush2.bf16.msra.mxu0 %v5393
        %6202 = vmatprep.subr.bf16.mxu0 %v5387
        %6203 = vmatpush2.bf16.msra.mxu0 %v5386
        %6204 = vmatprep.subr.bf16.mxu0 %v5380
        %6205 = vmatpush2.bf16.msra.mxu0 %v5379
        %6206 = vmatprep.subr.bf16.mxu0 %v5373
        %6207 = vmatpush2.bf16.msra.mxu0 %v5372
        %6208 = vmatprep.subr.bf16.mxu0 %v5366
        %6209 = vmatpush2.bf16.msra.mxu0 %v5365
        %6210 = vmatprep.subr.bf16.mxu0 %v5359
        %6211 = vmatpush2.bf16.msra.mxu0 %v5358
        %6212 = vmatprep.subr.bf16.mxu0 %v5352
        %6213 = vmatpush2.bf16.msra.mxu0 %v5351
        %6214 = vmatprep.subr.bf16.mxu0 %v5345
        %6215 = vmatpush2.bf16.msra.mxu0 %v5344
        %6216 = vmatprep.mubr.bf16.mxu0 %v3316
        %6217 = vmatmul.mubr.bf16.gmra.mxu0 %v3315
        %v6218 = vpop.f32.mrf.mxu0
        %v6219 = vadd.f32 %v3848, %v6218
        %v6220 = vpop.f32.mrf.mxu0
        %v6221 = vadd.f32 %v3852, %v6220
        %v6222 = vpop.f32.mrf.mxu0
        %v6223 = vadd.f32 %v3848, %v6222
        %v6224 = vpop.f32.mrf.mxu0
        %v6225 = vadd.f32 %v3852, %v6224
        %6226 = vmatprep.mubr.bf16.mxu0 %v3324
        %6227 = vmatmul.mubr.bf16.gmra.mxu0 %v3323
        %v6228 = vpop.f32.mrf.mxu0
        %v6229 = vadd.f32 %v3848, %v6228
        %v6230 = vpop.f32.mrf.mxu0
        %v6231 = vadd.f32 %v3852, %v6230
        %v6232 = vpop.f32.mrf.mxu0
        %v6233 = vadd.f32 %v3848, %v6232
        %v6234 = vpop.f32.mrf.mxu0
        %v6235 = vadd.f32 %v3852, %v6234
        %6236 = vdwg.mxu0
        %6237 = vmatprep.subr.bf16.mxu0 %v5450
        %6238 = vmatpush1.bf16.msra.mxu0 %v5449
        %6239 = vmatprep.subr.bf16.mxu0 %v5443
        %6240 = vmatpush1.bf16.msra.mxu0 %v5442
        %6241 = vmatprep.subr.bf16.mxu0 %v5436
        %6242 = vmatpush1.bf16.msra.mxu0 %v5435
        %6243 = vmatprep.subr.bf16.mxu0 %v5429
        %6244 = vmatpush1.bf16.msra.mxu0 %v5428
        %6245 = vmatprep.subr.bf16.mxu0 %v5422
        %6246 = vmatpush1.bf16.msra.mxu0 %v5421
        %6247 = vmatprep.subr.bf16.mxu0 %v5415
        %6248 = vmatpush1.bf16.msra.mxu0 %v5414
        %6249 = vmatprep.subr.bf16.mxu0 %v5408
        %6250 = vmatpush1.bf16.msra.mxu0 %v5407
        %6251 = vmatprep.subr.bf16.mxu0 %v5401
        %6252 = vmatpush1.bf16.msra.mxu0 %v5400
        %6253 = vmatprep.subr.bf16.mxu0 %v5506
        %6254 = vmatpush2.bf16.msra.mxu0 %v5505
        %6255 = vmatprep.subr.bf16.mxu0 %v5499
        %6256 = vmatpush2.bf16.msra.mxu0 %v5498
        %6257 = vmatprep.subr.bf16.mxu0 %v5492
        %6258 = vmatpush2.bf16.msra.mxu0 %v5491
        %6259 = vmatprep.subr.bf16.mxu0 %v5485
        %6260 = vmatpush2.bf16.msra.mxu0 %v5484
        %6261 = vmatprep.subr.bf16.mxu0 %v5478
        %6262 = vmatpush2.bf16.msra.mxu0 %v5477
        %6263 = vmatprep.subr.bf16.mxu0 %v5471
        %6264 = vmatpush2.bf16.msra.mxu0 %v5470
        %6265 = vmatprep.subr.bf16.mxu0 %v5464
        %6266 = vmatpush2.bf16.msra.mxu0 %v5463
        %6267 = vmatprep.subr.bf16.mxu0 %v5457
        %6268 = vmatpush2.bf16.msra.mxu0 %v5456
        %6269 = vmatprep.mubr.bf16.mxu0 %v3318
        %6270 = vmatmul.mubr.bf16.gmra.mxu0 %v3317
        %v6271 = vpop.f32.mrf.mxu0
        %v6272 = vadd.f32 %v6219, %v6271
        %v6273 = vpop.f32.mrf.mxu0
        %v6274 = vadd.f32 %v6221, %v6273
        %v6275 = vpop.f32.mrf.mxu0
        %v6276 = vadd.f32 %v6223, %v6275
        %v6277 = vpop.f32.mrf.mxu0
        %v6278 = vadd.f32 %v6225, %v6277
        %6279 = vmatprep.mubr.bf16.mxu0 %v3326
        %6280 = vmatmul.mubr.bf16.gmra.mxu0 %v3325
        %v6281 = vpop.f32.mrf.mxu0
        %v6282 = vadd.f32 %v6229, %v6281
        %v6283 = vpop.f32.mrf.mxu0
        %v6284 = vadd.f32 %v6231, %v6283
        %v6285 = vpop.f32.mrf.mxu0
        %v6286 = vadd.f32 %v6233, %v6285
        %v6287 = vpop.f32.mrf.mxu0
        %v6288 = vadd.f32 %v6235, %v6287
        %6289 = vdwg.mxu0
        %6290 = vmatprep.subr.bf16.mxu0 %v5562
        %6291 = vmatpush1.bf16.msra.mxu0 %v5561
        %6292 = vmatprep.subr.bf16.mxu0 %v5555
        %6293 = vmatpush1.bf16.msra.mxu0 %v5554
        %6294 = vmatprep.subr.bf16.mxu0 %v5548
        %6295 = vmatpush1.bf16.msra.mxu0 %v5547
        %6296 = vmatprep.subr.bf16.mxu0 %v5541
        %6297 = vmatpush1.bf16.msra.mxu0 %v5540
        %6298 = vmatprep.subr.bf16.mxu0 %v5534
        %6299 = vmatpush1.bf16.msra.mxu0 %v5533
        %6300 = vmatprep.subr.bf16.mxu0 %v5527
        %6301 = vmatpush1.bf16.msra.mxu0 %v5526
        %6302 = vmatprep.subr.bf16.mxu0 %v5520
        %6303 = vmatpush1.bf16.msra.mxu0 %v5519
        %6304 = vmatprep.subr.bf16.mxu0 %v5513
        %6305 = vmatpush1.bf16.msra.mxu0 %v5512
        %6306 = vmatprep.subr.bf16.mxu0 %v5618
        %6307 = vmatpush2.bf16.msra.mxu0 %v5617
        %6308 = vmatprep.subr.bf16.mxu0 %v5611
        %6309 = vmatpush2.bf16.msra.mxu0 %v5610
        %6310 = vmatprep.subr.bf16.mxu0 %v5604
        %6311 = vmatpush2.bf16.msra.mxu0 %v5603
        %6312 = vmatprep.subr.bf16.mxu0 %v5597
        %6313 = vmatpush2.bf16.msra.mxu0 %v5596
        %6314 = vmatprep.subr.bf16.mxu0 %v5590
        %6315 = vmatpush2.bf16.msra.mxu0 %v5589
        %6316 = vmatprep.subr.bf16.mxu0 %v5583
        %6317 = vmatpush2.bf16.msra.mxu0 %v5582
        %6318 = vmatprep.subr.bf16.mxu0 %v5576
        %6319 = vmatpush2.bf16.msra.mxu0 %v5575
        %6320 = vmatprep.subr.bf16.mxu0 %v5569
        %6321 = vmatpush2.bf16.msra.mxu0 %v5568
        %6322 = vmatprep.mubr.bf16.mxu0 %v3320
        %6323 = vmatmul.mubr.bf16.gmra.mxu0 %v3319
        %v6324 = vpop.f32.mrf.mxu0
        %v6325 = vadd.f32 %v6272, %v6324
        %v6326 = vpop.f32.mrf.mxu0
        %v6327 = vadd.f32 %v6274, %v6326
        %v6328 = vpop.f32.mrf.mxu0
        %v6329 = vadd.f32 %v6276, %v6328
        %v6330 = vpop.f32.mrf.mxu0
        %v6331 = vadd.f32 %v6278, %v6330
        %6332 = vmatprep.mubr.bf16.mxu0 %v3328
        %6333 = vmatmul.mubr.bf16.gmra.mxu0 %v3327
        %v6334 = vpop.f32.mrf.mxu0
        %v6335 = vadd.f32 %v6282, %v6334
        %v6336 = vpop.f32.mrf.mxu0
        %v6337 = vadd.f32 %v6284, %v6336
        %v6338 = vpop.f32.mrf.mxu0
        %v6339 = vadd.f32 %v6286, %v6338
        %v6340 = vpop.f32.mrf.mxu0
        %v6341 = vadd.f32 %v6288, %v6340
        %6342 = vdwg.mxu0
        %6343 = vmatprep.subr.bf16.mxu0 %v5674
        %6344 = vmatpush1.bf16.msra.mxu0 %v5673
        %6345 = vmatprep.subr.bf16.mxu0 %v5667
        %6346 = vmatpush1.bf16.msra.mxu0 %v5666
        %6347 = vmatprep.subr.bf16.mxu0 %v5660
        %6348 = vmatpush1.bf16.msra.mxu0 %v5659
        %6349 = vmatprep.subr.bf16.mxu0 %v5653
        %6350 = vmatpush1.bf16.msra.mxu0 %v5652
        %6351 = vmatprep.subr.bf16.mxu0 %v5646
        %6352 = vmatpush1.bf16.msra.mxu0 %v5645
        %6353 = vmatprep.subr.bf16.mxu0 %v5639
        %6354 = vmatpush1.bf16.msra.mxu0 %v5638
        %6355 = vmatprep.subr.bf16.mxu0 %v5632
        %6356 = vmatpush1.bf16.msra.mxu0 %v5631
        %6357 = vmatprep.subr.bf16.mxu0 %v5625
        %6358 = vmatpush1.bf16.msra.mxu0 %v5624
        %6359 = vmatprep.subr.bf16.mxu0 %v5730
        %6360 = vmatpush2.bf16.msra.mxu0 %v5729
        %6361 = vmatprep.subr.bf16.mxu0 %v5723
        %6362 = vmatpush2.bf16.msra.mxu0 %v5722
        %6363 = vmatprep.subr.bf16.mxu0 %v5716
        %6364 = vmatpush2.bf16.msra.mxu0 %v5715
        %6365 = vmatprep.subr.bf16.mxu0 %v5709
        %6366 = vmatpush2.bf16.msra.mxu0 %v5708
        %6367 = vmatprep.subr.bf16.mxu0 %v5702
        %6368 = vmatpush2.bf16.msra.mxu0 %v5701
        %6369 = vmatprep.subr.bf16.mxu0 %v5695
        %6370 = vmatpush2.bf16.msra.mxu0 %v5694
        %6371 = vmatprep.subr.bf16.mxu0 %v5688
        %6372 = vmatpush2.bf16.msra.mxu0 %v5687
        %6373 = vmatprep.subr.bf16.mxu0 %v5681
        %6374 = vmatpush2.bf16.msra.mxu0 %v5680
        %6375 = vmatprep.mubr.bf16.mxu0 %v3322
        %6376 = vmatmul.mubr.bf16.gmra.mxu0 %v3321
        %v6377 = vpop.f32.mrf.mxu0
        %v6378 = vadd.f32 %v6325, %v6377
        %v6379 = vpop.f32.mrf.mxu0
        %v6380 = vadd.f32 %v6327, %v6379
        %v6381 = vpop.f32.mrf.mxu0
        %v6382 = vadd.f32 %v6329, %v6381
        %v6383 = vpop.f32.mrf.mxu0
        %v6384 = vadd.f32 %v6331, %v6383
        %6385 = vmatprep.mubr.bf16.mxu0 %v3330
        %6386 = vmatmul.mubr.bf16.gmra.mxu0 %v3329
        %v6387 = vpop.f32.mrf.mxu0
        %v6388 = vadd.f32 %v6335, %v6387
        %v6389 = vpop.f32.mrf.mxu0
        %v6390 = vadd.f32 %v6337, %v6389
        %v6391 = vpop.f32.mrf.mxu0
        %v6392 = vadd.f32 %v6339, %v6391
        %v6393 = vpop.f32.mrf.mxu0
        %v6394 = vadd.f32 %v6341, %v6393
        %6395 = vdwg.mxu0
        %6396 = vmatprep.subr.bf16.mxu0 %v5340
        %6397 = vmatpush1.bf16.msra.mxu0 %v5339
        %6398 = vmatprep.subr.bf16.mxu0 %v5333
        %6399 = vmatpush1.bf16.msra.mxu0 %v5332
        %6400 = vmatprep.subr.bf16.mxu0 %v5326
        %6401 = vmatpush1.bf16.msra.mxu0 %v5325
        %6402 = vmatprep.subr.bf16.mxu0 %v5319
        %6403 = vmatpush1.bf16.msra.mxu0 %v5318
        %6404 = vmatprep.subr.bf16.mxu0 %v5312
        %6405 = vmatpush1.bf16.msra.mxu0 %v5311
        %6406 = vmatprep.subr.bf16.mxu0 %v5305
        %6407 = vmatpush1.bf16.msra.mxu0 %v5304
        %6408 = vmatprep.subr.bf16.mxu0 %v5298
        %6409 = vmatpush1.bf16.msra.mxu0 %v5297
        %6410 = vmatprep.subr.bf16.mxu0 %v5291
        %6411 = vmatpush1.bf16.msra.mxu0 %v5290
        %6412 = vmatprep.subr.bf16.mxu0 %v5396
        %6413 = vmatpush2.bf16.msra.mxu0 %v5395
        %6414 = vmatprep.subr.bf16.mxu0 %v5389
        %6415 = vmatpush2.bf16.msra.mxu0 %v5388
        %6416 = vmatprep.subr.bf16.mxu0 %v5382
        %6417 = vmatpush2.bf16.msra.mxu0 %v5381
        %6418 = vmatprep.subr.bf16.mxu0 %v5375
        %6419 = vmatpush2.bf16.msra.mxu0 %v5374
        %6420 = vmatprep.subr.bf16.mxu0 %v5368
        %6421 = vmatpush2.bf16.msra.mxu0 %v5367
        %6422 = vmatprep.subr.bf16.mxu0 %v5361
        %6423 = vmatpush2.bf16.msra.mxu0 %v5360
        %6424 = vmatprep.subr.bf16.mxu0 %v5354
        %6425 = vmatpush2.bf16.msra.mxu0 %v5353
        %6426 = vmatprep.subr.bf16.mxu0 %v5347
        %6427 = vmatpush2.bf16.msra.mxu0 %v5346
        %6428 = vmatprep.mubr.bf16.mxu0 %v3316
        %6429 = vmatmul.mubr.bf16.gmra.mxu0 %v3315
        %v6430 = vpop.f32.mrf.mxu0
        %v6431 = vadd.f32 %v3856, %v6430
        %v6432 = vpop.f32.mrf.mxu0
        %v6433 = vadd.f32 %v3860, %v6432
        %v6434 = vpop.f32.mrf.mxu0
        %v6435 = vadd.f32 %v3856, %v6434
        %v6436 = vpop.f32.mrf.mxu0
        %v6437 = vadd.f32 %v3860, %v6436
        %6438 = vmatprep.mubr.bf16.mxu0 %v3324
        %6439 = vmatmul.mubr.bf16.gmra.mxu0 %v3323
        %v6440 = vpop.f32.mrf.mxu0
        %v6441 = vadd.f32 %v3856, %v6440
        %v6442 = vpop.f32.mrf.mxu0
        %v6443 = vadd.f32 %v3860, %v6442
        %v6444 = vpop.f32.mrf.mxu0
        %v6445 = vadd.f32 %v3856, %v6444
        %v6446 = vpop.f32.mrf.mxu0
        %v6447 = vadd.f32 %v3860, %v6446
        %6448 = vdwg.mxu0
        %6449 = vmatprep.subr.bf16.mxu0 %v5452
        %6450 = vmatpush1.bf16.msra.mxu0 %v5451
        %6451 = vmatprep.subr.bf16.mxu0 %v5445
        %6452 = vmatpush1.bf16.msra.mxu0 %v5444
        %6453 = vmatprep.subr.bf16.mxu0 %v5438
        %6454 = vmatpush1.bf16.msra.mxu0 %v5437
        %6455 = vmatprep.subr.bf16.mxu0 %v5431
        %6456 = vmatpush1.bf16.msra.mxu0 %v5430
        %6457 = vmatprep.subr.bf16.mxu0 %v5424
        %6458 = vmatpush1.bf16.msra.mxu0 %v5423
        %6459 = vmatprep.subr.bf16.mxu0 %v5417
        %6460 = vmatpush1.bf16.msra.mxu0 %v5416
        %6461 = vmatprep.subr.bf16.mxu0 %v5410
        %6462 = vmatpush1.bf16.msra.mxu0 %v5409
        %6463 = vmatprep.subr.bf16.mxu0 %v5403
        %6464 = vmatpush1.bf16.msra.mxu0 %v5402
        %6465 = vmatprep.subr.bf16.mxu0 %v5508
        %6466 = vmatpush2.bf16.msra.mxu0 %v5507
        %6467 = vmatprep.subr.bf16.mxu0 %v5501
        %6468 = vmatpush2.bf16.msra.mxu0 %v5500
        %6469 = vmatprep.subr.bf16.mxu0 %v5494
        %6470 = vmatpush2.bf16.msra.mxu0 %v5493
        %6471 = vmatprep.subr.bf16.mxu0 %v5487
        %6472 = vmatpush2.bf16.msra.mxu0 %v5486
        %6473 = vmatprep.subr.bf16.mxu0 %v5480
        %6474 = vmatpush2.bf16.msra.mxu0 %v5479
        %6475 = vmatprep.subr.bf16.mxu0 %v5473
        %6476 = vmatpush2.bf16.msra.mxu0 %v5472
        %6477 = vmatprep.subr.bf16.mxu0 %v5466
        %6478 = vmatpush2.bf16.msra.mxu0 %v5465
        %6479 = vmatprep.subr.bf16.mxu0 %v5459
        %6480 = vmatpush2.bf16.msra.mxu0 %v5458
        %6481 = vmatprep.mubr.bf16.mxu0 %v3318
        %6482 = vmatmul.mubr.bf16.gmra.mxu0 %v3317
        %v6483 = vpop.f32.mrf.mxu0
        %v6484 = vadd.f32 %v6431, %v6483
        %v6485 = vpop.f32.mrf.mxu0
        %v6486 = vadd.f32 %v6433, %v6485
        %v6487 = vpop.f32.mrf.mxu0
        %v6488 = vadd.f32 %v6435, %v6487
        %v6489 = vpop.f32.mrf.mxu0
        %v6490 = vadd.f32 %v6437, %v6489
        %6491 = vmatprep.mubr.bf16.mxu0 %v3326
        %6492 = vmatmul.mubr.bf16.gmra.mxu0 %v3325
        %v6493 = vpop.f32.mrf.mxu0
        %v6494 = vadd.f32 %v6441, %v6493
        %v6495 = vpop.f32.mrf.mxu0
        %v6496 = vadd.f32 %v6443, %v6495
        %v6497 = vpop.f32.mrf.mxu0
        %v6498 = vadd.f32 %v6445, %v6497
        %v6499 = vpop.f32.mrf.mxu0
        %v6500 = vadd.f32 %v6447, %v6499
        %6501 = vdwg.mxu0
        %6502 = vmatprep.subr.bf16.mxu0 %v5564
        %6503 = vmatpush1.bf16.msra.mxu0 %v5563
        %6504 = vmatprep.subr.bf16.mxu0 %v5557
        %6505 = vmatpush1.bf16.msra.mxu0 %v5556
        %6506 = vmatprep.subr.bf16.mxu0 %v5550
        %6507 = vmatpush1.bf16.msra.mxu0 %v5549
        %6508 = vmatprep.subr.bf16.mxu0 %v5543
        %6509 = vmatpush1.bf16.msra.mxu0 %v5542
        %6510 = vmatprep.subr.bf16.mxu0 %v5536
        %6511 = vmatpush1.bf16.msra.mxu0 %v5535
        %6512 = vmatprep.subr.bf16.mxu0 %v5529
        %6513 = vmatpush1.bf16.msra.mxu0 %v5528
        %6514 = vmatprep.subr.bf16.mxu0 %v5522
        %6515 = vmatpush1.bf16.msra.mxu0 %v5521
        %6516 = vmatprep.subr.bf16.mxu0 %v5515
        %6517 = vmatpush1.bf16.msra.mxu0 %v5514
        %6518 = vmatprep.subr.bf16.mxu0 %v5620
        %6519 = vmatpush2.bf16.msra.mxu0 %v5619
        %6520 = vmatprep.subr.bf16.mxu0 %v5613
        %6521 = vmatpush2.bf16.msra.mxu0 %v5612
        %6522 = vmatprep.subr.bf16.mxu0 %v5606
        %6523 = vmatpush2.bf16.msra.mxu0 %v5605
        %6524 = vmatprep.subr.bf16.mxu0 %v5599
        %6525 = vmatpush2.bf16.msra.mxu0 %v5598
        %6526 = vmatprep.subr.bf16.mxu0 %v5592
        %6527 = vmatpush2.bf16.msra.mxu0 %v5591
        %6528 = vmatprep.subr.bf16.mxu0 %v5585
        %6529 = vmatpush2.bf16.msra.mxu0 %v5584
        %6530 = vmatprep.subr.bf16.mxu0 %v5578
        %6531 = vmatpush2.bf16.msra.mxu0 %v5577
        %6532 = vmatprep.subr.bf16.mxu0 %v5571
        %6533 = vmatpush2.bf16.msra.mxu0 %v5570
        %6534 = vmatprep.mubr.bf16.mxu0 %v3320
        %6535 = vmatmul.mubr.bf16.gmra.mxu0 %v3319
        %v6536 = vpop.f32.mrf.mxu0
        %v6537 = vadd.f32 %v6484, %v6536
        %v6538 = vpop.f32.mrf.mxu0
        %v6539 = vadd.f32 %v6486, %v6538
        %v6540 = vpop.f32.mrf.mxu0
        %v6541 = vadd.f32 %v6488, %v6540
        %v6542 = vpop.f32.mrf.mxu0
        %v6543 = vadd.f32 %v6490, %v6542
        %6544 = vmatprep.mubr.bf16.mxu0 %v3328
        %6545 = vmatmul.mubr.bf16.gmra.mxu0 %v3327
        %v6546 = vpop.f32.mrf.mxu0
        %v6547 = vadd.f32 %v6494, %v6546
        %v6548 = vpop.f32.mrf.mxu0
        %v6549 = vadd.f32 %v6496, %v6548
        %v6550 = vpop.f32.mrf.mxu0
        %v6551 = vadd.f32 %v6498, %v6550
        %v6552 = vpop.f32.mrf.mxu0
        %v6553 = vadd.f32 %v6500, %v6552
        %6554 = vdwg.mxu0
        %6555 = vmatprep.subr.bf16.mxu0 %v5676
        %6556 = vmatpush1.bf16.msra.mxu0 %v5675
        %6557 = vmatprep.subr.bf16.mxu0 %v5669
        %6558 = vmatpush1.bf16.msra.mxu0 %v5668
        %6559 = vmatprep.subr.bf16.mxu0 %v5662
        %6560 = vmatpush1.bf16.msra.mxu0 %v5661
        %6561 = vmatprep.subr.bf16.mxu0 %v5655
        %6562 = vmatpush1.bf16.msra.mxu0 %v5654
        %6563 = vmatprep.subr.bf16.mxu0 %v5648
        %6564 = vmatpush1.bf16.msra.mxu0 %v5647
        %6565 = vmatprep.subr.bf16.mxu0 %v5641
        %6566 = vmatpush1.bf16.msra.mxu0 %v5640
        %6567 = vmatprep.subr.bf16.mxu0 %v5634
        %6568 = vmatpush1.bf16.msra.mxu0 %v5633
        %6569 = vmatprep.subr.bf16.mxu0 %v5627
        %6570 = vmatpush1.bf16.msra.mxu0 %v5626
        %6571 = vmatprep.subr.bf16.mxu0 %v5732
        %6572 = vmatpush2.bf16.msra.mxu0 %v5731
        %6573 = vmatprep.subr.bf16.mxu0 %v5725
        %6574 = vmatpush2.bf16.msra.mxu0 %v5724
        %6575 = vmatprep.subr.bf16.mxu0 %v5718
        %6576 = vmatpush2.bf16.msra.mxu0 %v5717
        %6577 = vmatprep.subr.bf16.mxu0 %v5711
        %6578 = vmatpush2.bf16.msra.mxu0 %v5710
        %6579 = vmatprep.subr.bf16.mxu0 %v5704
        %6580 = vmatpush2.bf16.msra.mxu0 %v5703
        %6581 = vmatprep.subr.bf16.mxu0 %v5697
        %6582 = vmatpush2.bf16.msra.mxu0 %v5696
        %6583 = vmatprep.subr.bf16.mxu0 %v5690
        %6584 = vmatpush2.bf16.msra.mxu0 %v5689
        %6585 = vmatprep.subr.bf16.mxu0 %v5683
        %6586 = vmatpush2.bf16.msra.mxu0 %v5682
        %6587 = vmatprep.mubr.bf16.mxu0 %v3322
        %6588 = vmatmul.mubr.bf16.gmra.mxu0 %v3321
        %v6589 = vpop.f32.mrf.mxu0
        %v6590 = vadd.f32 %v6537, %v6589
        %v6591 = vpop.f32.mrf.mxu0
        %v6592 = vadd.f32 %v6539, %v6591
        %v6593 = vpop.f32.mrf.mxu0
        %v6594 = vadd.f32 %v6541, %v6593
        %v6595 = vpop.f32.mrf.mxu0
        %v6596 = vadd.f32 %v6543, %v6595
        %6597 = vmatprep.mubr.bf16.mxu0 %v3330
        %6598 = vmatmul.mubr.bf16.gmra.mxu0 %v3329
        %v6599 = vpop.f32.mrf.mxu0
        %v6600 = vadd.f32 %v6547, %v6599
        %v6601 = vpop.f32.mrf.mxu0
        %v6602 = vadd.f32 %v6549, %v6601
        %v6603 = vpop.f32.mrf.mxu0
        %v6604 = vadd.f32 %v6551, %v6603
        %v6605 = vpop.f32.mrf.mxu0
        %v6606 = vadd.f32 %v6553, %v6605
        %6607 = vdwg.mxu0
        %6608 = vmatprep.subr.bf16.mxu0 %v5342
        %6609 = vmatpush1.bf16.msra.mxu0 %v5341
        %6610 = vmatprep.subr.bf16.mxu0 %v5335
        %6611 = vmatpush1.bf16.msra.mxu0 %v5334
        %6612 = vmatprep.subr.bf16.mxu0 %v5328
        %6613 = vmatpush1.bf16.msra.mxu0 %v5327
        %6614 = vmatprep.subr.bf16.mxu0 %v5321
        %6615 = vmatpush1.bf16.msra.mxu0 %v5320
        %6616 = vmatprep.subr.bf16.mxu0 %v5314
        %6617 = vmatpush1.bf16.msra.mxu0 %v5313
        %6618 = vmatprep.subr.bf16.mxu0 %v5307
        %6619 = vmatpush1.bf16.msra.mxu0 %v5306
        %6620 = vmatprep.subr.bf16.mxu0 %v5300
        %6621 = vmatpush1.bf16.msra.mxu0 %v5299
        %6622 = vmatprep.subr.bf16.mxu0 %v5293
        %6623 = vmatpush1.bf16.msra.mxu0 %v5292
        %6624 = vmatprep.subr.bf16.mxu0 %v5398
        %6625 = vmatpush2.bf16.msra.mxu0 %v5397
        %6626 = vmatprep.subr.bf16.mxu0 %v5391
        %6627 = vmatpush2.bf16.msra.mxu0 %v5390
        %6628 = vmatprep.subr.bf16.mxu0 %v5384
        %6629 = vmatpush2.bf16.msra.mxu0 %v5383
        %6630 = vmatprep.subr.bf16.mxu0 %v5377
        %6631 = vmatpush2.bf16.msra.mxu0 %v5376
        %6632 = vmatprep.subr.bf16.mxu0 %v5370
        %6633 = vmatpush2.bf16.msra.mxu0 %v5369
        %6634 = vmatprep.subr.bf16.mxu0 %v5363
        %6635 = vmatpush2.bf16.msra.mxu0 %v5362
        %6636 = vmatprep.subr.bf16.mxu0 %v5356
        %6637 = vmatpush2.bf16.msra.mxu0 %v5355
        %6638 = vmatprep.subr.bf16.mxu0 %v5349
        %6639 = vmatpush2.bf16.msra.mxu0 %v5348
        %6640 = vmatprep.mubr.bf16.mxu0 %v3316
        %6641 = vmatmul.mubr.bf16.gmra.mxu0 %v3315
        %v6642 = vpop.f32.mrf.mxu0
        %v6643 = vadd.f32 %v3864, %v6642
        %v6644 = vpop.f32.mrf.mxu0
        %v6645 = vadd.f32 %v3868, %v6644
        %v6646 = vpop.f32.mrf.mxu0
        %v6647 = vadd.f32 %v3864, %v6646
        %v6648 = vpop.f32.mrf.mxu0
        %v6649 = vadd.f32 %v3868, %v6648
        %6650 = vmatprep.mubr.bf16.mxu0 %v3324
        %6651 = vmatmul.mubr.bf16.gmra.mxu0 %v3323
        %v6652 = vpop.f32.mrf.mxu0
        %v6653 = vadd.f32 %v3864, %v6652
        %v6654 = vpop.f32.mrf.mxu0
        %v6655 = vadd.f32 %v3868, %v6654
        %v6656 = vpop.f32.mrf.mxu0
        %v6657 = vadd.f32 %v3864, %v6656
        %v6658 = vpop.f32.mrf.mxu0
        %v6659 = vadd.f32 %v3868, %v6658
        %6660 = vdwg.mxu0
        %6661 = vmatprep.subr.bf16.mxu0 %v5454
        %6662 = vmatpush1.bf16.msra.mxu0 %v5453
        %6663 = vmatprep.subr.bf16.mxu0 %v5447
        %6664 = vmatpush1.bf16.msra.mxu0 %v5446
        %6665 = vmatprep.subr.bf16.mxu0 %v5440
        %6666 = vmatpush1.bf16.msra.mxu0 %v5439
        %6667 = vmatprep.subr.bf16.mxu0 %v5433
        %6668 = vmatpush1.bf16.msra.mxu0 %v5432
        %6669 = vmatprep.subr.bf16.mxu0 %v5426
        %6670 = vmatpush1.bf16.msra.mxu0 %v5425
        %6671 = vmatprep.subr.bf16.mxu0 %v5419
        %6672 = vmatpush1.bf16.msra.mxu0 %v5418
        %6673 = vmatprep.subr.bf16.mxu0 %v5412
        %6674 = vmatpush1.bf16.msra.mxu0 %v5411
        %6675 = vmatprep.subr.bf16.mxu0 %v5405
        %6676 = vmatpush1.bf16.msra.mxu0 %v5404
        %6677 = vmatprep.subr.bf16.mxu0 %v5510
        %6678 = vmatpush2.bf16.msra.mxu0 %v5509
        %6679 = vmatprep.subr.bf16.mxu0 %v5503
        %6680 = vmatpush2.bf16.msra.mxu0 %v5502
        %6681 = vmatprep.subr.bf16.mxu0 %v5496
        %6682 = vmatpush2.bf16.msra.mxu0 %v5495
        %6683 = vmatprep.subr.bf16.mxu0 %v5489
        %6684 = vmatpush2.bf16.msra.mxu0 %v5488
        %6685 = vmatprep.subr.bf16.mxu0 %v5482
        %6686 = vmatpush2.bf16.msra.mxu0 %v5481
        %6687 = vmatprep.subr.bf16.mxu0 %v5475
        %6688 = vmatpush2.bf16.msra.mxu0 %v5474
        %6689 = vmatprep.subr.bf16.mxu0 %v5468
        %6690 = vmatpush2.bf16.msra.mxu0 %v5467
        %6691 = vmatprep.subr.bf16.mxu0 %v5461
        %6692 = vmatpush2.bf16.msra.mxu0 %v5460
        %6693 = vmatprep.mubr.bf16.mxu0 %v3318
        %6694 = vmatmul.mubr.bf16.gmra.mxu0 %v3317
        %v6695 = vpop.f32.mrf.mxu0
        %v6696 = vadd.f32 %v6643, %v6695
        %v6697 = vpop.f32.mrf.mxu0
        %v6698 = vadd.f32 %v6645, %v6697
        %v6699 = vpop.f32.mrf.mxu0
        %v6700 = vadd.f32 %v6647, %v6699
        %v6701 = vpop.f32.mrf.mxu0
        %v6702 = vadd.f32 %v6649, %v6701
        %6703 = vmatprep.mubr.bf16.mxu0 %v3326
        %6704 = vmatmul.mubr.bf16.gmra.mxu0 %v3325
        %v6705 = vpop.f32.mrf.mxu0
        %v6706 = vadd.f32 %v6653, %v6705
        %v6707 = vpop.f32.mrf.mxu0
        %v6708 = vadd.f32 %v6655, %v6707
        %v6709 = vpop.f32.mrf.mxu0
        %v6710 = vadd.f32 %v6657, %v6709
        %v6711 = vpop.f32.mrf.mxu0
        %v6712 = vadd.f32 %v6659, %v6711
        %6713 = vdwg.mxu0
        %6714 = vmatprep.subr.bf16.mxu0 %v5566
        %6715 = vmatpush1.bf16.msra.mxu0 %v5565
        %6716 = vmatprep.subr.bf16.mxu0 %v5559
        %6717 = vmatpush1.bf16.msra.mxu0 %v5558
        %6718 = vmatprep.subr.bf16.mxu0 %v5552
        %6719 = vmatpush1.bf16.msra.mxu0 %v5551
        %6720 = vmatprep.subr.bf16.mxu0 %v5545
        %6721 = vmatpush1.bf16.msra.mxu0 %v5544
        %6722 = vmatprep.subr.bf16.mxu0 %v5538
        %6723 = vmatpush1.bf16.msra.mxu0 %v5537
        %6724 = vmatprep.subr.bf16.mxu0 %v5531
        %6725 = vmatpush1.bf16.msra.mxu0 %v5530
        %6726 = vmatprep.subr.bf16.mxu0 %v5524
        %6727 = vmatpush1.bf16.msra.mxu0 %v5523
        %6728 = vmatprep.subr.bf16.mxu0 %v5517
        %6729 = vmatpush1.bf16.msra.mxu0 %v5516
        %6730 = vmatprep.subr.bf16.mxu0 %v5622
        %6731 = vmatpush2.bf16.msra.mxu0 %v5621
        %6732 = vmatprep.subr.bf16.mxu0 %v5615
        %6733 = vmatpush2.bf16.msra.mxu0 %v5614
        %6734 = vmatprep.subr.bf16.mxu0 %v5608
        %6735 = vmatpush2.bf16.msra.mxu0 %v5607
        %6736 = vmatprep.subr.bf16.mxu0 %v5601
        %6737 = vmatpush2.bf16.msra.mxu0 %v5600
        %6738 = vmatprep.subr.bf16.mxu0 %v5594
        %6739 = vmatpush2.bf16.msra.mxu0 %v5593
        %6740 = vmatprep.subr.bf16.mxu0 %v5587
        %6741 = vmatpush2.bf16.msra.mxu0 %v5586
        %6742 = vmatprep.subr.bf16.mxu0 %v5580
        %6743 = vmatpush2.bf16.msra.mxu0 %v5579
        %6744 = vmatprep.subr.bf16.mxu0 %v5573
        %6745 = vmatpush2.bf16.msra.mxu0 %v5572
        %6746 = vmatprep.mubr.bf16.mxu0 %v3320
        %6747 = vmatmul.mubr.bf16.gmra.mxu0 %v3319
        %v6748 = vpop.f32.mrf.mxu0
        %v6749 = vadd.f32 %v6696, %v6748
        %v6750 = vpop.f32.mrf.mxu0
        %v6751 = vadd.f32 %v6698, %v6750
        %v6752 = vpop.f32.mrf.mxu0
        %v6753 = vadd.f32 %v6700, %v6752
        %v6754 = vpop.f32.mrf.mxu0
        %v6755 = vadd.f32 %v6702, %v6754
        %6756 = vmatprep.mubr.bf16.mxu0 %v3328
        %6757 = vmatmul.mubr.bf16.gmra.mxu0 %v3327
        %v6758 = vpop.f32.mrf.mxu0
        %v6759 = vadd.f32 %v6706, %v6758
        %v6760 = vpop.f32.mrf.mxu0
        %v6761 = vadd.f32 %v6708, %v6760
        %v6762 = vpop.f32.mrf.mxu0
        %v6763 = vadd.f32 %v6710, %v6762
        %v6764 = vpop.f32.mrf.mxu0
        %v6765 = vadd.f32 %v6712, %v6764
        %6766 = vdwg.mxu0
        %6767 = vmatprep.subr.bf16.mxu0 %v5678
        %6768 = vmatpush1.bf16.msra.mxu0 %v5677
        %6769 = vmatprep.subr.bf16.mxu0 %v5671
        %6770 = vmatpush1.bf16.msra.mxu0 %v5670
        %6771 = vmatprep.subr.bf16.mxu0 %v5664
        %6772 = vmatpush1.bf16.msra.mxu0 %v5663
        %6773 = vmatprep.subr.bf16.mxu0 %v5657
        %6774 = vmatpush1.bf16.msra.mxu0 %v5656
        %6775 = vmatprep.subr.bf16.mxu0 %v5650
        %6776 = vmatpush1.bf16.msra.mxu0 %v5649
        %6777 = vmatprep.subr.bf16.mxu0 %v5643
        %6778 = vmatpush1.bf16.msra.mxu0 %v5642
        %6779 = vmatprep.subr.bf16.mxu0 %v5636
        %6780 = vmatpush1.bf16.msra.mxu0 %v5635
        %6781 = vmatprep.subr.bf16.mxu0 %v5629
        %6782 = vmatpush1.bf16.msra.mxu0 %v5628
        %6783 = vmatprep.subr.bf16.mxu0 %v5734
        %6784 = vmatpush2.bf16.msra.mxu0 %v5733
        %6785 = vmatprep.subr.bf16.mxu0 %v5727
        %6786 = vmatpush2.bf16.msra.mxu0 %v5726
        %6787 = vmatprep.subr.bf16.mxu0 %v5720
        %6788 = vmatpush2.bf16.msra.mxu0 %v5719
        %6789 = vmatprep.subr.bf16.mxu0 %v5713
        %6790 = vmatpush2.bf16.msra.mxu0 %v5712
        %6791 = vmatprep.subr.bf16.mxu0 %v5706
        %6792 = vmatpush2.bf16.msra.mxu0 %v5705
        %6793 = vmatprep.subr.bf16.mxu0 %v5699
        %6794 = vmatpush2.bf16.msra.mxu0 %v5698
        %6795 = vmatprep.subr.bf16.mxu0 %v5692
        %6796 = vmatpush2.bf16.msra.mxu0 %v5691
        %6797 = vmatprep.subr.bf16.mxu0 %v5685
        %6798 = vmatpush2.bf16.msra.mxu0 %v5684
        %6799 = vmatprep.mubr.bf16.mxu0 %v3322
        %6800 = vmatmul.mubr.bf16.gmra.mxu0 %v3321
        %v6801 = vpop.f32.mrf.mxu0
        %v6802 = vadd.f32 %v6749, %v6801
        %v6803 = vpop.f32.mrf.mxu0
        %v6804 = vadd.f32 %v6751, %v6803
        %v6805 = vpop.f32.mrf.mxu0
        %v6806 = vadd.f32 %v6753, %v6805
        %v6807 = vpop.f32.mrf.mxu0
        %v6808 = vadd.f32 %v6755, %v6807
        %6809 = vmatprep.mubr.bf16.mxu0 %v3330
        %6810 = vmatmul.mubr.bf16.gmra.mxu0 %v3329
        %v6811 = vpop.f32.mrf.mxu0
        %v6812 = vadd.f32 %v6759, %v6811
        %v6813 = vpop.f32.mrf.mxu0
        %v6814 = vadd.f32 %v6761, %v6813
        %v6815 = vpop.f32.mrf.mxu0
        %v6816 = vadd.f32 %v6763, %v6815
        %v6817 = vpop.f32.mrf.mxu0
        %v6818 = vadd.f32 %v6765, %v6817
        %6819 = vdwg.mxu0
        %6820 = vmatprep.subr.bf16.mxu0 0
        %6821 = vmatpush1.bf16.msra.mxu0 %v5343
        %6822 = vmatprep.subr.bf16.mxu0 0
        %6823 = vmatpush1.bf16.msra.mxu0 %v5336
        %6824 = vmatprep.subr.bf16.mxu0 0
        %6825 = vmatpush1.bf16.msra.mxu0 %v5329
        %6826 = vmatprep.subr.bf16.mxu0 0
        %6827 = vmatpush1.bf16.msra.mxu0 %v5322
        %6828 = vmatprep.subr.bf16.mxu0 0
        %6829 = vmatpush1.bf16.msra.mxu0 %v5315
        %6830 = vmatprep.subr.bf16.mxu0 0
        %6831 = vmatpush1.bf16.msra.mxu0 %v5308
        %6832 = vmatprep.subr.bf16.mxu0 0
        %6833 = vmatpush1.bf16.msra.mxu0 %v5301
        %6834 = vmatprep.subr.bf16.mxu0 0
        %6835 = vmatpush1.bf16.msra.mxu0 %v5294
        %6836 = vmatprep.subr.bf16.mxu0 0
        %6837 = vmatpush2.bf16.msra.mxu0 %v5399
        %6838 = vmatprep.subr.bf16.mxu0 0
        %6839 = vmatpush2.bf16.msra.mxu0 %v5392
        %6840 = vmatprep.subr.bf16.mxu0 0
        %6841 = vmatpush2.bf16.msra.mxu0 %v5385
        %6842 = vmatprep.subr.bf16.mxu0 0
        %6843 = vmatpush2.bf16.msra.mxu0 %v5378
        %6844 = vmatprep.subr.bf16.mxu0 0
        %6845 = vmatpush2.bf16.msra.mxu0 %v5371
        %6846 = vmatprep.subr.bf16.mxu0 0
        %6847 = vmatpush2.bf16.msra.mxu0 %v5364
        %6848 = vmatprep.subr.bf16.mxu0 0
        %6849 = vmatpush2.bf16.msra.mxu0 %v5357
        %6850 = vmatprep.subr.bf16.mxu0 0
        %6851 = vmatpush2.bf16.msra.mxu0 %v5350
        %6852 = vmatprep.mubr.bf16.mxu0 %v3316
        %6853 = vmatmul.mubr.bf16.gmra.mxu0 %v3315
        %v6854 = vpop.f32.mrf.mxu0
        %v6855 = vadd.f32 %v3872, %v6854
        %v6856 = vpop.f32.mrf.mxu0
        %v6857 = vpop.f32.mrf.mxu0
        %v6858 = vadd.f32 %v3872, %v6857
        %v6859 = vpop.f32.mrf.mxu0
        %6860 = vmatprep.mubr.bf16.mxu0 %v3324
        %6861 = vmatmul.mubr.bf16.gmra.mxu0 %v3323
        %v6862 = vpop.f32.mrf.mxu0
        %v6863 = vadd.f32 %v3872, %v6862
        %v6864 = vpop.f32.mrf.mxu0
        %v6865 = vpop.f32.mrf.mxu0
        %v6866 = vadd.f32 %v3872, %v6865
        %v6867 = vpop.f32.mrf.mxu0
        %6868 = vdwg.mxu0
        %6869 = vmatprep.subr.bf16.mxu0 0
        %6870 = vmatpush1.bf16.msra.mxu0 %v5455
        %6871 = vmatprep.subr.bf16.mxu0 0
        %6872 = vmatpush1.bf16.msra.mxu0 %v5448
        %6873 = vmatprep.subr.bf16.mxu0 0
        %6874 = vmatpush1.bf16.msra.mxu0 %v5441
        %6875 = vmatprep.subr.bf16.mxu0 0
        %6876 = vmatpush1.bf16.msra.mxu0 %v5434
        %6877 = vmatprep.subr.bf16.mxu0 0
        %6878 = vmatpush1.bf16.msra.mxu0 %v5427
        %6879 = vmatprep.subr.bf16.mxu0 0
        %6880 = vmatpush1.bf16.msra.mxu0 %v5420
        %6881 = vmatprep.subr.bf16.mxu0 0
        %6882 = vmatpush1.bf16.msra.mxu0 %v5413
        %6883 = vmatprep.subr.bf16.mxu0 0
        %6884 = vmatpush1.bf16.msra.mxu0 %v5406
        %6885 = vmatprep.subr.bf16.mxu0 0
        %6886 = vmatpush2.bf16.msra.mxu0 %v5511
        %6887 = vmatprep.subr.bf16.mxu0 0
        %6888 = vmatpush2.bf16.msra.mxu0 %v5504
        %6889 = vmatprep.subr.bf16.mxu0 0
        %6890 = vmatpush2.bf16.msra.mxu0 %v5497
        %6891 = vmatprep.subr.bf16.mxu0 0
        %6892 = vmatpush2.bf16.msra.mxu0 %v5490
        %6893 = vmatprep.subr.bf16.mxu0 0
        %6894 = vmatpush2.bf16.msra.mxu0 %v5483
        %6895 = vmatprep.subr.bf16.mxu0 0
        %6896 = vmatpush2.bf16.msra.mxu0 %v5476
        %6897 = vmatprep.subr.bf16.mxu0 0
        %6898 = vmatpush2.bf16.msra.mxu0 %v5469
        %6899 = vmatprep.subr.bf16.mxu0 0
        %6900 = vmatpush2.bf16.msra.mxu0 %v5462
        %6901 = vmatprep.mubr.bf16.mxu0 %v3318
        %6902 = vmatmul.mubr.bf16.gmra.mxu0 %v3317
        %v6903 = vpop.f32.mrf.mxu0
        %v6904 = vadd.f32 %v6855, %v6903
        %v6905 = vpop.f32.mrf.mxu0
        %v6906 = vpop.f32.mrf.mxu0
        %v6907 = vadd.f32 %v6858, %v6906
        %v6908 = vpop.f32.mrf.mxu0
        %6909 = vmatprep.mubr.bf16.mxu0 %v3326
        %6910 = vmatmul.mubr.bf16.gmra.mxu0 %v3325
        %v6911 = vpop.f32.mrf.mxu0
        %v6912 = vadd.f32 %v6863, %v6911
        %v6913 = vpop.f32.mrf.mxu0
        %v6914 = vpop.f32.mrf.mxu0
        %v6915 = vadd.f32 %v6866, %v6914
        %v6916 = vpop.f32.mrf.mxu0
        %6917 = vdwg.mxu0
        %6918 = vmatprep.subr.bf16.mxu0 0
        %6919 = vmatpush1.bf16.msra.mxu0 %v5567
        %6920 = vmatprep.subr.bf16.mxu0 0
        %6921 = vmatpush1.bf16.msra.mxu0 %v5560
        %6922 = vmatprep.subr.bf16.mxu0 0
        %6923 = vmatpush1.bf16.msra.mxu0 %v5553
        %6924 = vmatprep.subr.bf16.mxu0 0
        %6925 = vmatpush1.bf16.msra.mxu0 %v5546
        %6926 = vmatprep.subr.bf16.mxu0 0
        %6927 = vmatpush1.bf16.msra.mxu0 %v5539
        %6928 = vmatprep.subr.bf16.mxu0 0
        %6929 = vmatpush1.bf16.msra.mxu0 %v5532
        %6930 = vmatprep.subr.bf16.mxu0 0
        %6931 = vmatpush1.bf16.msra.mxu0 %v5525
        %6932 = vmatprep.subr.bf16.mxu0 0
        %6933 = vmatpush1.bf16.msra.mxu0 %v5518
        %6934 = vmatprep.subr.bf16.mxu0 0
        %6935 = vmatpush2.bf16.msra.mxu0 %v5623
        %6936 = vmatprep.subr.bf16.mxu0 0
        %6937 = vmatpush2.bf16.msra.mxu0 %v5616
        %6938 = vmatprep.subr.bf16.mxu0 0
        %6939 = vmatpush2.bf16.msra.mxu0 %v5609
        %6940 = vmatprep.subr.bf16.mxu0 0
        %6941 = vmatpush2.bf16.msra.mxu0 %v5602
        %6942 = vmatprep.subr.bf16.mxu0 0
        %6943 = vmatpush2.bf16.msra.mxu0 %v5595
        %6944 = vmatprep.subr.bf16.mxu0 0
        %6945 = vmatpush2.bf16.msra.mxu0 %v5588
        %6946 = vmatprep.subr.bf16.mxu0 0
        %6947 = vmatpush2.bf16.msra.mxu0 %v5581
        %6948 = vmatprep.subr.bf16.mxu0 0
        %6949 = vmatpush2.bf16.msra.mxu0 %v5574
        %6950 = vmatprep.mubr.bf16.mxu0 %v3320
        %6951 = vmatmul.mubr.bf16.gmra.mxu0 %v3319
        %v6952 = vpop.f32.mrf.mxu0
        %v6953 = vadd.f32 %v6904, %v6952
        %v6954 = vpop.f32.mrf.mxu0
        %v6955 = vpop.f32.mrf.mxu0
        %v6956 = vadd.f32 %v6907, %v6955
        %v6957 = vpop.f32.mrf.mxu0
        %6958 = vmatprep.mubr.bf16.mxu0 %v3328
        %6959 = vmatmul.mubr.bf16.gmra.mxu0 %v3327
        %v6960 = vpop.f32.mrf.mxu0
        %v6961 = vadd.f32 %v6912, %v6960
        %v6962 = vpop.f32.mrf.mxu0
        %v6963 = vpop.f32.mrf.mxu0
        %v6964 = vadd.f32 %v6915, %v6963
        %v6965 = vpop.f32.mrf.mxu0
        %6966 = vdwg.mxu0
        %6967 = vmatprep.subr.bf16.mxu0 0
        %6968 = vmatpush1.bf16.msra.mxu0 %v5679
        %6969 = vmatprep.subr.bf16.mxu0 0
        %6970 = vmatpush1.bf16.msra.mxu0 %v5672
        %6971 = vmatprep.subr.bf16.mxu0 0
        %6972 = vmatpush1.bf16.msra.mxu0 %v5665
        %6973 = vmatprep.subr.bf16.mxu0 0
        %6974 = vmatpush1.bf16.msra.mxu0 %v5658
        %6975 = vmatprep.subr.bf16.mxu0 0
        %6976 = vmatpush1.bf16.msra.mxu0 %v5651
        %6977 = vmatprep.subr.bf16.mxu0 0
        %6978 = vmatpush1.bf16.msra.mxu0 %v5644
        %6979 = vmatprep.subr.bf16.mxu0 0
        %6980 = vmatpush1.bf16.msra.mxu0 %v5637
        %6981 = vmatprep.subr.bf16.mxu0 0
        %6982 = vmatpush1.bf16.msra.mxu0 %v5630
        %6983 = vmatprep.subr.bf16.mxu0 0
        %6984 = vmatpush2.bf16.msra.mxu0 %v5735
        %6985 = vmatprep.subr.bf16.mxu0 0
        %6986 = vmatpush2.bf16.msra.mxu0 %v5728
        %6987 = vmatprep.subr.bf16.mxu0 0
        %6988 = vmatpush2.bf16.msra.mxu0 %v5721
        %6989 = vmatprep.subr.bf16.mxu0 0
        %6990 = vmatpush2.bf16.msra.mxu0 %v5714
        %6991 = vmatprep.subr.bf16.mxu0 0
        %6992 = vmatpush2.bf16.msra.mxu0 %v5707
        %6993 = vmatprep.subr.bf16.mxu0 0
        %6994 = vmatpush2.bf16.msra.mxu0 %v5700
        %6995 = vmatprep.subr.bf16.mxu0 0
        %6996 = vmatpush2.bf16.msra.mxu0 %v5693
        %6997 = vmatprep.subr.bf16.mxu0 0
        %6998 = vmatpush2.bf16.msra.mxu0 %v5686
        %6999 = vmatprep.mubr.bf16.mxu0 %v3322
        %7000 = vmatmul.mubr.bf16.gmra.mxu0 %v3321
        %v7001 = vpop.f32.mrf.mxu0
        %v7002 = vadd.f32 %v6953, %v7001
        %v7003 = vpop.f32.mrf.mxu0
        %v7004 = vpop.f32.mrf.mxu0
        %v7005 = vadd.f32 %v6956, %v7004
        %v7006 = vpop.f32.mrf.mxu0
        %7007 = vmatprep.mubr.bf16.mxu0 %v3330
        %7008 = vmatmul.mubr.bf16.gmra.mxu0 %v3329
        %v7009 = vpop.f32.mrf.mxu0
        %v7010 = vadd.f32 %v6961, %v7009
        %v7011 = vpop.f32.mrf.mxu0
        %v7012 = vpop.f32.mrf.mxu0
        %v7013 = vadd.f32 %v6964, %v7012
        %v7014 = vpop.f32.mrf.mxu0
        %7015 = vdwg.mxu0
        %v7016 = vtanh.pop %v6378
        %v7017 = vtanh.pop %v6380
        %v7018 = vtanh.pop %v6590
        %v7019 = vtanh.pop %v6592
        %v7020 = vtanh.pop %v6802
        %v7021 = vtanh.pop %v6804
        %v7022 = vtanh.pop %v7002
        %v7023 = vtanh.pop %v6382
        %v7024 = vtanh.pop %v6384
        %v7025 = vtanh.pop %v6594
        %v7026 = vtanh.pop %v6596
        %v7027 = vtanh.pop %v6806
        %v7028 = vtanh.pop %v6808
        %v7029 = vtanh.pop %v7005
        %v7030 = vtanh.pop %v6388
        %v7031 = vtanh.pop %v6390
        %v7032 = vtanh.pop %v6600
        %v7033 = vtanh.pop %v6602
        %v7034 = vtanh.pop %v6812
        %v7035 = vtanh.pop %v6814
        %v7036 = vtanh.pop %v7010
        %v7037 = vtanh.pop %v6392
        %v7038 = vtanh.pop %v6394
        %v7039 = vtanh.pop %v6604
        %v7040 = vtanh.pop %v6606
        %v7041 = vtanh.pop %v6816
        %v7042 = vtanh.pop %v6818
        %v7043 = vtanh.pop %v7013
        %7044 = vst [vmem:[%s435] sm:$0xff] %v7016
        %7045 = vst [vmem:[%s435 + $0x8] sm:$0xff] %v7017
        %7046 = vst [vmem:[%s435 + $0x10] sm:$0xff] %v7018
        %7047 = vst [vmem:[%s435 + $0x18] sm:$0xff] %v7019
        %7048 = vst [vmem:[%s435 + $0x20] sm:$0xff] %v7020
        %7049 = vst [vmem:[%s435 + $0x28] sm:$0xff] %v7021
        %7050 = vst [vmem:[%s435 + $0x30] sm:$0xff] %v7022
        %7051 = vst [vmem:[%s435 + $0x38] sm:$0xff] %v7023
        %7052 = vst [vmem:[%s435 + $0x40] sm:$0xff] %v7024
        %7053 = vst [vmem:[%s435 + $0x48] sm:$0xff] %v7025
        %7054 = vst [vmem:[%s435 + $0x50] sm:$0xff] %v7026
        %7055 = vst [vmem:[%s435 + $0x58] sm:$0xff] %v7027
        %7056 = vst [vmem:[%s435 + $0x60] sm:$0xff] %v7028
        %7057 = vst [vmem:[%s435 + $0x68] sm:$0xff] %v7029
        %7058 = vst [vmem:[%s435 + $0x70] sm:$0xff] %v7030
        %7059 = vst [vmem:[%s435 + $0x78] sm:$0xff] %v7031
        %7060 = vst [vmem:[%s435 + $0x80] sm:$0xff] %v7032
        %7061 = vst [vmem:[%s435 + $0x88] sm:$0xff] %v7033
        %7062 = vst [vmem:[%s435 + $0x90] sm:$0xff] %v7034
        %7063 = vst [vmem:[%s435 + $0x98] sm:$0xff] %v7035
        %7064 = vst [vmem:[%s435 + $0xa0] sm:$0xff] %v7036
        %7065 = vst [vmem:[%s435 + $0xa8] sm:$0xff] %v7037
        %7066 = vst [vmem:[%s435 + $0xb0] sm:$0xff] %v7038
        %7067 = vst [vmem:[%s435 + $0xb8] sm:$0xff] %v7039
        %7068 = vst [vmem:[%s435 + $0xc0] sm:$0xff] %v7040
        %7069 = vst [vmem:[%s435 + $0xc8] sm:$0xff] %v7041
        %7070 = vst [vmem:[%s435 + $0xd0] sm:$0xff] %v7042
        %7071 = vst [vmem:[%s435 + $0xd8] sm:$0xff] %v7043
        %s7072 = sand.u32 %s230, 1
        %s7073 = scalar_lea.sflag [#allocation4], %s7072
        %s7074 = sand.u32 %s230, 1
        %s7075 = smul.addr %s7074, 224
        %s7076 = scalar_lea.vmem [#allocation16], %s7075
        // Predicated region
        $region89: #{generator_forward.1} parent=55 // pred_check
          %p7077 = pneg %p240
        $region90: #{generator_forward.1} parent=55 // pred_check_branch
          %7079 = sbr.rel (%p7077) target = $region92
        $region91: #{generator_forward.1} parent=55 // pred_region
          %s7080 = smul.u32 4, %s28
          %s7082 = ssub.s32 3584, 3584
          %7083 = vsyncadd %s7073, %s7082
          %s7084 = smul.addr %s7080, 7
          %s7085 = smul.addr %s7084, 128
          %s7086 = scalar_lea.hbm %s9, %s7085
          %s7087 = sshll.u32 %s7076, 4
          %s7088 = int_to_ptr.vmem [resolvable:$true] %s7087
          %7093 = dma.vmem_to_hbm [thread:$0]  %s7088, 3584, %s7086, %s7073, 896, 896, 56
        $region92: #{generator_forward.1} parent=55 // pred_fallthru
          _
      $region56: #{generator_forward.1} parent=5 // pred_fallthru
        _
      %p7094 = scmp.le.s32.totalorder 2, %s23
      // Predicated region
      $region93: #{generator_forward.1} parent=5 // pred_check
        %p7095 = pneg %p7094
      $region94: #{generator_forward.1} parent=5 // pred_check_branch
        %7097 = sbr.rel (%p7095) target = $region96
      $region95: #{generator_forward.1} parent=5 // pred_region
        %s7098 = ssub.s32 %s23, 2
        // Predicated region
        $region97: #{generator_forward.1} parent=95 // pred_check
          %p7099 = pneg %p246
        $region98: #{generator_forward.1} parent=95 // pred_check_branch
          %7101 = sbr.rel (%p7099) target = $region100
        $region99: #{generator_forward.1} parent=95 // pred_region
          %s7102 = sand.u32 %s231, 1
          %s7103 = scalar_lea.sflag [#allocation4], %s7102
          %s7104 = sand.u32 %s231, 1
          %s7105 = smul.addr %s7104, 224
          %s7106 = scalar_lea.vmem [#allocation16], %s7105
          %7107 = dma.done %s7103, 3584
        $region100: #{generator_forward.1} parent=95 // pred_fallthru
          _
      $region96: #{generator_forward.1} parent=5 // pred_fallthru
        _
    $region6: #{generator_forward.1} parent=1 // loop_footer
      %s27 = sadd.s32 1, %s23
    $region7: #{generator_forward.1} parent=1 // loop_footer_branch
      %22 = sbr.rel target = $region3
    $region8: #{generator_forward.1} parent=1 // loop_exit
      _
    %7108 = vsyncpa [#allocation3], 1
    %s7109 = scalar_lea.sflag [#allocation3], 1
    %7110 = vsyncpa %s7109, 1
    %7111 = vsyncpa [#allocation6], 1
    %7112 = vsyncpa [#allocation9], 1
    %7113 = vsyncpa [#allocation12], 1
    %7114 = vsyncpa [#allocation15], 1
    %7115 = vsyncpa [#allocation4], 1
    %s7116 = scalar_lea.sflag [#allocation4], 1
    %7117 = vsyncpa %s7116, 1

</llo_original>
